<compile_context>
chip_gen: v6e
topology: v6e:2x2x1
jax: 0.10.0
libtpu: 0.0.40
codegen_flags: <defaults>
</compile_context>

<pallas_src>
import jax
import jax.numpy as jnp
import numpy as np
from jax.experimental import pallas as pl
from jax.experimental.pallas import tpu as pltpu

# ---- module config (consistent with the PyTorch __init__) ------------------
VOCAB = 256
EMB = 8
SEQ = 16                               # tokens per observation
IN0, IN1, IN2 = SEQ * EMB, 64, 32      # input_net: 128 -> 64 -> 32
LSTM = 32
ACT_H, N_ACT = 64, 6                   # actor: 32 -> 64 -> 6
CRI_H = 64                             # critic: 32 -> 64 -> 1
LANES = 128

# ---- packed bf16 parameter buffer row offsets (all 16-row aligned) ----------
R_W2  = 0            # (64,128):  cols 0:32 = W2 (64x32)
R_WL  = 64           # (128,128): rows 0:32 = Wih, rows 32:64 = Whh, rest 0
R_WH1 = 192          # (32,128):  cols 0:64 = Wa1, cols 64:128 = Wc1
R_WH2 = 224          # (128,128): rows 0:64 cols 0:6 = Wa2; rows 64:128 col 6 = Wc2
R_B   = 352          # rows 352.. = [b1 | b2 | bih+bhh | ba1,bc1 | ba2,bc2]
P_ROWS = 360

# state input lane layout : [0:32]=0  [32:64]=h_prev  [64:96]=c_prev  [96:128]=0
# output slab lane layout : [0:6]=logits [6:7]=value [7:64]=0 [64:96]=h [96:128]=c


# ---------------------------- Pallas kernel ---------------------------------
def _a2c_kernel(ids_ref, tbl_ref, p_ref, state_ref, out_ref):
    bb = ids_ref.shape[0]
    ids = ids_ref[...]                                              # (bb, SEQ) i32
    viota = jax.lax.broadcasted_iota(jnp.int32, (bb, VOCAB), 1)

    # ---- embedding lookup fused with Linear-1 (register accumulator) ----
    # x1_pre = sum_t one_hot(ids[:, t]) @ (emb @ W1[8t:8t+8, :])
    x1_pre = jnp.zeros((bb, IN1), jnp.float32)
    for t in range(SEQ):                                            # static unroll
        onehot = (viota == ids[:, t:t + 1]).astype(jnp.float32).astype(jnp.bfloat16)
        x1_pre = x1_pre + jnp.dot(
            onehot, tbl_ref[t * VOCAB:(t + 1) * VOCAB, :],
            preferred_element_type=jnp.float32)                     # (bb, 64) f32

    # ---- packed bf16 parameter views (static, aligned slices) ----
    w2  = p_ref[R_W2:R_W2 + IN1, :]          # (64,128)  cols 0:32 real
    wl  = p_ref[R_WL:R_WL + LANES, :]        # (128,128) rows 0:64 = [Wih; Whh]
    wh1 = p_ref[R_WH1:R_WH1 + LSTM, :]       # (32,128)  [Wa1 | Wc1]
    wh2 = p_ref[R_WH2:R_WH2 + LANES, :]      # (128,128) block-diag [Wa2 ; Wc2]
    b1  = p_ref[R_B + 0:R_B + 1, 0:IN1]
    b2  = p_ref[R_B + 1:R_B + 2, :]
    bl  = p_ref[R_B + 2:R_B + 3, :]
    bh1 = p_ref[R_B + 3:R_B + 4, :]
    bh2 = p_ref[R_B + 4:R_B + 5, :]

    # ---- input_net: ReLU -> Linear (feat real in lanes 0:32, rest zero) ----
    x1 = jnp.maximum(x1_pre + b1, 0.0).astype(jnp.bfloat16)          # (bb, 64)
    feat = jnp.dot(x1, w2, preferred_element_type=jnp.float32) + b2  # (bb, 128)

    # ---- LSTMCell: z built in registers (state = [0 | h | c | 0]) ----
    state = state_ref[...]                                           # (bb, 128) f32
    z = (feat + state).astype(jnp.bfloat16)    # lanes 0:32 feat, 32:64 h, 64:96 c(x0 wt)
    gates = jnp.dot(z, wl, preferred_element_type=jnp.float32) + bl  # (bb,128) [i|f|g|o]
    c_prev = state[:, 2 * LSTM:3 * LSTM]
    i_g = jax.nn.sigmoid(gates[:, 0 * LSTM:1 * LSTM])                # sliced, f32
    f_g = jax.nn.sigmoid(gates[:, 1 * LSTM:2 * LSTM])
    g_g = jnp.tanh(gates[:, 2 * LSTM:3 * LSTM])
    o_g = jax.nn.sigmoid(gates[:, 3 * LSTM:4 * LSTM])
    c_new = f_g * c_prev + i_g * g_g
    h_new = o_g * jnp.tanh(c_new)

    # ---- fused actor + critic heads ----
    ac = jnp.maximum(
        jnp.dot(h_new.astype(jnp.bfloat16), wh1,
                preferred_element_type=jnp.float32) + bh1, 0.0)
    head = jnp.dot(ac.astype(jnp.bfloat16), wh2,
                   preferred_element_type=jnp.float32) + bh2         # cols 0:6 / 6

    # ---- single lane-dense output slab: [logits | value | 0 | h | c] ----
    out_ref[...] = head
    out_ref[:, 2 * LSTM:3 * LSTM] = h_new
    out_ref[:, 3 * LSTM:4 * LSTM] = c_new


# ---------------------------- wrapper ----------------------------------------
def _round_up(x, m):
    return ((x + m - 1) // m) * m


def pack_params(p):
    """One-time fold of the params into (folded_table_bf16, packed_bf16).

    NOTE: weights here are stored as (in_features, out_features); importing real
    PyTorch weights (Linear: (out,in), LSTMCell: (4*hidden,in)) requires
    transposing them first.  Padding rows/cols MUST stay exactly zero.
    """
    # folded embedding + Linear-1: tbl[t*VOCAB + v, :] = emb[v] @ W1[8t:8t+8, :]
    w1_t = p["w1"].reshape(SEQ, EMB, IN1)
    tbl = jnp.einsum("ve,teh->tvh", p["emb"], w1_t).reshape(SEQ * VOCAB, IN1)

    P = jnp.zeros((P_ROWS, LANES), jnp.float32)
    # input_net layer 2
    P = P.at[R_W2:R_W2 + IN1, 0:IN2].set(p["w2"])
    # LSTMCell: [Wih ; Whh], bias = bih + bhh, gate order [i,f,g,o]
    P = P.at[R_WL:R_WL + IN2, :].set(p["wih"])
    P = P.at[R_WL + LSTM:R_WL + 2 * LSTM, :].set(p["whh"])
    # fused heads: layer 1 = [Wa1 | Wc1], layer 2 block-diagonal
    P = P.at[R_WH1:R_WH1 + LSTM, 0:ACT_H].set(p["wa1"])
    P = P.at[R_WH1:R_WH1 + LSTM, ACT_H:ACT_H + CRI_H].set(p["wc1"])
    P = P.at[R_WH2:R_WH2 + ACT_H, 0:N_ACT].set(p["wa2"])
    P = P.at[R_WH2 + ACT_H:R_WH2 + ACT_H + CRI_H, N_ACT:N_ACT + 1].set(p["wc2"])
    # biases
    P = P.at[R_B + 0, 0:IN1].set(p["b1"][0])
    P = P.at[R_B + 1, 0:IN2].set(p["b2"][0])
    P = P.at[R_B + 2, :].set(p["bih"][0] + p["bhh"][0])
    P = P.at[R_B + 3, 0:ACT_H].set(p["ba1"][0])
    P = P.at[R_B + 3, ACT_H:ACT_H + CRI_H].set(p["bc1"][0])
    P = P.at[R_B + 4, 0:N_ACT].set(p["ba2"][0])
    P = P.at[R_B + 4, N_ACT:N_ACT + 1].set(p["bc2"][0])
    return tbl.astype(jnp.bfloat16), P.astype(jnp.bfloat16)


@jax.jit
def ptb_recurrent_a2c_forward(x_ids, tbl, packed, h0, c0):
    """Returns (actor_logits, values, new_h, new_c)."""
    B = x_ids.shape[0]
    b_min = _round_up(max(B, 8), 8)
    if b_min <= 8:
        b_blk = 8
    else:
        # >=2 blocks so both v7x TensorCores get work; cap block at 256 rows.
        b_blk = min(256, _round_up((b_min + 1) // 2, 8))
    b_pad = _round_up(b_min, b_blk)
    grid_b = b_pad // b_blk

    ids = x_ids.astype(jnp.int32)
    zeros32 = jnp.zeros((B, LSTM), jnp.float32)
    # state layout [0 | h | c | 0] lets the kernel form z = feat + state directly.
    state = jnp.concatenate(
        [zeros32, h0.astype(jnp.float32), c0.astype(jnp.float32), zeros32],
        axis=-1)
    if b_pad != B:
        ids = jnp.pad(ids, ((0, b_pad - B), (0, 0)))
        state = jnp.pad(state, ((0, b_pad - B), (0, 0)))

    slab = pl.pallas_call(
        _a2c_kernel,
        out_shape=jax.ShapeDtypeStruct((b_pad, LANES), jnp.float32),
        grid_spec=pltpu.PrefetchScalarGridSpec(
            num_scalar_prefetch=0,
            grid=(grid_b,),
            in_specs=[
                pl.BlockSpec((b_blk, SEQ), lambda i: (i, 0)),          # token ids
                pl.BlockSpec((SEQ * VOCAB, IN1), lambda i: (0, 0)),    # emb@W1 table (bf16)
                pl.BlockSpec((P_ROWS, LANES), lambda i: (0, 0)),       # packed weights (bf16)
                pl.BlockSpec((b_blk, LANES), lambda i: (i, 0)),        # state [0|h|c|0]
            ],
            out_specs=pl.BlockSpec((b_blk, LANES), lambda i: (i, 0)),
        ),
        compiler_params=pltpu.CompilerParams(
            dimension_semantics=("parallel",)),
    )(ids, tbl, packed, state)

    slab = slab[:B]
    logits = slab[:, 0:N_ACT]
    values = slab[:, N_ACT:N_ACT + 1]
    h_new = slab[:, 2 * LSTM:3 * LSTM]
    c_new = slab[:, 3 * LSTM:4 * LSTM]
    return logits, values, h_new, c_new


# ---------------------------- parameter init --------------------------------
def init_params(key):
    ks = jax.random.split(key, 12)

    def lin(k, fan_in, fan_out):
        kw, kb = jax.random.split(k)
        lim = 1.0 / np.sqrt(fan_in)
        w = jax.random.uniform(kw, (fan_in, fan_out), jnp.float32, -lim, lim)
        b = jax.random.uniform(kb, (1, fan_out), jnp.float32, -lim, lim)
        return w, b

    p = {}
    p["emb"] = jax.random.normal(ks[0], (VOCAB, EMB), jnp.float32)
    p["w1"], p["b1"] = lin(ks[1], IN0, IN1)
    p["w2"], p["b2"] = lin(ks[2], IN1, IN2)
    limh = 1.0 / np.sqrt(LSTM)
    p["wih"] = jax.random.uniform(ks[3], (IN2, 4 * LSTM), jnp.float32, -limh, limh)
    p["whh"] = jax.random.uniform(ks[4], (LSTM, 4 * LSTM), jnp.float32, -limh, limh)
    p["bih"] = jax.random.uniform(ks[5], (1, 4 * LSTM), jnp.float32, -limh, limh)
    p["bhh"] = jax.random.uniform(ks[6], (1, 4 * LSTM), jnp.float32, -limh, limh)
    p["wa1"], p["ba1"] = lin(ks[7], LSTM, ACT_H)
    p["wa2"], p["ba2"] = lin(ks[8], ACT_H, N_ACT)
    p["wc1"], p["bc1"] = lin(ks[9], LSTM, CRI_H)
    p["wc2"], p["bc2"] = lin(ks[10], CRI_H, 1)
    return p


# ---------------------------- pure-JAX f32 reference -------------------------
def reference(x_ids, p, h0, c0):
    B, T = x_ids.shape
    flat = p["emb"][x_ids].reshape(B, T * EMB)
    feat = jnp.maximum(flat @ p["w1"] + p["b1"], 0.0) @ p["w2"] + p["b2"]
    gates = feat @ p["wih"] + p["bih"] + h0 @ p["whh"] + p["bhh"]
    i, f, g, o = jnp.split(gates, 4, axis=-1)
    i, f, g, o = jax.nn.sigmoid(i), jax.nn.sigmoid(f), jnp.tanh(g), jax.nn.sigmoid(o)
    c = f * c0 + i * g
    h = o * jnp.tanh(c)
    logits = jnp.maximum(h @ p["wa1"] + p["ba1"], 0.0) @ p["wa2"] + p["ba2"]
    values = jnp.maximum(h @ p["wc1"] + p["bc1"], 0.0) @ p["wc2"] + p["bc2"]
    return logits, values, h, c


if __name__ == "__main__":
    key = jax.random.PRNGKey(0)
    kx1, kx2, kp = jax.random.split(key, 3)

    B = 8                                            # multiple of 8 sublanes
    params = init_params(kp)
    tbl, packed = pack_params(params)                # one-time weight packing/fold
    h0 = jnp.zeros((B, LSTM), jnp.float32)           # module.reset() -> zeros
    c0 = jnp.zeros((B, LSTM), jnp.float32)

    # step 1 (fresh state) and step 2 (recurrent state fed back)
    x1_ids = jax.random.randint(kx1, (B, SEQ), 0, VOCAB, dtype=jnp.int32)
    x2_ids = jax.random.randint(kx2, (B, SEQ), 0, VOCAB, dtype=jnp.int32)

    out1 = ptb_recurrent_a2c_forward(x1_ids, tbl, packed, h0, c0)
    out1 = jax.block_until_ready(out1)
    out2 = ptb_recurrent_a2c_forward(x2_ids, tbl, packed, out1[2], out1[3])
    out2 = jax.block_until_ready(out2)

    ref1 = reference(x1_ids, params, h0, c0)
    ref2 = reference(x2_ids, params, ref1[2], ref1[3])

    # bf16 weight quantization inside the kernel => loose tolerance vs f32 reference
    for got, want in zip(out1 + out2, ref1 + ref2):
        np.testing.assert_allclose(np.asarray(got), np.asarray(want),
                                   rtol=2e-2, atol=2e-2)

    print("KERNEL_OK")
</pallas_src>

<mosaic_0001>
module attributes {stable_mosaic.version = 11 : i64} {
  func.func @_a2c_kernel(%arg0: i32, %arg1: memref<8x16xi32, #tpu.memory_space<vmem>>, %arg2: memref<4096x64xbf16, #tpu.memory_space<vmem>>, %arg3: memref<360x128xbf16, #tpu.memory_space<vmem>>, %arg4: memref<8x128xf32, #tpu.memory_space<vmem>>, %arg5: memref<8x128xf32, #tpu.memory_space<vmem>>) attributes {dimension_semantics = [#tpu.dimension_semantics<parallel>], iteration_bounds = array<i64: 1>, scalar_prefetch = 0 : i64, scratch_operands = 0 : i64, tpu.core_type = #tpu.core_type<tc>, window_params = [{transform_indices = @transform_0, window_bounds = array<i64: 8, 16>}, {pipeline_mode = #tpu.pipeline_mode<synchronous>, transform_indices = @transform_1, window_bounds = array<i64: 4096, 64>}, {pipeline_mode = #tpu.pipeline_mode<synchronous>, transform_indices = @transform_2, window_bounds = array<i64: 360, 128>}, {transform_indices = @transform_3, window_bounds = array<i64: 8, 128>}, {transform_indices = @transform_4, window_bounds = array<i64: 8, 128>}]} {
    %c0 = arith.constant 0 : index
    %c0_0 = arith.constant 0 : index
    %0 = vector.load %arg1[%c0, %c0_0] : memref<8x16xi32, #tpu.memory_space<vmem>>, vector<8x16xi32>
    %1 = tpu.iota {dimensions = array<i32: 1>} : vector<8x256xi32>
    %cst = arith.constant 0.000000e+00 : f32
    %2 = vector.broadcast %cst : f32 to vector<8x64xf32>
    %3 = vector.extract_strided_slice %0 {offsets = [0, 0], sizes = [8, 1], strides = [1, 1]} : vector<8x16xi32> to vector<8x1xi32>
    %4 = vector.broadcast %3 : vector<8x1xi32> to vector<8x256xi32>
    %5 = arith.cmpi eq, %1, %4 : vector<8x256xi32>
    %6 = arith.extui %5 : vector<8x256xi1> to vector<8x256xi32>
    %7 = arith.sitofp %6 : vector<8x256xi32> to vector<8x256xf32>
    %8 = arith.truncf %7 : vector<8x256xf32> to vector<8x256xbf16>
    %c0_1 = arith.constant 0 : index
    %c0_2 = arith.constant 0 : index
    %9 = vector.load %arg2[%c0_1, %c0_2] : memref<4096x64xbf16, #tpu.memory_space<vmem>>, vector<256x64xbf16>
    %cst_3 = arith.constant dense<0.000000e+00> : vector<8x64xf32>
    %10 = tpu.matmul %8, %9, %cst_3 {dimension_numbers = #tpu.dot_dimension_numbers<[1], [0], [0], [1], [0, 0, 1, 1], [], []>} : vector<8x256xbf16>, vector<256x64xbf16>, vector<8x64xf32> -> vector<8x64xf32>
    %11 = arith.addf %2, %10 : vector<8x64xf32>
    %12 = vector.extract_strided_slice %0 {offsets = [0, 1], sizes = [8, 1], strides = [1, 1]} : vector<8x16xi32> to vector<8x1xi32>
    %13 = vector.broadcast %12 : vector<8x1xi32> to vector<8x256xi32>
    %14 = arith.cmpi eq, %1, %13 : vector<8x256xi32>
    %15 = arith.extui %14 : vector<8x256xi1> to vector<8x256xi32>
    %16 = arith.sitofp %15 : vector<8x256xi32> to vector<8x256xf32>
    %17 = arith.truncf %16 : vector<8x256xf32> to vector<8x256xbf16>
    %c256 = arith.constant 256 : index
    %c0_4 = arith.constant 0 : index
    %18 = vector.load %arg2[%c256, %c0_4] : memref<4096x64xbf16, #tpu.memory_space<vmem>>, vector<256x64xbf16>
    %cst_5 = arith.constant dense<0.000000e+00> : vector<8x64xf32>
    %19 = tpu.matmul %17, %18, %cst_5 {dimension_numbers = #tpu.dot_dimension_numbers<[1], [0], [0], [1], [0, 0, 1, 1], [], []>} : vector<8x256xbf16>, vector<256x64xbf16>, vector<8x64xf32> -> vector<8x64xf32>
    %20 = arith.addf %11, %19 : vector<8x64xf32>
    %21 = vector.extract_strided_slice %0 {offsets = [0, 2], sizes = [8, 1], strides = [1, 1]} : vector<8x16xi32> to vector<8x1xi32>
    %22 = vector.broadcast %21 : vector<8x1xi32> to vector<8x256xi32>
    %23 = arith.cmpi eq, %1, %22 : vector<8x256xi32>
    %24 = arith.extui %23 : vector<8x256xi1> to vector<8x256xi32>
    %25 = arith.sitofp %24 : vector<8x256xi32> to vector<8x256xf32>
    %26 = arith.truncf %25 : vector<8x256xf32> to vector<8x256xbf16>
    %c512 = arith.constant 512 : index
    %c0_6 = arith.constant 0 : index
    %27 = vector.load %arg2[%c512, %c0_6] : memref<4096x64xbf16, #tpu.memory_space<vmem>>, vector<256x64xbf16>
    %cst_7 = arith.constant dense<0.000000e+00> : vector<8x64xf32>
    %28 = tpu.matmul %26, %27, %cst_7 {dimension_numbers = #tpu.dot_dimension_numbers<[1], [0], [0], [1], [0, 0, 1, 1], [], []>} : vector<8x256xbf16>, vector<256x64xbf16>, vector<8x64xf32> -> vector<8x64xf32>
    %29 = arith.addf %20, %28 : vector<8x64xf32>
    %30 = vector.extract_strided_slice %0 {offsets = [0, 3], sizes = [8, 1], strides = [1, 1]} : vector<8x16xi32> to vector<8x1xi32>
    %31 = vector.broadcast %30 : vector<8x1xi32> to vector<8x256xi32>
    %32 = arith.cmpi eq, %1, %31 : vector<8x256xi32>
    %33 = arith.extui %32 : vector<8x256xi1> to vector<8x256xi32>
    %34 = arith.sitofp %33 : vector<8x256xi32> to vector<8x256xf32>
    %35 = arith.truncf %34 : vector<8x256xf32> to vector<8x256xbf16>
    %c768 = arith.constant 768 : index
    %c0_8 = arith.constant 0 : index
    %36 = vector.load %arg2[%c768, %c0_8] : memref<4096x64xbf16, #tpu.memory_space<vmem>>, vector<256x64xbf16>
    %cst_9 = arith.constant dense<0.000000e+00> : vector<8x64xf32>
    %37 = tpu.matmul %35, %36, %cst_9 {dimension_numbers = #tpu.dot_dimension_numbers<[1], [0], [0], [1], [0, 0, 1, 1], [], []>} : vector<8x256xbf16>, vector<256x64xbf16>, vector<8x64xf32> -> vector<8x64xf32>
    %38 = arith.addf %29, %37 : vector<8x64xf32>
    %39 = vector.extract_strided_slice %0 {offsets = [0, 4], sizes = [8, 1], strides = [1, 1]} : vector<8x16xi32> to vector<8x1xi32>
    %40 = vector.broadcast %39 : vector<8x1xi32> to vector<8x256xi32>
    %41 = arith.cmpi eq, %1, %40 : vector<8x256xi32>
    %42 = arith.extui %41 : vector<8x256xi1> to vector<8x256xi32>
    %43 = arith.sitofp %42 : vector<8x256xi32> to vector<8x256xf32>
    %44 = arith.truncf %43 : vector<8x256xf32> to vector<8x256xbf16>
    %c1024 = arith.constant 1024 : index
    %c0_10 = arith.constant 0 : index
    %45 = vector.load %arg2[%c1024, %c0_10] : memref<4096x64xbf16, #tpu.memory_space<vmem>>, vector<256x64xbf16>
    %cst_11 = arith.constant dense<0.000000e+00> : vector<8x64xf32>
    %46 = tpu.matmul %44, %45, %cst_11 {dimension_numbers = #tpu.dot_dimension_numbers<[1], [0], [0], [1], [0, 0, 1, 1], [], []>} : vector<8x256xbf16>, vector<256x64xbf16>, vector<8x64xf32> -> vector<8x64xf32>
    %47 = arith.addf %38, %46 : vector<8x64xf32>
    %48 = vector.extract_strided_slice %0 {offsets = [0, 5], sizes = [8, 1], strides = [1, 1]} : vector<8x16xi32> to vector<8x1xi32>
    %49 = vector.broadcast %48 : vector<8x1xi32> to vector<8x256xi32>
    %50 = arith.cmpi eq, %1, %49 : vector<8x256xi32>
    %51 = arith.extui %50 : vector<8x256xi1> to vector<8x256xi32>
    %52 = arith.sitofp %51 : vector<8x256xi32> to vector<8x256xf32>
    %53 = arith.truncf %52 : vector<8x256xf32> to vector<8x256xbf16>
    %c1280 = arith.constant 1280 : index
    %c0_12 = arith.constant 0 : index
    %54 = vector.load %arg2[%c1280, %c0_12] : memref<4096x64xbf16, #tpu.memory_space<vmem>>, vector<256x64xbf16>
    %cst_13 = arith.constant dense<0.000000e+00> : vector<8x64xf32>
    %55 = tpu.matmul %53, %54, %cst_13 {dimension_numbers = #tpu.dot_dimension_numbers<[1], [0], [0], [1], [0, 0, 1, 1], [], []>} : vector<8x256xbf16>, vector<256x64xbf16>, vector<8x64xf32> -> vector<8x64xf32>
    %56 = arith.addf %47, %55 : vector<8x64xf32>
    %57 = vector.extract_strided_slice %0 {offsets = [0, 6], sizes = [8, 1], strides = [1, 1]} : vector<8x16xi32> to vector<8x1xi32>
    %58 = vector.broadcast %57 : vector<8x1xi32> to vector<8x256xi32>
    %59 = arith.cmpi eq, %1, %58 : vector<8x256xi32>
    %60 = arith.extui %59 : vector<8x256xi1> to vector<8x256xi32>
    %61 = arith.sitofp %60 : vector<8x256xi32> to vector<8x256xf32>
    %62 = arith.truncf %61 : vector<8x256xf32> to vector<8x256xbf16>
    %c1536 = arith.constant 1536 : index
    %c0_14 = arith.constant 0 : index
    %63 = vector.load %arg2[%c1536, %c0_14] : memref<4096x64xbf16, #tpu.memory_space<vmem>>, vector<256x64xbf16>
    %cst_15 = arith.constant dense<0.000000e+00> : vector<8x64xf32>
    %64 = tpu.matmul %62, %63, %cst_15 {dimension_numbers = #tpu.dot_dimension_numbers<[1], [0], [0], [1], [0, 0, 1, 1], [], []>} : vector<8x256xbf16>, vector<256x64xbf16>, vector<8x64xf32> -> vector<8x64xf32>
    %65 = arith.addf %56, %64 : vector<8x64xf32>
    %66 = vector.extract_strided_slice %0 {offsets = [0, 7], sizes = [8, 1], strides = [1, 1]} : vector<8x16xi32> to vector<8x1xi32>
    %67 = vector.broadcast %66 : vector<8x1xi32> to vector<8x256xi32>
    %68 = arith.cmpi eq, %1, %67 : vector<8x256xi32>
    %69 = arith.extui %68 : vector<8x256xi1> to vector<8x256xi32>
    %70 = arith.sitofp %69 : vector<8x256xi32> to vector<8x256xf32>
    %71 = arith.truncf %70 : vector<8x256xf32> to vector<8x256xbf16>
    %c1792 = arith.constant 1792 : index
    %c0_16 = arith.constant 0 : index
    %72 = vector.load %arg2[%c1792, %c0_16] : memref<4096x64xbf16, #tpu.memory_space<vmem>>, vector<256x64xbf16>
    %cst_17 = arith.constant dense<0.000000e+00> : vector<8x64xf32>
    %73 = tpu.matmul %71, %72, %cst_17 {dimension_numbers = #tpu.dot_dimension_numbers<[1], [0], [0], [1], [0, 0, 1, 1], [], []>} : vector<8x256xbf16>, vector<256x64xbf16>, vector<8x64xf32> -> vector<8x64xf32>
    %74 = arith.addf %65, %73 : vector<8x64xf32>
    %75 = vector.extract_strided_slice %0 {offsets = [0, 8], sizes = [8, 1], strides = [1, 1]} : vector<8x16xi32> to vector<8x1xi32>
    %76 = vector.broadcast %75 : vector<8x1xi32> to vector<8x256xi32>
    %77 = arith.cmpi eq, %1, %76 : vector<8x256xi32>
    %78 = arith.extui %77 : vector<8x256xi1> to vector<8x256xi32>
    %79 = arith.sitofp %78 : vector<8x256xi32> to vector<8x256xf32>
    %80 = arith.truncf %79 : vector<8x256xf32> to vector<8x256xbf16>
    %c2048 = arith.constant 2048 : index
    %c0_18 = arith.constant 0 : index
    %81 = vector.load %arg2[%c2048, %c0_18] : memref<4096x64xbf16, #tpu.memory_space<vmem>>, vector<256x64xbf16>
    %cst_19 = arith.constant dense<0.000000e+00> : vector<8x64xf32>
    %82 = tpu.matmul %80, %81, %cst_19 {dimension_numbers = #tpu.dot_dimension_numbers<[1], [0], [0], [1], [0, 0, 1, 1], [], []>} : vector<8x256xbf16>, vector<256x64xbf16>, vector<8x64xf32> -> vector<8x64xf32>
    %83 = arith.addf %74, %82 : vector<8x64xf32>
    %84 = vector.extract_strided_slice %0 {offsets = [0, 9], sizes = [8, 1], strides = [1, 1]} : vector<8x16xi32> to vector<8x1xi32>
    %85 = vector.broadcast %84 : vector<8x1xi32> to vector<8x256xi32>
    %86 = arith.cmpi eq, %1, %85 : vector<8x256xi32>
    %87 = arith.extui %86 : vector<8x256xi1> to vector<8x256xi32>
    %88 = arith.sitofp %87 : vector<8x256xi32> to vector<8x256xf32>
    %89 = arith.truncf %88 : vector<8x256xf32> to vector<8x256xbf16>
    %c2304 = arith.constant 2304 : index
    %c0_20 = arith.constant 0 : index
    %90 = vector.load %arg2[%c2304, %c0_20] : memref<4096x64xbf16, #tpu.memory_space<vmem>>, vector<256x64xbf16>
    %cst_21 = arith.constant dense<0.000000e+00> : vector<8x64xf32>
    %91 = tpu.matmul %89, %90, %cst_21 {dimension_numbers = #tpu.dot_dimension_numbers<[1], [0], [0], [1], [0, 0, 1, 1], [], []>} : vector<8x256xbf16>, vector<256x64xbf16>, vector<8x64xf32> -> vector<8x64xf32>
    %92 = arith.addf %83, %91 : vector<8x64xf32>
    %93 = vector.extract_strided_slice %0 {offsets = [0, 10], sizes = [8, 1], strides = [1, 1]} : vector<8x16xi32> to vector<8x1xi32>
    %94 = vector.broadcast %93 : vector<8x1xi32> to vector<8x256xi32>
    %95 = arith.cmpi eq, %1, %94 : vector<8x256xi32>
    %96 = arith.extui %95 : vector<8x256xi1> to vector<8x256xi32>
    %97 = arith.sitofp %96 : vector<8x256xi32> to vector<8x256xf32>
    %98 = arith.truncf %97 : vector<8x256xf32> to vector<8x256xbf16>
    %c2560 = arith.constant 2560 : index
    %c0_22 = arith.constant 0 : index
    %99 = vector.load %arg2[%c2560, %c0_22] : memref<4096x64xbf16, #tpu.memory_space<vmem>>, vector<256x64xbf16>
    %cst_23 = arith.constant dense<0.000000e+00> : vector<8x64xf32>
    %100 = tpu.matmul %98, %99, %cst_23 {dimension_numbers = #tpu.dot_dimension_numbers<[1], [0], [0], [1], [0, 0, 1, 1], [], []>} : vector<8x256xbf16>, vector<256x64xbf16>, vector<8x64xf32> -> vector<8x64xf32>
    %101 = arith.addf %92, %100 : vector<8x64xf32>
    %102 = vector.extract_strided_slice %0 {offsets = [0, 11], sizes = [8, 1], strides = [1, 1]} : vector<8x16xi32> to vector<8x1xi32>
    %103 = vector.broadcast %102 : vector<8x1xi32> to vector<8x256xi32>
    %104 = arith.cmpi eq, %1, %103 : vector<8x256xi32>
    %105 = arith.extui %104 : vector<8x256xi1> to vector<8x256xi32>
    %106 = arith.sitofp %105 : vector<8x256xi32> to vector<8x256xf32>
    %107 = arith.truncf %106 : vector<8x256xf32> to vector<8x256xbf16>
    %c2816 = arith.constant 2816 : index
    %c0_24 = arith.constant 0 : index
    %108 = vector.load %arg2[%c2816, %c0_24] : memref<4096x64xbf16, #tpu.memory_space<vmem>>, vector<256x64xbf16>
    %cst_25 = arith.constant dense<0.000000e+00> : vector<8x64xf32>
    %109 = tpu.matmul %107, %108, %cst_25 {dimension_numbers = #tpu.dot_dimension_numbers<[1], [0], [0], [1], [0, 0, 1, 1], [], []>} : vector<8x256xbf16>, vector<256x64xbf16>, vector<8x64xf32> -> vector<8x64xf32>
    %110 = arith.addf %101, %109 : vector<8x64xf32>
    %111 = vector.extract_strided_slice %0 {offsets = [0, 12], sizes = [8, 1], strides = [1, 1]} : vector<8x16xi32> to vector<8x1xi32>
    %112 = vector.broadcast %111 : vector<8x1xi32> to vector<8x256xi32>
    %113 = arith.cmpi eq, %1, %112 : vector<8x256xi32>
    %114 = arith.extui %113 : vector<8x256xi1> to vector<8x256xi32>
    %115 = arith.sitofp %114 : vector<8x256xi32> to vector<8x256xf32>
    %116 = arith.truncf %115 : vector<8x256xf32> to vector<8x256xbf16>
    %c3072 = arith.constant 3072 : index
    %c0_26 = arith.constant 0 : index
    %117 = vector.load %arg2[%c3072, %c0_26] : memref<4096x64xbf16, #tpu.memory_space<vmem>>, vector<256x64xbf16>
    %cst_27 = arith.constant dense<0.000000e+00> : vector<8x64xf32>
    %118 = tpu.matmul %116, %117, %cst_27 {dimension_numbers = #tpu.dot_dimension_numbers<[1], [0], [0], [1], [0, 0, 1, 1], [], []>} : vector<8x256xbf16>, vector<256x64xbf16>, vector<8x64xf32> -> vector<8x64xf32>
    %119 = arith.addf %110, %118 : vector<8x64xf32>
    %120 = vector.extract_strided_slice %0 {offsets = [0, 13], sizes = [8, 1], strides = [1, 1]} : vector<8x16xi32> to vector<8x1xi32>
    %121 = vector.broadcast %120 : vector<8x1xi32> to vector<8x256xi32>
    %122 = arith.cmpi eq, %1, %121 : vector<8x256xi32>
    %123 = arith.extui %122 : vector<8x256xi1> to vector<8x256xi32>
    %124 = arith.sitofp %123 : vector<8x256xi32> to vector<8x256xf32>
    %125 = arith.truncf %124 : vector<8x256xf32> to vector<8x256xbf16>
    %c3328 = arith.constant 3328 : index
    %c0_28 = arith.constant 0 : index
    %126 = vector.load %arg2[%c3328, %c0_28] : memref<4096x64xbf16, #tpu.memory_space<vmem>>, vector<256x64xbf16>
    %cst_29 = arith.constant dense<0.000000e+00> : vector<8x64xf32>
    %127 = tpu.matmul %125, %126, %cst_29 {dimension_numbers = #tpu.dot_dimension_numbers<[1], [0], [0], [1], [0, 0, 1, 1], [], []>} : vector<8x256xbf16>, vector<256x64xbf16>, vector<8x64xf32> -> vector<8x64xf32>
    %128 = arith.addf %119, %127 : vector<8x64xf32>
    %129 = vector.extract_strided_slice %0 {offsets = [0, 14], sizes = [8, 1], strides = [1, 1]} : vector<8x16xi32> to vector<8x1xi32>
    %130 = vector.broadcast %129 : vector<8x1xi32> to vector<8x256xi32>
    %131 = arith.cmpi eq, %1, %130 : vector<8x256xi32>
    %132 = arith.extui %131 : vector<8x256xi1> to vector<8x256xi32>
    %133 = arith.sitofp %132 : vector<8x256xi32> to vector<8x256xf32>
    %134 = arith.truncf %133 : vector<8x256xf32> to vector<8x256xbf16>
    %c3584 = arith.constant 3584 : index
    %c0_30 = arith.constant 0 : index
    %135 = vector.load %arg2[%c3584, %c0_30] : memref<4096x64xbf16, #tpu.memory_space<vmem>>, vector<256x64xbf16>
    %cst_31 = arith.constant dense<0.000000e+00> : vector<8x64xf32>
    %136 = tpu.matmul %134, %135, %cst_31 {dimension_numbers = #tpu.dot_dimension_numbers<[1], [0], [0], [1], [0, 0, 1, 1], [], []>} : vector<8x256xbf16>, vector<256x64xbf16>, vector<8x64xf32> -> vector<8x64xf32>
    %137 = arith.addf %128, %136 : vector<8x64xf32>
    %138 = vector.extract_strided_slice %0 {offsets = [0, 15], sizes = [8, 1], strides = [1, 1]} : vector<8x16xi32> to vector<8x1xi32>
    %139 = vector.broadcast %138 : vector<8x1xi32> to vector<8x256xi32>
    %140 = arith.cmpi eq, %1, %139 : vector<8x256xi32>
    %141 = arith.extui %140 : vector<8x256xi1> to vector<8x256xi32>
    %142 = arith.sitofp %141 : vector<8x256xi32> to vector<8x256xf32>
    %143 = arith.truncf %142 : vector<8x256xf32> to vector<8x256xbf16>
    %c3840 = arith.constant 3840 : index
    %c0_32 = arith.constant 0 : index
    %144 = vector.load %arg2[%c3840, %c0_32] : memref<4096x64xbf16, #tpu.memory_space<vmem>>, vector<256x64xbf16>
    %cst_33 = arith.constant dense<0.000000e+00> : vector<8x64xf32>
    %145 = tpu.matmul %143, %144, %cst_33 {dimension_numbers = #tpu.dot_dimension_numbers<[1], [0], [0], [1], [0, 0, 1, 1], [], []>} : vector<8x256xbf16>, vector<256x64xbf16>, vector<8x64xf32> -> vector<8x64xf32>
    %146 = arith.addf %137, %145 : vector<8x64xf32>
    %c0_34 = arith.constant 0 : index
    %c0_35 = arith.constant 0 : index
    %147 = vector.load %arg3[%c0_34, %c0_35] : memref<360x128xbf16, #tpu.memory_space<vmem>>, vector<64x128xbf16>
    %c64 = arith.constant 64 : index
    %c0_36 = arith.constant 0 : index
    %148 = vector.load %arg3[%c64, %c0_36] : memref<360x128xbf16, #tpu.memory_space<vmem>>, vector<128x128xbf16>
    %c192 = arith.constant 192 : index
    %c0_37 = arith.constant 0 : index
    %149 = vector.load %arg3[%c192, %c0_37] : memref<360x128xbf16, #tpu.memory_space<vmem>>, vector<32x128xbf16>
    %c224 = arith.constant 224 : index
    %c0_38 = arith.constant 0 : index
    %150 = vector.load %arg3[%c224, %c0_38] : memref<360x128xbf16, #tpu.memory_space<vmem>>, vector<128x128xbf16>
    %c352 = arith.constant 352 : index
    %c0_39 = arith.constant 0 : index
    %151 = vector.load %arg3[%c352, %c0_39] : memref<360x128xbf16, #tpu.memory_space<vmem>>, vector<1x64xbf16>
    %c353 = arith.constant 353 : index
    %c0_40 = arith.constant 0 : index
    %152 = vector.load %arg3[%c353, %c0_40] : memref<360x128xbf16, #tpu.memory_space<vmem>>, vector<1x128xbf16>
    %c354 = arith.constant 354 : index
    %c0_41 = arith.constant 0 : index
    %153 = vector.load %arg3[%c354, %c0_41] : memref<360x128xbf16, #tpu.memory_space<vmem>>, vector<1x128xbf16>
    %c355 = arith.constant 355 : index
    %c0_42 = arith.constant 0 : index
    %154 = vector.load %arg3[%c355, %c0_42] : memref<360x128xbf16, #tpu.memory_space<vmem>>, vector<1x128xbf16>
    %c356 = arith.constant 356 : index
    %c0_43 = arith.constant 0 : index
    %155 = vector.load %arg3[%c356, %c0_43] : memref<360x128xbf16, #tpu.memory_space<vmem>>, vector<1x128xbf16>
    %156 = arith.extf %151 : vector<1x64xbf16> to vector<1x64xf32>
    %157 = vector.broadcast %156 : vector<1x64xf32> to vector<8x64xf32>
    %158 = arith.addf %146, %157 : vector<8x64xf32>
    %cst_44 = arith.constant 0.000000e+00 : f32
    %159 = vector.broadcast %cst_44 : f32 to vector<8x64xf32>
    %160 = arith.maximumf %158, %159 : vector<8x64xf32>
    %161 = arith.truncf %160 : vector<8x64xf32> to vector<8x64xbf16>
    %cst_45 = arith.constant dense<0.000000e+00> : vector<8x128xf32>
    %162 = tpu.matmul %161, %147, %cst_45 {dimension_numbers = #tpu.dot_dimension_numbers<[1], [0], [0], [1], [0, 0, 1, 1], [], []>} : vector<8x64xbf16>, vector<64x128xbf16>, vector<8x128xf32> -> vector<8x128xf32>
    %163 = arith.extf %152 : vector<1x128xbf16> to vector<1x128xf32>
    %164 = vector.broadcast %163 : vector<1x128xf32> to vector<8x128xf32>
    %165 = arith.addf %162, %164 : vector<8x128xf32>
    %c0_46 = arith.constant 0 : index
    %c0_47 = arith.constant 0 : index
    %166 = vector.load %arg4[%c0_46, %c0_47] : memref<8x128xf32, #tpu.memory_space<vmem>>, vector<8x128xf32>
    %167 = arith.addf %165, %166 : vector<8x128xf32>
    %168 = arith.truncf %167 : vector<8x128xf32> to vector<8x128xbf16>
    %cst_48 = arith.constant dense<0.000000e+00> : vector<8x128xf32>
    %169 = tpu.matmul %168, %148, %cst_48 {dimension_numbers = #tpu.dot_dimension_numbers<[1], [0], [0], [1], [0, 0, 1, 1], [], []>} : vector<8x128xbf16>, vector<128x128xbf16>, vector<8x128xf32> -> vector<8x128xf32>
    %170 = arith.extf %153 : vector<1x128xbf16> to vector<1x128xf32>
    %171 = vector.broadcast %170 : vector<1x128xf32> to vector<8x128xf32>
    %172 = arith.addf %169, %171 : vector<8x128xf32>
    %173 = vector.extract_strided_slice %166 {offsets = [0, 64], sizes = [8, 32], strides = [1, 1]} : vector<8x128xf32> to vector<8x32xf32>
    %174 = vector.extract_strided_slice %172 {offsets = [0, 0], sizes = [8, 32], strides = [1, 1]} : vector<8x128xf32> to vector<8x32xf32>
    %175 = arith.negf %174 : vector<8x32xf32>
    %176 = math.exp %175 : vector<8x32xf32>
    %cst_49 = arith.constant 1.000000e+00 : f32
    %177 = vector.broadcast %cst_49 : f32 to vector<8x32xf32>
    %178 = arith.addf %177, %176 : vector<8x32xf32>
    %179 = arith.divf %177, %178 : vector<8x32xf32>
    %180 = vector.extract_strided_slice %172 {offsets = [0, 32], sizes = [8, 32], strides = [1, 1]} : vector<8x128xf32> to vector<8x32xf32>
    %181 = arith.negf %180 : vector<8x32xf32>
    %182 = math.exp %181 : vector<8x32xf32>
    %cst_50 = arith.constant 1.000000e+00 : f32
    %183 = vector.broadcast %cst_50 : f32 to vector<8x32xf32>
    %184 = arith.addf %183, %182 : vector<8x32xf32>
    %185 = arith.divf %183, %184 : vector<8x32xf32>
    %186 = vector.extract_strided_slice %172 {offsets = [0, 64], sizes = [8, 32], strides = [1, 1]} : vector<8x128xf32> to vector<8x32xf32>
    %187 = math.tanh %186 : vector<8x32xf32>
    %188 = vector.extract_strided_slice %172 {offsets = [0, 96], sizes = [8, 32], strides = [1, 1]} : vector<8x128xf32> to vector<8x32xf32>
    %189 = arith.negf %188 : vector<8x32xf32>
    %190 = math.exp %189 : vector<8x32xf32>
    %cst_51 = arith.constant 1.000000e+00 : f32
    %191 = vector.broadcast %cst_51 : f32 to vector<8x32xf32>
    %192 = arith.addf %191, %190 : vector<8x32xf32>
    %193 = arith.divf %191, %192 : vector<8x32xf32>
    %194 = arith.mulf %185, %173 : vector<8x32xf32>
    %195 = arith.mulf %179, %187 : vector<8x32xf32>
    %196 = arith.addf %194, %195 : vector<8x32xf32>
    %197 = math.tanh %196 : vector<8x32xf32>
    %198 = arith.mulf %193, %197 : vector<8x32xf32>
    %199 = arith.truncf %198 : vector<8x32xf32> to vector<8x32xbf16>
    %cst_52 = arith.constant dense<0.000000e+00> : vector<8x128xf32>
    %200 = tpu.matmul %199, %149, %cst_52 {dimension_numbers = #tpu.dot_dimension_numbers<[1], [0], [0], [1], [0, 0, 1, 1], [], []>} : vector<8x32xbf16>, vector<32x128xbf16>, vector<8x128xf32> -> vector<8x128xf32>
    %201 = arith.extf %154 : vector<1x128xbf16> to vector<1x128xf32>
    %202 = vector.broadcast %201 : vector<1x128xf32> to vector<8x128xf32>
    %203 = arith.addf %200, %202 : vector<8x128xf32>
    %cst_53 = arith.constant 0.000000e+00 : f32
    %204 = vector.broadcast %cst_53 : f32 to vector<8x128xf32>
    %205 = arith.maximumf %203, %204 : vector<8x128xf32>
    %206 = arith.truncf %205 : vector<8x128xf32> to vector<8x128xbf16>
    %cst_54 = arith.constant dense<0.000000e+00> : vector<8x128xf32>
    %207 = tpu.matmul %206, %150, %cst_54 {dimension_numbers = #tpu.dot_dimension_numbers<[1], [0], [0], [1], [0, 0, 1, 1], [], []>} : vector<8x128xbf16>, vector<128x128xbf16>, vector<8x128xf32> -> vector<8x128xf32>
    %208 = arith.extf %155 : vector<1x128xbf16> to vector<1x128xf32>
    %209 = vector.broadcast %208 : vector<1x128xf32> to vector<8x128xf32>
    %210 = arith.addf %207, %209 : vector<8x128xf32>
    %c0_55 = arith.constant 0 : index
    %c0_56 = arith.constant 0 : index
    %211 = vector.load %arg5[%c0_55, %c0_56] : memref<8x128xf32, #tpu.memory_space<vmem>>, vector<8x128xf32>
    tpu.vector_store %arg5[%c0_55, %c0_56], %210 {strides = array<i32>} : memref<8x128xf32, #tpu.memory_space<vmem>>, vector<8x128xf32>,
    %c0_57 = arith.constant 0 : index
    %c64_58 = arith.constant 64 : index
    %212 = vector.load %arg5[%c0_57, %c64_58] : memref<8x128xf32, #tpu.memory_space<vmem>>, vector<8x32xf32>
    tpu.vector_store %arg5[%c0_57, %c64_58], %198 {strides = array<i32>} : memref<8x128xf32, #tpu.memory_space<vmem>>, vector<8x32xf32>,
    %c0_59 = arith.constant 0 : index
    %c96 = arith.constant 96 : index
    %213 = vector.load %arg5[%c0_59, %c96] : memref<8x128xf32, #tpu.memory_space<vmem>>, vector<8x32xf32>
    tpu.vector_store %arg5[%c0_59, %c96], %196 {strides = array<i32>} : memref<8x128xf32, #tpu.memory_space<vmem>>, vector<8x32xf32>,
    return
  }
  func.func @transform_0(%arg0: i32) -> (i32, i32) {
    %c0_i32 = arith.constant 0 : i32
    %c0_i32_0 = arith.constant 0 : i32
    return %arg0, %c0_i32 : i32, i32
  }
  func.func @transform_1(%arg0: i32) -> (i32, i32) {
    %c0_i32 = arith.constant 0 : i32
    %c0_i32_0 = arith.constant 0 : i32
    %c0_i32_1 = arith.constant 0 : i32
    return %c0_i32, %c0_i32_0 : i32, i32
  }
  func.func @transform_2(%arg0: i32) -> (i32, i32) {
    %c0_i32 = arith.constant 0 : i32
    %c0_i32_0 = arith.constant 0 : i32
    %c0_i32_1 = arith.constant 0 : i32
    return %c0_i32, %c0_i32_0 : i32, i32
  }
  func.func @transform_3(%arg0: i32) -> (i32, i32) {
    %c0_i32 = arith.constant 0 : i32
    %c0_i32_0 = arith.constant 0 : i32
    return %arg0, %c0_i32 : i32, i32
  }
  func.func @transform_4(%arg0: i32) -> (i32, i32) {
    %c0_i32 = arith.constant 0 : i32
    %c0_i32_0 = arith.constant 0 : i32
    return %arg0, %c0_i32 : i32, i32
  }
}

</mosaic_0001>

<llo_original>
// kernel: ptb_recurrent_a2c_forward.1
$region0: #{ptb_recurrent_a2c_forward.1}
  #allocation0 [shape = 'u32[]', space=smem, size = 0x4, offset = 0x4, fixed_abs, tag = 'smem constant byte address 0x4 - core index']
  #allocation1 [shape = 'u32[144,128]{1,0:T(1,128)}', space=vmem, size = 0x12000, scoped, tag = 'internal scratch']
  %s0 = inlined_call_operand.vmem [shape: s32[8,16], index: 0, kind: input, shape index: {}]
  %s1 = inlined_call_operand.vmem [shape: bf16[4096,64], index: 1, kind: input, shape index: {}]
  %s2 = inlined_call_operand.vmem [shape: bf16[360,128], index: 2, kind: input, shape index: {}]
  %s3 = inlined_call_operand.vmem [shape: f32[8,128], index: 3, kind: input, shape index: {}]
  %s4 = inlined_call_operand.vmem [shape: f32[8,128], index: 4, kind: output, shape index: {}]
  %s5 = sld [smem:[#allocation0]]
  $region26: #{ptb_recurrent_a2c_forward.1} parent=0
    _
  %s7 = ssub.s32 1, %s5
  %s8 = scalar_select 0, %s7, %s5
  // Predicated region
  $region2: #{ptb_recurrent_a2c_forward.1} parent=0 // pred_check
    _
  $region3: #{ptb_recurrent_a2c_forward.1} parent=0 // pred_check_branch
    %10 = sbr.rel (0) target = $region5
  $region4: #{ptb_recurrent_a2c_forward.1} parent=0 // pred_region
    _
  $region5: #{ptb_recurrent_a2c_forward.1} parent=0 // pred_fallthru
    _
  // Predicated region
  $region6: #{ptb_recurrent_a2c_forward.1} parent=0 // pred_check
    _
  $region7: #{ptb_recurrent_a2c_forward.1} parent=0 // pred_check_branch
    %12 = sbr.rel (0) target = $region9
  $region8: #{ptb_recurrent_a2c_forward.1} parent=0 // pred_region
    _
  $region9: #{ptb_recurrent_a2c_forward.1} parent=0 // pred_fallthru
    _
  // Predicated region
  $region10: #{ptb_recurrent_a2c_forward.1} parent=0 // pred_check
    _
  $region11: #{ptb_recurrent_a2c_forward.1} parent=0 // pred_check_branch
    %14 = sbr.rel (0) target = $region13
  $region12: #{ptb_recurrent_a2c_forward.1} parent=0 // pred_region
    _
  $region13: #{ptb_recurrent_a2c_forward.1} parent=0 // pred_fallthru
    _
  // Predicated region
  $region14: #{ptb_recurrent_a2c_forward.1} parent=0 // pred_check
    _
  $region15: #{ptb_recurrent_a2c_forward.1} parent=0 // pred_check_branch
    %16 = sbr.rel (0) target = $region17
  $region16: #{ptb_recurrent_a2c_forward.1} parent=0 // pred_region
    _
  $region17: #{ptb_recurrent_a2c_forward.1} parent=0 // pred_fallthru
    _
  %v18 = vld [vmem:[%s0] sm:$0xff]
  %v19 = vlaneseq
  %v20 = vand.u32 %v19, 127
  %v21 = vadd.s32 %v20, 128
  %22 = vset.pattern.permute.xlu0 0
  %23 = vperm.xlu0 %22, %v18
  %v24 = vpop.permute.xlu0 %23
  %vm25 = vcmp.eq.s32.totalorder %v20, %v24
  %vm26 = vcmp.eq.s32.totalorder %v21, %v24
  %v27 = vsel %vm25, 1, 0
  %v28 = vsel %vm26, 1, 0
  %v29 = vcvt.s32.f32 %v27
  %v30 = vcvt.s32.f32 %v28
  %v31 = vpack.c.bf16 %v29, %v29
  %v32 = vpack.c.bf16 %v30, %v30
  %v33 = vld [vmem:[%s1] sm:$0xf]
  %v34 = vld [vmem:[%s1 + $0x4] sm:$0xf]
  %v35 = vld [vmem:[%s1 + $0x8] sm:$0xf]
  %v36 = vld [vmem:[%s1 + $0xc] sm:$0xf]
  %v37 = vld [vmem:[%s1 + $0x10] sm:$0xf]
  %v38 = vld [vmem:[%s1 + $0x14] sm:$0xf]
  %v39 = vld [vmem:[%s1 + $0x18] sm:$0xf]
  %v40 = vld [vmem:[%s1 + $0x1c] sm:$0xf]
  %v41 = vld [vmem:[%s1 + $0x20] sm:$0xf]
  %v42 = vld [vmem:[%s1 + $0x24] sm:$0xf]
  %v43 = vld [vmem:[%s1 + $0x28] sm:$0xf]
  %v44 = vld [vmem:[%s1 + $0x2c] sm:$0xf]
  %v45 = vld [vmem:[%s1 + $0x30] sm:$0xf]
  %v46 = vld [vmem:[%s1 + $0x34] sm:$0xf]
  %v47 = vld [vmem:[%s1 + $0x38] sm:$0xf]
  %v48 = vld [vmem:[%s1 + $0x3c] sm:$0xf]
  %v49 = vld [vmem:[%s1 + $0x40] sm:$0xf]
  %v50 = vld [vmem:[%s1 + $0x44] sm:$0xf]
  %v51 = vld [vmem:[%s1 + $0x48] sm:$0xf]
  %v52 = vld [vmem:[%s1 + $0x4c] sm:$0xf]
  %v53 = vld [vmem:[%s1 + $0x50] sm:$0xf]
  %v54 = vld [vmem:[%s1 + $0x54] sm:$0xf]
  %v55 = vld [vmem:[%s1 + $0x58] sm:$0xf]
  %v56 = vld [vmem:[%s1 + $0x5c] sm:$0xf]
  %v57 = vld [vmem:[%s1 + $0x60] sm:$0xf]
  %v58 = vld [vmem:[%s1 + $0x64] sm:$0xf]
  %v59 = vld [vmem:[%s1 + $0x68] sm:$0xf]
  %v60 = vld [vmem:[%s1 + $0x6c] sm:$0xf]
  %v61 = vld [vmem:[%s1 + $0x70] sm:$0xf]
  %v62 = vld [vmem:[%s1 + $0x74] sm:$0xf]
  %v63 = vld [vmem:[%s1 + $0x78] sm:$0xf]
  %v64 = vld [vmem:[%s1 + $0x7c] sm:$0xf]
  %65 = vset.pattern.permute.xlu0 1
  %66 = vperm.xlu0 %65, %v18
  %v67 = vpop.permute.xlu0 %66
  %vm68 = vcmp.eq.s32.totalorder %v20, %v67
  %vm69 = vcmp.eq.s32.totalorder %v21, %v67
  %v70 = vsel %vm68, 1, 0
  %v71 = vsel %vm69, 1, 0
  %v72 = vcvt.s32.f32 %v70
  %v73 = vcvt.s32.f32 %v71
  %v74 = vpack.c.bf16 %v72, %v72
  %v75 = vpack.c.bf16 %v73, %v73
  %v76 = vld [vmem:[%s1 + $0x80] sm:$0xf]
  %v77 = vld [vmem:[%s1 + $0x84] sm:$0xf]
  %v78 = vld [vmem:[%s1 + $0x88] sm:$0xf]
  %v79 = vld [vmem:[%s1 + $0x8c] sm:$0xf]
  %v80 = vld [vmem:[%s1 + $0x90] sm:$0xf]
  %v81 = vld [vmem:[%s1 + $0x94] sm:$0xf]
  %v82 = vld [vmem:[%s1 + $0x98] sm:$0xf]
  %v83 = vld [vmem:[%s1 + $0x9c] sm:$0xf]
  %v84 = vld [vmem:[%s1 + $0xa0] sm:$0xf]
  %v85 = vld [vmem:[%s1 + $0xa4] sm:$0xf]
  %v86 = vld [vmem:[%s1 + $0xa8] sm:$0xf]
  %v87 = vld [vmem:[%s1 + $0xac] sm:$0xf]
  %v88 = vld [vmem:[%s1 + $0xb0] sm:$0xf]
  %v89 = vld [vmem:[%s1 + $0xb4] sm:$0xf]
  %v90 = vld [vmem:[%s1 + $0xb8] sm:$0xf]
  %v91 = vld [vmem:[%s1 + $0xbc] sm:$0xf]
  %v92 = vld [vmem:[%s1 + $0xc0] sm:$0xf]
  %v93 = vld [vmem:[%s1 + $0xc4] sm:$0xf]
  %v94 = vld [vmem:[%s1 + $0xc8] sm:$0xf]
  %v95 = vld [vmem:[%s1 + $0xcc] sm:$0xf]
  %v96 = vld [vmem:[%s1 + $0xd0] sm:$0xf]
  %v97 = vld [vmem:[%s1 + $0xd4] sm:$0xf]
  %v98 = vld [vmem:[%s1 + $0xd8] sm:$0xf]
  %v99 = vld [vmem:[%s1 + $0xdc] sm:$0xf]
  %v100 = vld [vmem:[%s1 + $0xe0] sm:$0xf]
  %v101 = vld [vmem:[%s1 + $0xe4] sm:$0xf]
  %v102 = vld [vmem:[%s1 + $0xe8] sm:$0xf]
  %v103 = vld [vmem:[%s1 + $0xec] sm:$0xf]
  %v104 = vld [vmem:[%s1 + $0xf0] sm:$0xf]
  %v105 = vld [vmem:[%s1 + $0xf4] sm:$0xf]
  %v106 = vld [vmem:[%s1 + $0xf8] sm:$0xf]
  %v107 = vld [vmem:[%s1 + $0xfc] sm:$0xf]
  %v140 = vunpack.c.l.b16 %v76
  %v141 = vunpack.c.l.b16 %v77
  %v142 = vunpack.c.l.b16 %v78
  %v143 = vunpack.c.l.b16 %v79
  %v144 = vunpack.c.l.b16 %v80
  %v145 = vunpack.c.l.b16 %v81
  %v146 = vunpack.c.l.b16 %v82
  %v147 = vunpack.c.l.b16 %v83
  %v148 = vunpack.c.l.b16 %v84
  %v149 = vunpack.c.l.b16 %v85
  %v150 = vunpack.c.l.b16 %v86
  %v151 = vunpack.c.l.b16 %v87
  %v152 = vunpack.c.l.b16 %v88
  %v153 = vunpack.c.l.b16 %v89
  %v154 = vunpack.c.l.b16 %v90
  %v155 = vunpack.c.l.b16 %v91
  %v156 = vunpack.c.l.b16 %v92
  %v157 = vunpack.c.l.b16 %v93
  %v158 = vunpack.c.l.b16 %v94
  %v159 = vunpack.c.l.b16 %v95
  %v160 = vunpack.c.l.b16 %v96
  %v161 = vunpack.c.l.b16 %v97
  %v162 = vunpack.c.l.b16 %v98
  %v163 = vunpack.c.l.b16 %v99
  %v164 = vunpack.c.l.b16 %v100
  %v165 = vunpack.c.l.b16 %v101
  %v166 = vunpack.c.l.b16 %v102
  %v167 = vunpack.c.l.b16 %v103
  %v168 = vunpack.c.l.b16 %v104
  %v169 = vunpack.c.l.b16 %v105
  %v170 = vunpack.c.l.b16 %v106
  %v171 = vunpack.c.l.b16 %v107
  %v172 = vpack.c.b16 %v141, %v140
  %v173 = vpack.c.b16 %v143, %v142
  %v174 = vpack.c.b16 %v145, %v144
  %v175 = vpack.c.b16 %v147, %v146
  %v176 = vpack.c.b16 %v149, %v148
  %v177 = vpack.c.b16 %v151, %v150
  %v178 = vpack.c.b16 %v153, %v152
  %v179 = vpack.c.b16 %v155, %v154
  %v180 = vpack.c.b16 %v157, %v156
  %v181 = vpack.c.b16 %v159, %v158
  %v182 = vpack.c.b16 %v161, %v160
  %v183 = vpack.c.b16 %v163, %v162
  %v184 = vpack.c.b16 %v165, %v164
  %v185 = vpack.c.b16 %v167, %v166
  %v186 = vpack.c.b16 %v169, %v168
  %v187 = vpack.c.b16 %v171, %v170
  %204 = vmatprep.subr.bf16.mxu0 0
  %205 = vmatpush1.bf16.msra.mxu0 %v179
  %206 = vmatprep.subr.bf16.mxu0 0
  %207 = vmatpush1.bf16.msra.mxu0 %v178
  %208 = vmatprep.subr.bf16.mxu0 0
  %209 = vmatpush1.bf16.msra.mxu0 %v177
  %210 = vmatprep.subr.bf16.mxu0 0
  %211 = vmatpush1.bf16.msra.mxu0 %v176
  %212 = vmatprep.subr.bf16.mxu0 0
  %213 = vmatpush1.bf16.msra.mxu0 %v175
  %214 = vmatprep.subr.bf16.mxu0 0
  %215 = vmatpush1.bf16.msra.mxu0 %v174
  %216 = vmatprep.subr.bf16.mxu0 0
  %217 = vmatpush1.bf16.msra.mxu0 %v173
  %218 = vmatprep.subr.bf16.mxu0 0
  %219 = vmatpush1.bf16.msra.mxu0 %v172
  %220 = vmatprep.subr.bf16.mxu0 0
  %221 = vmatpush2.bf16.msra.mxu0 %v187
  %222 = vmatprep.subr.bf16.mxu0 0
  %223 = vmatpush2.bf16.msra.mxu0 %v186
  %224 = vmatprep.subr.bf16.mxu0 0
  %225 = vmatpush2.bf16.msra.mxu0 %v185
  %226 = vmatprep.subr.bf16.mxu0 0
  %227 = vmatpush2.bf16.msra.mxu0 %v184
  %228 = vmatprep.subr.bf16.mxu0 0
  %229 = vmatpush2.bf16.msra.mxu0 %v183
  %230 = vmatprep.subr.bf16.mxu0 0
  %231 = vmatpush2.bf16.msra.mxu0 %v182
  %232 = vmatprep.subr.bf16.mxu0 0
  %233 = vmatpush2.bf16.msra.mxu0 %v181
  %234 = vmatprep.subr.bf16.mxu0 0
  %235 = vmatpush2.bf16.msra.mxu0 %v180
  %236 = vmatprep.mubr.bf16.mxu0 %v75
  %237 = vmatmul.mubr.bf16.gmra.mxu0 %v74
  %v238 = vpop.f32.mrf.mxu0
  %v239 = vadd.f32 0.0, %v238
  %v240 = vpop.f32.mrf.mxu0
  %v241 = vpop.f32.mrf.mxu0
  %v242 = vpop.f32.mrf.mxu0
  %243 = vdwg.mxu0
  %v276 = vunpack.c.l.b16 %v33
  %v277 = vunpack.c.l.b16 %v34
  %v278 = vunpack.c.l.b16 %v35
  %v279 = vunpack.c.l.b16 %v36
  %v280 = vunpack.c.l.b16 %v37
  %v281 = vunpack.c.l.b16 %v38
  %v282 = vunpack.c.l.b16 %v39
  %v283 = vunpack.c.l.b16 %v40
  %v284 = vunpack.c.l.b16 %v41
  %v285 = vunpack.c.l.b16 %v42
  %v286 = vunpack.c.l.b16 %v43
  %v287 = vunpack.c.l.b16 %v44
  %v288 = vunpack.c.l.b16 %v45
  %v289 = vunpack.c.l.b16 %v46
  %v290 = vunpack.c.l.b16 %v47
  %v291 = vunpack.c.l.b16 %v48
  %v292 = vunpack.c.l.b16 %v49
  %v293 = vunpack.c.l.b16 %v50
  %v294 = vunpack.c.l.b16 %v51
  %v295 = vunpack.c.l.b16 %v52
  %v296 = vunpack.c.l.b16 %v53
  %v297 = vunpack.c.l.b16 %v54
  %v298 = vunpack.c.l.b16 %v55
  %v299 = vunpack.c.l.b16 %v56
  %v300 = vunpack.c.l.b16 %v57
  %v301 = vunpack.c.l.b16 %v58
  %v302 = vunpack.c.l.b16 %v59
  %v303 = vunpack.c.l.b16 %v60
  %v304 = vunpack.c.l.b16 %v61
  %v305 = vunpack.c.l.b16 %v62
  %v306 = vunpack.c.l.b16 %v63
  %v307 = vunpack.c.l.b16 %v64
  %v308 = vpack.c.b16 %v277, %v276
  %v309 = vpack.c.b16 %v279, %v278
  %v310 = vpack.c.b16 %v281, %v280
  %v311 = vpack.c.b16 %v283, %v282
  %v312 = vpack.c.b16 %v285, %v284
  %v313 = vpack.c.b16 %v287, %v286
  %v314 = vpack.c.b16 %v289, %v288
  %v315 = vpack.c.b16 %v291, %v290
  %v316 = vpack.c.b16 %v293, %v292
  %v317 = vpack.c.b16 %v295, %v294
  %v318 = vpack.c.b16 %v297, %v296
  %v319 = vpack.c.b16 %v299, %v298
  %v320 = vpack.c.b16 %v301, %v300
  %v321 = vpack.c.b16 %v303, %v302
  %v322 = vpack.c.b16 %v305, %v304
  %v323 = vpack.c.b16 %v307, %v306
  %340 = vmatprep.subr.bf16.mxu0 0
  %341 = vmatpush1.bf16.msra.mxu0 %v315
  %342 = vmatprep.subr.bf16.mxu0 0
  %343 = vmatpush1.bf16.msra.mxu0 %v314
  %344 = vmatprep.subr.bf16.mxu0 0
  %345 = vmatpush1.bf16.msra.mxu0 %v313
  %346 = vmatprep.subr.bf16.mxu0 0
  %347 = vmatpush1.bf16.msra.mxu0 %v312
  %348 = vmatprep.subr.bf16.mxu0 0
  %349 = vmatpush1.bf16.msra.mxu0 %v311
  %350 = vmatprep.subr.bf16.mxu0 0
  %351 = vmatpush1.bf16.msra.mxu0 %v310
  %352 = vmatprep.subr.bf16.mxu0 0
  %353 = vmatpush1.bf16.msra.mxu0 %v309
  %354 = vmatprep.subr.bf16.mxu0 0
  %355 = vmatpush1.bf16.msra.mxu0 %v308
  %356 = vmatprep.subr.bf16.mxu0 0
  %357 = vmatpush2.bf16.msra.mxu0 %v323
  %358 = vmatprep.subr.bf16.mxu0 0
  %359 = vmatpush2.bf16.msra.mxu0 %v322
  %360 = vmatprep.subr.bf16.mxu0 0
  %361 = vmatpush2.bf16.msra.mxu0 %v321
  %362 = vmatprep.subr.bf16.mxu0 0
  %363 = vmatpush2.bf16.msra.mxu0 %v320
  %364 = vmatprep.subr.bf16.mxu0 0
  %365 = vmatpush2.bf16.msra.mxu0 %v319
  %366 = vmatprep.subr.bf16.mxu0 0
  %367 = vmatpush2.bf16.msra.mxu0 %v318
  %368 = vmatprep.subr.bf16.mxu0 0
  %369 = vmatpush2.bf16.msra.mxu0 %v317
  %370 = vmatprep.subr.bf16.mxu0 0
  %371 = vmatpush2.bf16.msra.mxu0 %v316
  %372 = vmatprep.mubr.bf16.mxu0 %v32
  %373 = vmatmul.mubr.bf16.gmra.mxu0 %v31
  %v374 = vpop.f32.mrf.mxu0
  %v375 = vadd.f32 %v239, %v374
  %v376 = vpop.f32.mrf.mxu0
  %v377 = vpop.f32.mrf.mxu0
  %v378 = vpop.f32.mrf.mxu0
  %379 = vdwg.mxu0
  %380 = vset.pattern.permute.xlu0 2
  %381 = vperm.xlu0 %380, %v18
  %v382 = vpop.permute.xlu0 %381
  %vm383 = vcmp.eq.s32.totalorder %v20, %v382
  %vm384 = vcmp.eq.s32.totalorder %v21, %v382
  %v385 = vsel %vm383, 1, 0
  %v386 = vsel %vm384, 1, 0
  %v387 = vcvt.s32.f32 %v385
  %v388 = vcvt.s32.f32 %v386
  %v389 = vpack.c.bf16 %v387, %v387
  %v390 = vpack.c.bf16 %v388, %v388
  %v391 = vld [vmem:[%s1 + $0x100] sm:$0xf]
  %v392 = vld [vmem:[%s1 + $0x104] sm:$0xf]
  %v393 = vld [vmem:[%s1 + $0x108] sm:$0xf]
  %v394 = vld [vmem:[%s1 + $0x10c] sm:$0xf]
  %v395 = vld [vmem:[%s1 + $0x110] sm:$0xf]
  %v396 = vld [vmem:[%s1 + $0x114] sm:$0xf]
  %v397 = vld [vmem:[%s1 + $0x118] sm:$0xf]
  %v398 = vld [vmem:[%s1 + $0x11c] sm:$0xf]
  %v399 = vld [vmem:[%s1 + $0x120] sm:$0xf]
  %v400 = vld [vmem:[%s1 + $0x124] sm:$0xf]
  %v401 = vld [vmem:[%s1 + $0x128] sm:$0xf]
  %v402 = vld [vmem:[%s1 + $0x12c] sm:$0xf]
  %v403 = vld [vmem:[%s1 + $0x130] sm:$0xf]
  %v404 = vld [vmem:[%s1 + $0x134] sm:$0xf]
  %v405 = vld [vmem:[%s1 + $0x138] sm:$0xf]
  %v406 = vld [vmem:[%s1 + $0x13c] sm:$0xf]
  %v407 = vld [vmem:[%s1 + $0x140] sm:$0xf]
  %v408 = vld [vmem:[%s1 + $0x144] sm:$0xf]
  %v409 = vld [vmem:[%s1 + $0x148] sm:$0xf]
  %v410 = vld [vmem:[%s1 + $0x14c] sm:$0xf]
  %v411 = vld [vmem:[%s1 + $0x150] sm:$0xf]
  %v412 = vld [vmem:[%s1 + $0x154] sm:$0xf]
  %v413 = vld [vmem:[%s1 + $0x158] sm:$0xf]
  %v414 = vld [vmem:[%s1 + $0x15c] sm:$0xf]
  %v415 = vld [vmem:[%s1 + $0x160] sm:$0xf]
  %v416 = vld [vmem:[%s1 + $0x164] sm:$0xf]
  %v417 = vld [vmem:[%s1 + $0x168] sm:$0xf]
  %v418 = vld [vmem:[%s1 + $0x16c] sm:$0xf]
  %v419 = vld [vmem:[%s1 + $0x170] sm:$0xf]
  %v420 = vld [vmem:[%s1 + $0x174] sm:$0xf]
  %v421 = vld [vmem:[%s1 + $0x178] sm:$0xf]
  %v422 = vld [vmem:[%s1 + $0x17c] sm:$0xf]
  %v455 = vunpack.c.l.b16 %v391
  %v456 = vunpack.c.l.b16 %v392
  %v457 = vunpack.c.l.b16 %v393
  %v458 = vunpack.c.l.b16 %v394
  %v459 = vunpack.c.l.b16 %v395
  %v460 = vunpack.c.l.b16 %v396
  %v461 = vunpack.c.l.b16 %v397
  %v462 = vunpack.c.l.b16 %v398
  %v463 = vunpack.c.l.b16 %v399
  %v464 = vunpack.c.l.b16 %v400
  %v465 = vunpack.c.l.b16 %v401
  %v466 = vunpack.c.l.b16 %v402
  %v467 = vunpack.c.l.b16 %v403
  %v468 = vunpack.c.l.b16 %v404
  %v469 = vunpack.c.l.b16 %v405
  %v470 = vunpack.c.l.b16 %v406
  %v471 = vunpack.c.l.b16 %v407
  %v472 = vunpack.c.l.b16 %v408
  %v473 = vunpack.c.l.b16 %v409
  %v474 = vunpack.c.l.b16 %v410
  %v475 = vunpack.c.l.b16 %v411
  %v476 = vunpack.c.l.b16 %v412
  %v477 = vunpack.c.l.b16 %v413
  %v478 = vunpack.c.l.b16 %v414
  %v479 = vunpack.c.l.b16 %v415
  %v480 = vunpack.c.l.b16 %v416
  %v481 = vunpack.c.l.b16 %v417
  %v482 = vunpack.c.l.b16 %v418
  %v483 = vunpack.c.l.b16 %v419
  %v484 = vunpack.c.l.b16 %v420
  %v485 = vunpack.c.l.b16 %v421
  %v486 = vunpack.c.l.b16 %v422
  %v487 = vpack.c.b16 %v456, %v455
  %v488 = vpack.c.b16 %v458, %v457
  %v489 = vpack.c.b16 %v460, %v459
  %v490 = vpack.c.b16 %v462, %v461
  %v491 = vpack.c.b16 %v464, %v463
  %v492 = vpack.c.b16 %v466, %v465
  %v493 = vpack.c.b16 %v468, %v467
  %v494 = vpack.c.b16 %v470, %v469
  %v495 = vpack.c.b16 %v472, %v471
  %v496 = vpack.c.b16 %v474, %v473
  %v497 = vpack.c.b16 %v476, %v475
  %v498 = vpack.c.b16 %v478, %v477
  %v499 = vpack.c.b16 %v480, %v479
  %v500 = vpack.c.b16 %v482, %v481
  %v501 = vpack.c.b16 %v484, %v483
  %v502 = vpack.c.b16 %v486, %v485
  %519 = vmatprep.subr.bf16.mxu0 0
  %520 = vmatpush1.bf16.msra.mxu0 %v494
  %521 = vmatprep.subr.bf16.mxu0 0
  %522 = vmatpush1.bf16.msra.mxu0 %v493
  %523 = vmatprep.subr.bf16.mxu0 0
  %524 = vmatpush1.bf16.msra.mxu0 %v492
  %525 = vmatprep.subr.bf16.mxu0 0
  %526 = vmatpush1.bf16.msra.mxu0 %v491
  %527 = vmatprep.subr.bf16.mxu0 0
  %528 = vmatpush1.bf16.msra.mxu0 %v490
  %529 = vmatprep.subr.bf16.mxu0 0
  %530 = vmatpush1.bf16.msra.mxu0 %v489
  %531 = vmatprep.subr.bf16.mxu0 0
  %532 = vmatpush1.bf16.msra.mxu0 %v488
  %533 = vmatprep.subr.bf16.mxu0 0
  %534 = vmatpush1.bf16.msra.mxu0 %v487
  %535 = vmatprep.subr.bf16.mxu0 0
  %536 = vmatpush2.bf16.msra.mxu0 %v502
  %537 = vmatprep.subr.bf16.mxu0 0
  %538 = vmatpush2.bf16.msra.mxu0 %v501
  %539 = vmatprep.subr.bf16.mxu0 0
  %540 = vmatpush2.bf16.msra.mxu0 %v500
  %541 = vmatprep.subr.bf16.mxu0 0
  %542 = vmatpush2.bf16.msra.mxu0 %v499
  %543 = vmatprep.subr.bf16.mxu0 0
  %544 = vmatpush2.bf16.msra.mxu0 %v498
  %545 = vmatprep.subr.bf16.mxu0 0
  %546 = vmatpush2.bf16.msra.mxu0 %v497
  %547 = vmatprep.subr.bf16.mxu0 0
  %548 = vmatpush2.bf16.msra.mxu0 %v496
  %549 = vmatprep.subr.bf16.mxu0 0
  %550 = vmatpush2.bf16.msra.mxu0 %v495
  %551 = vmatprep.mubr.bf16.mxu0 %v390
  %552 = vmatmul.mubr.bf16.gmra.mxu0 %v389
  %v553 = vpop.f32.mrf.mxu0
  %v554 = vadd.f32 0.0, %v553
  %v555 = vpop.f32.mrf.mxu0
  %v556 = vpop.f32.mrf.mxu0
  %v557 = vpop.f32.mrf.mxu0
  %558 = vdwg.mxu0
  %v559 = vadd.f32 %v375, %v554
  %560 = vset.pattern.permute.xlu0 3
  %561 = vperm.xlu0 %560, %v18
  %v562 = vpop.permute.xlu0 %561
  %vm563 = vcmp.eq.s32.totalorder %v20, %v562
  %vm564 = vcmp.eq.s32.totalorder %v21, %v562
  %v565 = vsel %vm563, 1, 0
  %v566 = vsel %vm564, 1, 0
  %v567 = vcvt.s32.f32 %v565
  %v568 = vcvt.s32.f32 %v566
  %v569 = vpack.c.bf16 %v567, %v567
  %v570 = vpack.c.bf16 %v568, %v568
  %v571 = vld [vmem:[%s1 + $0x180] sm:$0xf]
  %v572 = vld [vmem:[%s1 + $0x184] sm:$0xf]
  %v573 = vld [vmem:[%s1 + $0x188] sm:$0xf]
  %v574 = vld [vmem:[%s1 + $0x18c] sm:$0xf]
  %v575 = vld [vmem:[%s1 + $0x190] sm:$0xf]
  %v576 = vld [vmem:[%s1 + $0x194] sm:$0xf]
  %v577 = vld [vmem:[%s1 + $0x198] sm:$0xf]
  %v578 = vld [vmem:[%s1 + $0x19c] sm:$0xf]
  %v579 = vld [vmem:[%s1 + $0x1a0] sm:$0xf]
  %v580 = vld [vmem:[%s1 + $0x1a4] sm:$0xf]
  %v581 = vld [vmem:[%s1 + $0x1a8] sm:$0xf]
  %v582 = vld [vmem:[%s1 + $0x1ac] sm:$0xf]
  %v583 = vld [vmem:[%s1 + $0x1b0] sm:$0xf]
  %v584 = vld [vmem:[%s1 + $0x1b4] sm:$0xf]
  %v585 = vld [vmem:[%s1 + $0x1b8] sm:$0xf]
  %v586 = vld [vmem:[%s1 + $0x1bc] sm:$0xf]
  %v587 = vld [vmem:[%s1 + $0x1c0] sm:$0xf]
  %v588 = vld [vmem:[%s1 + $0x1c4] sm:$0xf]
  %v589 = vld [vmem:[%s1 + $0x1c8] sm:$0xf]
  %v590 = vld [vmem:[%s1 + $0x1cc] sm:$0xf]
  %v591 = vld [vmem:[%s1 + $0x1d0] sm:$0xf]
  %v592 = vld [vmem:[%s1 + $0x1d4] sm:$0xf]
  %v593 = vld [vmem:[%s1 + $0x1d8] sm:$0xf]
  %v594 = vld [vmem:[%s1 + $0x1dc] sm:$0xf]
  %v595 = vld [vmem:[%s1 + $0x1e0] sm:$0xf]
  %v596 = vld [vmem:[%s1 + $0x1e4] sm:$0xf]
  %v597 = vld [vmem:[%s1 + $0x1e8] sm:$0xf]
  %v598 = vld [vmem:[%s1 + $0x1ec] sm:$0xf]
  %v599 = vld [vmem:[%s1 + $0x1f0] sm:$0xf]
  %v600 = vld [vmem:[%s1 + $0x1f4] sm:$0xf]
  %v601 = vld [vmem:[%s1 + $0x1f8] sm:$0xf]
  %v602 = vld [vmem:[%s1 + $0x1fc] sm:$0xf]
  %v635 = vunpack.c.l.b16 %v571
  %v636 = vunpack.c.l.b16 %v572
  %v637 = vunpack.c.l.b16 %v573
  %v638 = vunpack.c.l.b16 %v574
  %v639 = vunpack.c.l.b16 %v575
  %v640 = vunpack.c.l.b16 %v576
  %v641 = vunpack.c.l.b16 %v577
  %v642 = vunpack.c.l.b16 %v578
  %v643 = vunpack.c.l.b16 %v579
  %v644 = vunpack.c.l.b16 %v580
  %v645 = vunpack.c.l.b16 %v581
  %v646 = vunpack.c.l.b16 %v582
  %v647 = vunpack.c.l.b16 %v583
  %v648 = vunpack.c.l.b16 %v584
  %v649 = vunpack.c.l.b16 %v585
  %v650 = vunpack.c.l.b16 %v586
  %v651 = vunpack.c.l.b16 %v587
  %v652 = vunpack.c.l.b16 %v588
  %v653 = vunpack.c.l.b16 %v589
  %v654 = vunpack.c.l.b16 %v590
  %v655 = vunpack.c.l.b16 %v591
  %v656 = vunpack.c.l.b16 %v592
  %v657 = vunpack.c.l.b16 %v593
  %v658 = vunpack.c.l.b16 %v594
  %v659 = vunpack.c.l.b16 %v595
  %v660 = vunpack.c.l.b16 %v596
  %v661 = vunpack.c.l.b16 %v597
  %v662 = vunpack.c.l.b16 %v598
  %v663 = vunpack.c.l.b16 %v599
  %v664 = vunpack.c.l.b16 %v600
  %v665 = vunpack.c.l.b16 %v601
  %v666 = vunpack.c.l.b16 %v602
  %v667 = vpack.c.b16 %v636, %v635
  %v668 = vpack.c.b16 %v638, %v637
  %v669 = vpack.c.b16 %v640, %v639
  %v670 = vpack.c.b16 %v642, %v641
  %v671 = vpack.c.b16 %v644, %v643
  %v672 = vpack.c.b16 %v646, %v645
  %v673 = vpack.c.b16 %v648, %v647
  %v674 = vpack.c.b16 %v650, %v649
  %v675 = vpack.c.b16 %v652, %v651
  %v676 = vpack.c.b16 %v654, %v653
  %v677 = vpack.c.b16 %v656, %v655
  %v678 = vpack.c.b16 %v658, %v657
  %v679 = vpack.c.b16 %v660, %v659
  %v680 = vpack.c.b16 %v662, %v661
  %v681 = vpack.c.b16 %v664, %v663
  %v682 = vpack.c.b16 %v666, %v665
  %699 = vmatprep.subr.bf16.mxu0 0
  %700 = vmatpush1.bf16.msra.mxu0 %v674
  %701 = vmatprep.subr.bf16.mxu0 0
  %702 = vmatpush1.bf16.msra.mxu0 %v673
  %703 = vmatprep.subr.bf16.mxu0 0
  %704 = vmatpush1.bf16.msra.mxu0 %v672
  %705 = vmatprep.subr.bf16.mxu0 0
  %706 = vmatpush1.bf16.msra.mxu0 %v671
  %707 = vmatprep.subr.bf16.mxu0 0
  %708 = vmatpush1.bf16.msra.mxu0 %v670
  %709 = vmatprep.subr.bf16.mxu0 0
  %710 = vmatpush1.bf16.msra.mxu0 %v669
  %711 = vmatprep.subr.bf16.mxu0 0
  %712 = vmatpush1.bf16.msra.mxu0 %v668
  %713 = vmatprep.subr.bf16.mxu0 0
  %714 = vmatpush1.bf16.msra.mxu0 %v667
  %715 = vmatprep.subr.bf16.mxu0 0
  %716 = vmatpush2.bf16.msra.mxu0 %v682
  %717 = vmatprep.subr.bf16.mxu0 0
  %718 = vmatpush2.bf16.msra.mxu0 %v681
  %719 = vmatprep.subr.bf16.mxu0 0
  %720 = vmatpush2.bf16.msra.mxu0 %v680
  %721 = vmatprep.subr.bf16.mxu0 0
  %722 = vmatpush2.bf16.msra.mxu0 %v679
  %723 = vmatprep.subr.bf16.mxu0 0
  %724 = vmatpush2.bf16.msra.mxu0 %v678
  %725 = vmatprep.subr.bf16.mxu0 0
  %726 = vmatpush2.bf16.msra.mxu0 %v677
  %727 = vmatprep.subr.bf16.mxu0 0
  %728 = vmatpush2.bf16.msra.mxu0 %v676
  %729 = vmatprep.subr.bf16.mxu0 0
  %730 = vmatpush2.bf16.msra.mxu0 %v675
  %731 = vmatprep.mubr.bf16.mxu0 %v570
  %732 = vmatmul.mubr.bf16.gmra.mxu0 %v569
  %v733 = vpop.f32.mrf.mxu0
  %v734 = vadd.f32 0.0, %v733
  %v735 = vpop.f32.mrf.mxu0
  %v736 = vpop.f32.mrf.mxu0
  %v737 = vpop.f32.mrf.mxu0
  %738 = vdwg.mxu0
  %v739 = vadd.f32 %v559, %v734
  %740 = vset.pattern.permute.xlu0 4
  %741 = vperm.xlu0 %740, %v18
  %v742 = vpop.permute.xlu0 %741
  %vm743 = vcmp.eq.s32.totalorder %v20, %v742
  %vm744 = vcmp.eq.s32.totalorder %v21, %v742
  %v745 = vsel %vm743, 1, 0
  %v746 = vsel %vm744, 1, 0
  %v747 = vcvt.s32.f32 %v745
  %v748 = vcvt.s32.f32 %v746
  %v749 = vpack.c.bf16 %v747, %v747
  %v750 = vpack.c.bf16 %v748, %v748
  %v751 = vld [vmem:[%s1 + $0x200] sm:$0xf]
  %v752 = vld [vmem:[%s1 + $0x204] sm:$0xf]
  %v753 = vld [vmem:[%s1 + $0x208] sm:$0xf]
  %v754 = vld [vmem:[%s1 + $0x20c] sm:$0xf]
  %v755 = vld [vmem:[%s1 + $0x210] sm:$0xf]
  %v756 = vld [vmem:[%s1 + $0x214] sm:$0xf]
  %v757 = vld [vmem:[%s1 + $0x218] sm:$0xf]
  %v758 = vld [vmem:[%s1 + $0x21c] sm:$0xf]
  %v759 = vld [vmem:[%s1 + $0x220] sm:$0xf]
  %v760 = vld [vmem:[%s1 + $0x224] sm:$0xf]
  %v761 = vld [vmem:[%s1 + $0x228] sm:$0xf]
  %v762 = vld [vmem:[%s1 + $0x22c] sm:$0xf]
  %v763 = vld [vmem:[%s1 + $0x230] sm:$0xf]
  %v764 = vld [vmem:[%s1 + $0x234] sm:$0xf]
  %v765 = vld [vmem:[%s1 + $0x238] sm:$0xf]
  %v766 = vld [vmem:[%s1 + $0x23c] sm:$0xf]
  %v767 = vld [vmem:[%s1 + $0x240] sm:$0xf]
  %v768 = vld [vmem:[%s1 + $0x244] sm:$0xf]
  %v769 = vld [vmem:[%s1 + $0x248] sm:$0xf]
  %v770 = vld [vmem:[%s1 + $0x24c] sm:$0xf]
  %v771 = vld [vmem:[%s1 + $0x250] sm:$0xf]
  %v772 = vld [vmem:[%s1 + $0x254] sm:$0xf]
  %v773 = vld [vmem:[%s1 + $0x258] sm:$0xf]
  %v774 = vld [vmem:[%s1 + $0x25c] sm:$0xf]
  %v775 = vld [vmem:[%s1 + $0x260] sm:$0xf]
  %v776 = vld [vmem:[%s1 + $0x264] sm:$0xf]
  %v777 = vld [vmem:[%s1 + $0x268] sm:$0xf]
  %v778 = vld [vmem:[%s1 + $0x26c] sm:$0xf]
  %v779 = vld [vmem:[%s1 + $0x270] sm:$0xf]
  %v780 = vld [vmem:[%s1 + $0x274] sm:$0xf]
  %v781 = vld [vmem:[%s1 + $0x278] sm:$0xf]
  %v782 = vld [vmem:[%s1 + $0x27c] sm:$0xf]
  %v815 = vunpack.c.l.b16 %v751
  %v816 = vunpack.c.l.b16 %v752
  %v817 = vunpack.c.l.b16 %v753
  %v818 = vunpack.c.l.b16 %v754
  %v819 = vunpack.c.l.b16 %v755
  %v820 = vunpack.c.l.b16 %v756
  %v821 = vunpack.c.l.b16 %v757
  %v822 = vunpack.c.l.b16 %v758
  %v823 = vunpack.c.l.b16 %v759
  %v824 = vunpack.c.l.b16 %v760
  %v825 = vunpack.c.l.b16 %v761
  %v826 = vunpack.c.l.b16 %v762
  %v827 = vunpack.c.l.b16 %v763
  %v828 = vunpack.c.l.b16 %v764
  %v829 = vunpack.c.l.b16 %v765
  %v830 = vunpack.c.l.b16 %v766
  %v831 = vunpack.c.l.b16 %v767
  %v832 = vunpack.c.l.b16 %v768
  %v833 = vunpack.c.l.b16 %v769
  %v834 = vunpack.c.l.b16 %v770
  %v835 = vunpack.c.l.b16 %v771
  %v836 = vunpack.c.l.b16 %v772
  %v837 = vunpack.c.l.b16 %v773
  %v838 = vunpack.c.l.b16 %v774
  %v839 = vunpack.c.l.b16 %v775
  %v840 = vunpack.c.l.b16 %v776
  %v841 = vunpack.c.l.b16 %v777
  %v842 = vunpack.c.l.b16 %v778
  %v843 = vunpack.c.l.b16 %v779
  %v844 = vunpack.c.l.b16 %v780
  %v845 = vunpack.c.l.b16 %v781
  %v846 = vunpack.c.l.b16 %v782
  %v847 = vpack.c.b16 %v816, %v815
  %v848 = vpack.c.b16 %v818, %v817
  %v849 = vpack.c.b16 %v820, %v819
  %v850 = vpack.c.b16 %v822, %v821
  %v851 = vpack.c.b16 %v824, %v823
  %v852 = vpack.c.b16 %v826, %v825
  %v853 = vpack.c.b16 %v828, %v827
  %v854 = vpack.c.b16 %v830, %v829
  %v855 = vpack.c.b16 %v832, %v831
  %v856 = vpack.c.b16 %v834, %v833
  %v857 = vpack.c.b16 %v836, %v835
  %v858 = vpack.c.b16 %v838, %v837
  %v859 = vpack.c.b16 %v840, %v839
  %v860 = vpack.c.b16 %v842, %v841
  %v861 = vpack.c.b16 %v844, %v843
  %v862 = vpack.c.b16 %v846, %v845
  %879 = vmatprep.subr.bf16.mxu0 0
  %880 = vmatpush1.bf16.msra.mxu0 %v854
  %881 = vmatprep.subr.bf16.mxu0 0
  %882 = vmatpush1.bf16.msra.mxu0 %v853
  %883 = vmatprep.subr.bf16.mxu0 0
  %884 = vmatpush1.bf16.msra.mxu0 %v852
  %885 = vmatprep.subr.bf16.mxu0 0
  %886 = vmatpush1.bf16.msra.mxu0 %v851
  %887 = vmatprep.subr.bf16.mxu0 0
  %888 = vmatpush1.bf16.msra.mxu0 %v850
  %889 = vmatprep.subr.bf16.mxu0 0
  %890 = vmatpush1.bf16.msra.mxu0 %v849
  %891 = vmatprep.subr.bf16.mxu0 0
  %892 = vmatpush1.bf16.msra.mxu0 %v848
  %893 = vmatprep.subr.bf16.mxu0 0
  %894 = vmatpush1.bf16.msra.mxu0 %v847
  %895 = vmatprep.subr.bf16.mxu0 0
  %896 = vmatpush2.bf16.msra.mxu0 %v862
  %897 = vmatprep.subr.bf16.mxu0 0
  %898 = vmatpush2.bf16.msra.mxu0 %v861
  %899 = vmatprep.subr.bf16.mxu0 0
  %900 = vmatpush2.bf16.msra.mxu0 %v860
  %901 = vmatprep.subr.bf16.mxu0 0
  %902 = vmatpush2.bf16.msra.mxu0 %v859
  %903 = vmatprep.subr.bf16.mxu0 0
  %904 = vmatpush2.bf16.msra.mxu0 %v858
  %905 = vmatprep.subr.bf16.mxu0 0
  %906 = vmatpush2.bf16.msra.mxu0 %v857
  %907 = vmatprep.subr.bf16.mxu0 0
  %908 = vmatpush2.bf16.msra.mxu0 %v856
  %909 = vmatprep.subr.bf16.mxu0 0
  %910 = vmatpush2.bf16.msra.mxu0 %v855
  %911 = vmatprep.mubr.bf16.mxu0 %v750
  %912 = vmatmul.mubr.bf16.gmra.mxu0 %v749
  %v913 = vpop.f32.mrf.mxu0
  %v914 = vadd.f32 0.0, %v913
  %v915 = vpop.f32.mrf.mxu0
  %v916 = vpop.f32.mrf.mxu0
  %v917 = vpop.f32.mrf.mxu0
  %918 = vdwg.mxu0
  %v919 = vadd.f32 %v739, %v914
  %920 = vset.pattern.permute.xlu0 5
  %921 = vperm.xlu0 %920, %v18
  %v922 = vpop.permute.xlu0 %921
  %vm923 = vcmp.eq.s32.totalorder %v20, %v922
  %vm924 = vcmp.eq.s32.totalorder %v21, %v922
  %v925 = vsel %vm923, 1, 0
  %v926 = vsel %vm924, 1, 0
  %v927 = vcvt.s32.f32 %v925
  %v928 = vcvt.s32.f32 %v926
  %v929 = vpack.c.bf16 %v927, %v927
  %v930 = vpack.c.bf16 %v928, %v928
  %v931 = vld [vmem:[%s1 + $0x280] sm:$0xf]
  %v932 = vld [vmem:[%s1 + $0x284] sm:$0xf]
  %v933 = vld [vmem:[%s1 + $0x288] sm:$0xf]
  %v934 = vld [vmem:[%s1 + $0x28c] sm:$0xf]
  %v935 = vld [vmem:[%s1 + $0x290] sm:$0xf]
  %v936 = vld [vmem:[%s1 + $0x294] sm:$0xf]
  %v937 = vld [vmem:[%s1 + $0x298] sm:$0xf]
  %v938 = vld [vmem:[%s1 + $0x29c] sm:$0xf]
  %v939 = vld [vmem:[%s1 + $0x2a0] sm:$0xf]
  %v940 = vld [vmem:[%s1 + $0x2a4] sm:$0xf]
  %v941 = vld [vmem:[%s1 + $0x2a8] sm:$0xf]
  %v942 = vld [vmem:[%s1 + $0x2ac] sm:$0xf]
  %v943 = vld [vmem:[%s1 + $0x2b0] sm:$0xf]
  %v944 = vld [vmem:[%s1 + $0x2b4] sm:$0xf]
  %v945 = vld [vmem:[%s1 + $0x2b8] sm:$0xf]
  %v946 = vld [vmem:[%s1 + $0x2bc] sm:$0xf]
  %v947 = vld [vmem:[%s1 + $0x2c0] sm:$0xf]
  %v948 = vld [vmem:[%s1 + $0x2c4] sm:$0xf]
  %v949 = vld [vmem:[%s1 + $0x2c8] sm:$0xf]
  %v950 = vld [vmem:[%s1 + $0x2cc] sm:$0xf]
  %v951 = vld [vmem:[%s1 + $0x2d0] sm:$0xf]
  %v952 = vld [vmem:[%s1 + $0x2d4] sm:$0xf]
  %v953 = vld [vmem:[%s1 + $0x2d8] sm:$0xf]
  %v954 = vld [vmem:[%s1 + $0x2dc] sm:$0xf]
  %v955 = vld [vmem:[%s1 + $0x2e0] sm:$0xf]
  %v956 = vld [vmem:[%s1 + $0x2e4] sm:$0xf]
  %v957 = vld [vmem:[%s1 + $0x2e8] sm:$0xf]
  %v958 = vld [vmem:[%s1 + $0x2ec] sm:$0xf]
  %v959 = vld [vmem:[%s1 + $0x2f0] sm:$0xf]
  %v960 = vld [vmem:[%s1 + $0x2f4] sm:$0xf]
  %v961 = vld [vmem:[%s1 + $0x2f8] sm:$0xf]
  %v962 = vld [vmem:[%s1 + $0x2fc] sm:$0xf]
  %v995 = vunpack.c.l.b16 %v931
  %v996 = vunpack.c.l.b16 %v932
  %v997 = vunpack.c.l.b16 %v933
  %v998 = vunpack.c.l.b16 %v934
  %v999 = vunpack.c.l.b16 %v935
  %v1000 = vunpack.c.l.b16 %v936
  %v1001 = vunpack.c.l.b16 %v937
  %v1002 = vunpack.c.l.b16 %v938
  %v1003 = vunpack.c.l.b16 %v939
  %v1004 = vunpack.c.l.b16 %v940
  %v1005 = vunpack.c.l.b16 %v941
  %v1006 = vunpack.c.l.b16 %v942
  %v1007 = vunpack.c.l.b16 %v943
  %v1008 = vunpack.c.l.b16 %v944
  %v1009 = vunpack.c.l.b16 %v945
  %v1010 = vunpack.c.l.b16 %v946
  %v1011 = vunpack.c.l.b16 %v947
  %v1012 = vunpack.c.l.b16 %v948
  %v1013 = vunpack.c.l.b16 %v949
  %v1014 = vunpack.c.l.b16 %v950
  %v1015 = vunpack.c.l.b16 %v951
  %v1016 = vunpack.c.l.b16 %v952
  %v1017 = vunpack.c.l.b16 %v953
  %v1018 = vunpack.c.l.b16 %v954
  %v1019 = vunpack.c.l.b16 %v955
  %v1020 = vunpack.c.l.b16 %v956
  %v1021 = vunpack.c.l.b16 %v957
  %v1022 = vunpack.c.l.b16 %v958
  %v1023 = vunpack.c.l.b16 %v959
  %v1024 = vunpack.c.l.b16 %v960
  %v1025 = vunpack.c.l.b16 %v961
  %v1026 = vunpack.c.l.b16 %v962
  %v1027 = vpack.c.b16 %v996, %v995
  %v1028 = vpack.c.b16 %v998, %v997
  %v1029 = vpack.c.b16 %v1000, %v999
  %v1030 = vpack.c.b16 %v1002, %v1001
  %v1031 = vpack.c.b16 %v1004, %v1003
  %v1032 = vpack.c.b16 %v1006, %v1005
  %v1033 = vpack.c.b16 %v1008, %v1007
  %v1034 = vpack.c.b16 %v1010, %v1009
  %v1035 = vpack.c.b16 %v1012, %v1011
  %v1036 = vpack.c.b16 %v1014, %v1013
  %v1037 = vpack.c.b16 %v1016, %v1015
  %v1038 = vpack.c.b16 %v1018, %v1017
  %v1039 = vpack.c.b16 %v1020, %v1019
  %v1040 = vpack.c.b16 %v1022, %v1021
  %v1041 = vpack.c.b16 %v1024, %v1023
  %v1042 = vpack.c.b16 %v1026, %v1025
  %1059 = vmatprep.subr.bf16.mxu0 0
  %1060 = vmatpush1.bf16.msra.mxu0 %v1034
  %1061 = vmatprep.subr.bf16.mxu0 0
  %1062 = vmatpush1.bf16.msra.mxu0 %v1033
  %1063 = vmatprep.subr.bf16.mxu0 0
  %1064 = vmatpush1.bf16.msra.mxu0 %v1032
  %1065 = vmatprep.subr.bf16.mxu0 0
  %1066 = vmatpush1.bf16.msra.mxu0 %v1031
  %1067 = vmatprep.subr.bf16.mxu0 0
  %1068 = vmatpush1.bf16.msra.mxu0 %v1030
  %1069 = vmatprep.subr.bf16.mxu0 0
  %1070 = vmatpush1.bf16.msra.mxu0 %v1029
  %1071 = vmatprep.subr.bf16.mxu0 0
  %1072 = vmatpush1.bf16.msra.mxu0 %v1028
  %1073 = vmatprep.subr.bf16.mxu0 0
  %1074 = vmatpush1.bf16.msra.mxu0 %v1027
  %1075 = vmatprep.subr.bf16.mxu0 0
  %1076 = vmatpush2.bf16.msra.mxu0 %v1042
  %1077 = vmatprep.subr.bf16.mxu0 0
  %1078 = vmatpush2.bf16.msra.mxu0 %v1041
  %1079 = vmatprep.subr.bf16.mxu0 0
  %1080 = vmatpush2.bf16.msra.mxu0 %v1040
  %1081 = vmatprep.subr.bf16.mxu0 0
  %1082 = vmatpush2.bf16.msra.mxu0 %v1039
  %1083 = vmatprep.subr.bf16.mxu0 0
  %1084 = vmatpush2.bf16.msra.mxu0 %v1038
  %1085 = vmatprep.subr.bf16.mxu0 0
  %1086 = vmatpush2.bf16.msra.mxu0 %v1037
  %1087 = vmatprep.subr.bf16.mxu0 0
  %1088 = vmatpush2.bf16.msra.mxu0 %v1036
  %1089 = vmatprep.subr.bf16.mxu0 0
  %1090 = vmatpush2.bf16.msra.mxu0 %v1035
  %1091 = vmatprep.mubr.bf16.mxu0 %v930
  %1092 = vmatmul.mubr.bf16.gmra.mxu0 %v929
  %v1093 = vpop.f32.mrf.mxu0
  %v1094 = vadd.f32 0.0, %v1093
  %v1095 = vpop.f32.mrf.mxu0
  %v1096 = vpop.f32.mrf.mxu0
  %v1097 = vpop.f32.mrf.mxu0
  %1098 = vdwg.mxu0
  %v1099 = vadd.f32 %v919, %v1094
  %1100 = vset.pattern.permute.xlu0 6
  %1101 = vperm.xlu0 %1100, %v18
  %v1102 = vpop.permute.xlu0 %1101
  %vm1103 = vcmp.eq.s32.totalorder %v20, %v1102
  %vm1104 = vcmp.eq.s32.totalorder %v21, %v1102
  %v1105 = vsel %vm1103, 1, 0
  %v1106 = vsel %vm1104, 1, 0
  %v1107 = vcvt.s32.f32 %v1105
  %v1108 = vcvt.s32.f32 %v1106
  %v1109 = vpack.c.bf16 %v1107, %v1107
  %v1110 = vpack.c.bf16 %v1108, %v1108
  %v1111 = vld [vmem:[%s1 + $0x300] sm:$0xf]
  %v1112 = vld [vmem:[%s1 + $0x304] sm:$0xf]
  %v1113 = vld [vmem:[%s1 + $0x308] sm:$0xf]
  %v1114 = vld [vmem:[%s1 + $0x30c] sm:$0xf]
  %v1115 = vld [vmem:[%s1 + $0x310] sm:$0xf]
  %v1116 = vld [vmem:[%s1 + $0x314] sm:$0xf]
  %v1117 = vld [vmem:[%s1 + $0x318] sm:$0xf]
  %v1118 = vld [vmem:[%s1 + $0x31c] sm:$0xf]
  %v1119 = vld [vmem:[%s1 + $0x320] sm:$0xf]
  %v1120 = vld [vmem:[%s1 + $0x324] sm:$0xf]
  %v1121 = vld [vmem:[%s1 + $0x328] sm:$0xf]
  %v1122 = vld [vmem:[%s1 + $0x32c] sm:$0xf]
  %v1123 = vld [vmem:[%s1 + $0x330] sm:$0xf]
  %v1124 = vld [vmem:[%s1 + $0x334] sm:$0xf]
  %v1125 = vld [vmem:[%s1 + $0x338] sm:$0xf]
  %v1126 = vld [vmem:[%s1 + $0x33c] sm:$0xf]
  %v1127 = vld [vmem:[%s1 + $0x340] sm:$0xf]
  %v1128 = vld [vmem:[%s1 + $0x344] sm:$0xf]
  %v1129 = vld [vmem:[%s1 + $0x348] sm:$0xf]
  %v1130 = vld [vmem:[%s1 + $0x34c] sm:$0xf]
  %v1131 = vld [vmem:[%s1 + $0x350] sm:$0xf]
  %v1132 = vld [vmem:[%s1 + $0x354] sm:$0xf]
  %v1133 = vld [vmem:[%s1 + $0x358] sm:$0xf]
  %v1134 = vld [vmem:[%s1 + $0x35c] sm:$0xf]
  %v1135 = vld [vmem:[%s1 + $0x360] sm:$0xf]
  %v1136 = vld [vmem:[%s1 + $0x364] sm:$0xf]
  %v1137 = vld [vmem:[%s1 + $0x368] sm:$0xf]
  %v1138 = vld [vmem:[%s1 + $0x36c] sm:$0xf]
  %v1139 = vld [vmem:[%s1 + $0x370] sm:$0xf]
  %v1140 = vld [vmem:[%s1 + $0x374] sm:$0xf]
  %v1141 = vld [vmem:[%s1 + $0x378] sm:$0xf]
  %v1142 = vld [vmem:[%s1 + $0x37c] sm:$0xf]
  %v1175 = vunpack.c.l.b16 %v1111
  %v1176 = vunpack.c.l.b16 %v1112
  %v1177 = vunpack.c.l.b16 %v1113
  %v1178 = vunpack.c.l.b16 %v1114
  %v1179 = vunpack.c.l.b16 %v1115
  %v1180 = vunpack.c.l.b16 %v1116
  %v1181 = vunpack.c.l.b16 %v1117
  %v1182 = vunpack.c.l.b16 %v1118
  %v1183 = vunpack.c.l.b16 %v1119
  %v1184 = vunpack.c.l.b16 %v1120
  %v1185 = vunpack.c.l.b16 %v1121
  %v1186 = vunpack.c.l.b16 %v1122
  %v1187 = vunpack.c.l.b16 %v1123
  %v1188 = vunpack.c.l.b16 %v1124
  %v1189 = vunpack.c.l.b16 %v1125
  %v1190 = vunpack.c.l.b16 %v1126
  %v1191 = vunpack.c.l.b16 %v1127
  %v1192 = vunpack.c.l.b16 %v1128
  %v1193 = vunpack.c.l.b16 %v1129
  %v1194 = vunpack.c.l.b16 %v1130
  %v1195 = vunpack.c.l.b16 %v1131
  %v1196 = vunpack.c.l.b16 %v1132
  %v1197 = vunpack.c.l.b16 %v1133
  %v1198 = vunpack.c.l.b16 %v1134
  %v1199 = vunpack.c.l.b16 %v1135
  %v1200 = vunpack.c.l.b16 %v1136
  %v1201 = vunpack.c.l.b16 %v1137
  %v1202 = vunpack.c.l.b16 %v1138
  %v1203 = vunpack.c.l.b16 %v1139
  %v1204 = vunpack.c.l.b16 %v1140
  %v1205 = vunpack.c.l.b16 %v1141
  %v1206 = vunpack.c.l.b16 %v1142
  %v1207 = vpack.c.b16 %v1176, %v1175
  %v1208 = vpack.c.b16 %v1178, %v1177
  %v1209 = vpack.c.b16 %v1180, %v1179
  %v1210 = vpack.c.b16 %v1182, %v1181
  %v1211 = vpack.c.b16 %v1184, %v1183
  %v1212 = vpack.c.b16 %v1186, %v1185
  %v1213 = vpack.c.b16 %v1188, %v1187
  %v1214 = vpack.c.b16 %v1190, %v1189
  %v1215 = vpack.c.b16 %v1192, %v1191
  %v1216 = vpack.c.b16 %v1194, %v1193
  %v1217 = vpack.c.b16 %v1196, %v1195
  %v1218 = vpack.c.b16 %v1198, %v1197
  %v1219 = vpack.c.b16 %v1200, %v1199
  %v1220 = vpack.c.b16 %v1202, %v1201
  %v1221 = vpack.c.b16 %v1204, %v1203
  %v1222 = vpack.c.b16 %v1206, %v1205
  %1239 = vmatprep.subr.bf16.mxu0 0
  %1240 = vmatpush1.bf16.msra.mxu0 %v1214
  %1241 = vmatprep.subr.bf16.mxu0 0
  %1242 = vmatpush1.bf16.msra.mxu0 %v1213
  %1243 = vmatprep.subr.bf16.mxu0 0
  %1244 = vmatpush1.bf16.msra.mxu0 %v1212
  %1245 = vmatprep.subr.bf16.mxu0 0
  %1246 = vmatpush1.bf16.msra.mxu0 %v1211
  %1247 = vmatprep.subr.bf16.mxu0 0
  %1248 = vmatpush1.bf16.msra.mxu0 %v1210
  %1249 = vmatprep.subr.bf16.mxu0 0
  %1250 = vmatpush1.bf16.msra.mxu0 %v1209
  %1251 = vmatprep.subr.bf16.mxu0 0
  %1252 = vmatpush1.bf16.msra.mxu0 %v1208
  %1253 = vmatprep.subr.bf16.mxu0 0
  %1254 = vmatpush1.bf16.msra.mxu0 %v1207
  %1255 = vmatprep.subr.bf16.mxu0 0
  %1256 = vmatpush2.bf16.msra.mxu0 %v1222
  %1257 = vmatprep.subr.bf16.mxu0 0
  %1258 = vmatpush2.bf16.msra.mxu0 %v1221
  %1259 = vmatprep.subr.bf16.mxu0 0
  %1260 = vmatpush2.bf16.msra.mxu0 %v1220
  %1261 = vmatprep.subr.bf16.mxu0 0
  %1262 = vmatpush2.bf16.msra.mxu0 %v1219
  %1263 = vmatprep.subr.bf16.mxu0 0
  %1264 = vmatpush2.bf16.msra.mxu0 %v1218
  %1265 = vmatprep.subr.bf16.mxu0 0
  %1266 = vmatpush2.bf16.msra.mxu0 %v1217
  %1267 = vmatprep.subr.bf16.mxu0 0
  %1268 = vmatpush2.bf16.msra.mxu0 %v1216
  %1269 = vmatprep.subr.bf16.mxu0 0
  %1270 = vmatpush2.bf16.msra.mxu0 %v1215
  %1271 = vmatprep.mubr.bf16.mxu0 %v1110
  %1272 = vmatmul.mubr.bf16.gmra.mxu0 %v1109
  %v1273 = vpop.f32.mrf.mxu0
  %v1274 = vadd.f32 0.0, %v1273
  %v1275 = vpop.f32.mrf.mxu0
  %v1276 = vpop.f32.mrf.mxu0
  %v1277 = vpop.f32.mrf.mxu0
  %1278 = vdwg.mxu0
  %v1279 = vadd.f32 %v1099, %v1274
  %1280 = vset.pattern.permute.xlu0 7
  %1281 = vperm.xlu0 %1280, %v18
  %v1282 = vpop.permute.xlu0 %1281
  %vm1283 = vcmp.eq.s32.totalorder %v20, %v1282
  %vm1284 = vcmp.eq.s32.totalorder %v21, %v1282
  %v1285 = vsel %vm1283, 1, 0
  %v1286 = vsel %vm1284, 1, 0
  %v1287 = vcvt.s32.f32 %v1285
  %v1288 = vcvt.s32.f32 %v1286
  %v1289 = vpack.c.bf16 %v1287, %v1287
  %v1290 = vpack.c.bf16 %v1288, %v1288
  %v1291 = vld [vmem:[%s1 + $0x380] sm:$0xf]
  %v1292 = vld [vmem:[%s1 + $0x384] sm:$0xf]
  %v1293 = vld [vmem:[%s1 + $0x388] sm:$0xf]
  %v1294 = vld [vmem:[%s1 + $0x38c] sm:$0xf]
  %v1295 = vld [vmem:[%s1 + $0x390] sm:$0xf]
  %v1296 = vld [vmem:[%s1 + $0x394] sm:$0xf]
  %v1297 = vld [vmem:[%s1 + $0x398] sm:$0xf]
  %v1298 = vld [vmem:[%s1 + $0x39c] sm:$0xf]
  %v1299 = vld [vmem:[%s1 + $0x3a0] sm:$0xf]
  %v1300 = vld [vmem:[%s1 + $0x3a4] sm:$0xf]
  %v1301 = vld [vmem:[%s1 + $0x3a8] sm:$0xf]
  %v1302 = vld [vmem:[%s1 + $0x3ac] sm:$0xf]
  %v1303 = vld [vmem:[%s1 + $0x3b0] sm:$0xf]
  %v1304 = vld [vmem:[%s1 + $0x3b4] sm:$0xf]
  %v1305 = vld [vmem:[%s1 + $0x3b8] sm:$0xf]
  %v1306 = vld [vmem:[%s1 + $0x3bc] sm:$0xf]
  %v1307 = vld [vmem:[%s1 + $0x3c0] sm:$0xf]
  %v1308 = vld [vmem:[%s1 + $0x3c4] sm:$0xf]
  %v1309 = vld [vmem:[%s1 + $0x3c8] sm:$0xf]
  %v1310 = vld [vmem:[%s1 + $0x3cc] sm:$0xf]
  %v1311 = vld [vmem:[%s1 + $0x3d0] sm:$0xf]
  %v1312 = vld [vmem:[%s1 + $0x3d4] sm:$0xf]
  %v1313 = vld [vmem:[%s1 + $0x3d8] sm:$0xf]
  %v1314 = vld [vmem:[%s1 + $0x3dc] sm:$0xf]
  %v1315 = vld [vmem:[%s1 + $0x3e0] sm:$0xf]
  %v1316 = vld [vmem:[%s1 + $0x3e4] sm:$0xf]
  %v1317 = vld [vmem:[%s1 + $0x3e8] sm:$0xf]
  %v1318 = vld [vmem:[%s1 + $0x3ec] sm:$0xf]
  %v1319 = vld [vmem:[%s1 + $0x3f0] sm:$0xf]
  %v1320 = vld [vmem:[%s1 + $0x3f4] sm:$0xf]
  %v1321 = vld [vmem:[%s1 + $0x3f8] sm:$0xf]
  %v1322 = vld [vmem:[%s1 + $0x3fc] sm:$0xf]
  %v1355 = vunpack.c.l.b16 %v1291
  %v1356 = vunpack.c.l.b16 %v1292
  %v1357 = vunpack.c.l.b16 %v1293
  %v1358 = vunpack.c.l.b16 %v1294
  %v1359 = vunpack.c.l.b16 %v1295
  %v1360 = vunpack.c.l.b16 %v1296
  %v1361 = vunpack.c.l.b16 %v1297
  %v1362 = vunpack.c.l.b16 %v1298
  %v1363 = vunpack.c.l.b16 %v1299
  %v1364 = vunpack.c.l.b16 %v1300
  %v1365 = vunpack.c.l.b16 %v1301
  %v1366 = vunpack.c.l.b16 %v1302
  %v1367 = vunpack.c.l.b16 %v1303
  %v1368 = vunpack.c.l.b16 %v1304
  %v1369 = vunpack.c.l.b16 %v1305
  %v1370 = vunpack.c.l.b16 %v1306
  %v1371 = vunpack.c.l.b16 %v1307
  %v1372 = vunpack.c.l.b16 %v1308
  %v1373 = vunpack.c.l.b16 %v1309
  %v1374 = vunpack.c.l.b16 %v1310
  %v1375 = vunpack.c.l.b16 %v1311
  %v1376 = vunpack.c.l.b16 %v1312
  %v1377 = vunpack.c.l.b16 %v1313
  %v1378 = vunpack.c.l.b16 %v1314
  %v1379 = vunpack.c.l.b16 %v1315
  %v1380 = vunpack.c.l.b16 %v1316
  %v1381 = vunpack.c.l.b16 %v1317
  %v1382 = vunpack.c.l.b16 %v1318
  %v1383 = vunpack.c.l.b16 %v1319
  %v1384 = vunpack.c.l.b16 %v1320
  %v1385 = vunpack.c.l.b16 %v1321
  %v1386 = vunpack.c.l.b16 %v1322
  %v1387 = vpack.c.b16 %v1356, %v1355
  %v1388 = vpack.c.b16 %v1358, %v1357
  %v1389 = vpack.c.b16 %v1360, %v1359
  %v1390 = vpack.c.b16 %v1362, %v1361
  %v1391 = vpack.c.b16 %v1364, %v1363
  %v1392 = vpack.c.b16 %v1366, %v1365
  %v1393 = vpack.c.b16 %v1368, %v1367
  %v1394 = vpack.c.b16 %v1370, %v1369
  %v1395 = vpack.c.b16 %v1372, %v1371
  %v1396 = vpack.c.b16 %v1374, %v1373
  %v1397 = vpack.c.b16 %v1376, %v1375
  %v1398 = vpack.c.b16 %v1378, %v1377
  %v1399 = vpack.c.b16 %v1380, %v1379
  %v1400 = vpack.c.b16 %v1382, %v1381
  %v1401 = vpack.c.b16 %v1384, %v1383
  %v1402 = vpack.c.b16 %v1386, %v1385
  %1419 = vmatprep.subr.bf16.mxu0 0
  %1420 = vmatpush1.bf16.msra.mxu0 %v1394
  %1421 = vmatprep.subr.bf16.mxu0 0
  %1422 = vmatpush1.bf16.msra.mxu0 %v1393
  %1423 = vmatprep.subr.bf16.mxu0 0
  %1424 = vmatpush1.bf16.msra.mxu0 %v1392
  %1425 = vmatprep.subr.bf16.mxu0 0
  %1426 = vmatpush1.bf16.msra.mxu0 %v1391
  %1427 = vmatprep.subr.bf16.mxu0 0
  %1428 = vmatpush1.bf16.msra.mxu0 %v1390
  %1429 = vmatprep.subr.bf16.mxu0 0
  %1430 = vmatpush1.bf16.msra.mxu0 %v1389
  %1431 = vmatprep.subr.bf16.mxu0 0
  %1432 = vmatpush1.bf16.msra.mxu0 %v1388
  %1433 = vmatprep.subr.bf16.mxu0 0
  %1434 = vmatpush1.bf16.msra.mxu0 %v1387
  %1435 = vmatprep.subr.bf16.mxu0 0
  %1436 = vmatpush2.bf16.msra.mxu0 %v1402
  %1437 = vmatprep.subr.bf16.mxu0 0
  %1438 = vmatpush2.bf16.msra.mxu0 %v1401
  %1439 = vmatprep.subr.bf16.mxu0 0
  %1440 = vmatpush2.bf16.msra.mxu0 %v1400
  %1441 = vmatprep.subr.bf16.mxu0 0
  %1442 = vmatpush2.bf16.msra.mxu0 %v1399
  %1443 = vmatprep.subr.bf16.mxu0 0
  %1444 = vmatpush2.bf16.msra.mxu0 %v1398
  %1445 = vmatprep.subr.bf16.mxu0 0
  %1446 = vmatpush2.bf16.msra.mxu0 %v1397
  %1447 = vmatprep.subr.bf16.mxu0 0
  %1448 = vmatpush2.bf16.msra.mxu0 %v1396
  %1449 = vmatprep.subr.bf16.mxu0 0
  %1450 = vmatpush2.bf16.msra.mxu0 %v1395
  %1451 = vmatprep.mubr.bf16.mxu0 %v1290
  %1452 = vmatmul.mubr.bf16.gmra.mxu0 %v1289
  %v1453 = vpop.f32.mrf.mxu0
  %v1454 = vadd.f32 0.0, %v1453
  %v1455 = vpop.f32.mrf.mxu0
  %v1456 = vpop.f32.mrf.mxu0
  %v1457 = vpop.f32.mrf.mxu0
  %1458 = vdwg.mxu0
  %v1459 = vadd.f32 %v1279, %v1454
  %1460 = vset.pattern.permute.xlu0 8
  %1461 = vperm.xlu0 %1460, %v18
  %v1462 = vpop.permute.xlu0 %1461
  %vm1463 = vcmp.eq.s32.totalorder %v20, %v1462
  %vm1464 = vcmp.eq.s32.totalorder %v21, %v1462
  %v1465 = vsel %vm1463, 1, 0
  %v1466 = vsel %vm1464, 1, 0
  %v1467 = vcvt.s32.f32 %v1465
  %v1468 = vcvt.s32.f32 %v1466
  %v1469 = vpack.c.bf16 %v1467, %v1467
  %v1470 = vpack.c.bf16 %v1468, %v1468
  %v1471 = vld [vmem:[%s1 + $0x400] sm:$0xf]
  %v1472 = vld [vmem:[%s1 + $0x404] sm:$0xf]
  %v1473 = vld [vmem:[%s1 + $0x408] sm:$0xf]
  %v1474 = vld [vmem:[%s1 + $0x40c] sm:$0xf]
  %v1475 = vld [vmem:[%s1 + $0x410] sm:$0xf]
  %v1476 = vld [vmem:[%s1 + $0x414] sm:$0xf]
  %v1477 = vld [vmem:[%s1 + $0x418] sm:$0xf]
  %v1478 = vld [vmem:[%s1 + $0x41c] sm:$0xf]
  %v1479 = vld [vmem:[%s1 + $0x420] sm:$0xf]
  %v1480 = vld [vmem:[%s1 + $0x424] sm:$0xf]
  %v1481 = vld [vmem:[%s1 + $0x428] sm:$0xf]
  %v1482 = vld [vmem:[%s1 + $0x42c] sm:$0xf]
  %v1483 = vld [vmem:[%s1 + $0x430] sm:$0xf]
  %v1484 = vld [vmem:[%s1 + $0x434] sm:$0xf]
  %v1485 = vld [vmem:[%s1 + $0x438] sm:$0xf]
  %v1486 = vld [vmem:[%s1 + $0x43c] sm:$0xf]
  %v1487 = vld [vmem:[%s1 + $0x440] sm:$0xf]
  %v1488 = vld [vmem:[%s1 + $0x444] sm:$0xf]
  %v1489 = vld [vmem:[%s1 + $0x448] sm:$0xf]
  %v1490 = vld [vmem:[%s1 + $0x44c] sm:$0xf]
  %v1491 = vld [vmem:[%s1 + $0x450] sm:$0xf]
  %v1492 = vld [vmem:[%s1 + $0x454] sm:$0xf]
  %v1493 = vld [vmem:[%s1 + $0x458] sm:$0xf]
  %v1494 = vld [vmem:[%s1 + $0x45c] sm:$0xf]
  %v1495 = vld [vmem:[%s1 + $0x460] sm:$0xf]
  %v1496 = vld [vmem:[%s1 + $0x464] sm:$0xf]
  %v1497 = vld [vmem:[%s1 + $0x468] sm:$0xf]
  %v1498 = vld [vmem:[%s1 + $0x46c] sm:$0xf]
  %v1499 = vld [vmem:[%s1 + $0x470] sm:$0xf]
  %v1500 = vld [vmem:[%s1 + $0x474] sm:$0xf]
  %v1501 = vld [vmem:[%s1 + $0x478] sm:$0xf]
  %v1502 = vld [vmem:[%s1 + $0x47c] sm:$0xf]
  %v1535 = vunpack.c.l.b16 %v1471
  %v1536 = vunpack.c.l.b16 %v1472
  %v1537 = vunpack.c.l.b16 %v1473
  %v1538 = vunpack.c.l.b16 %v1474
  %v1539 = vunpack.c.l.b16 %v1475
  %v1540 = vunpack.c.l.b16 %v1476
  %v1541 = vunpack.c.l.b16 %v1477
  %v1542 = vunpack.c.l.b16 %v1478
  %v1543 = vunpack.c.l.b16 %v1479
  %v1544 = vunpack.c.l.b16 %v1480
  %v1545 = vunpack.c.l.b16 %v1481
  %v1546 = vunpack.c.l.b16 %v1482
  %v1547 = vunpack.c.l.b16 %v1483
  %v1548 = vunpack.c.l.b16 %v1484
  %v1549 = vunpack.c.l.b16 %v1485
  %v1550 = vunpack.c.l.b16 %v1486
  %v1551 = vunpack.c.l.b16 %v1487
  %v1552 = vunpack.c.l.b16 %v1488
  %v1553 = vunpack.c.l.b16 %v1489
  %v1554 = vunpack.c.l.b16 %v1490
  %v1555 = vunpack.c.l.b16 %v1491
  %v1556 = vunpack.c.l.b16 %v1492
  %v1557 = vunpack.c.l.b16 %v1493
  %v1558 = vunpack.c.l.b16 %v1494
  %v1559 = vunpack.c.l.b16 %v1495
  %v1560 = vunpack.c.l.b16 %v1496
  %v1561 = vunpack.c.l.b16 %v1497
  %v1562 = vunpack.c.l.b16 %v1498
  %v1563 = vunpack.c.l.b16 %v1499
  %v1564 = vunpack.c.l.b16 %v1500
  %v1565 = vunpack.c.l.b16 %v1501
  %v1566 = vunpack.c.l.b16 %v1502
  %v1567 = vpack.c.b16 %v1536, %v1535
  %v1568 = vpack.c.b16 %v1538, %v1537
  %v1569 = vpack.c.b16 %v1540, %v1539
  %v1570 = vpack.c.b16 %v1542, %v1541
  %v1571 = vpack.c.b16 %v1544, %v1543
  %v1572 = vpack.c.b16 %v1546, %v1545
  %v1573 = vpack.c.b16 %v1548, %v1547
  %v1574 = vpack.c.b16 %v1550, %v1549
  %v1575 = vpack.c.b16 %v1552, %v1551
  %v1576 = vpack.c.b16 %v1554, %v1553
  %v1577 = vpack.c.b16 %v1556, %v1555
  %v1578 = vpack.c.b16 %v1558, %v1557
  %v1579 = vpack.c.b16 %v1560, %v1559
  %v1580 = vpack.c.b16 %v1562, %v1561
  %v1581 = vpack.c.b16 %v1564, %v1563
  %v1582 = vpack.c.b16 %v1566, %v1565
  %1599 = vmatprep.subr.bf16.mxu0 0
  %1600 = vmatpush1.bf16.msra.mxu0 %v1574
  %1601 = vmatprep.subr.bf16.mxu0 0
  %1602 = vmatpush1.bf16.msra.mxu0 %v1573
  %1603 = vmatprep.subr.bf16.mxu0 0
  %1604 = vmatpush1.bf16.msra.mxu0 %v1572
  %1605 = vmatprep.subr.bf16.mxu0 0
  %1606 = vmatpush1.bf16.msra.mxu0 %v1571
  %1607 = vmatprep.subr.bf16.mxu0 0
  %1608 = vmatpush1.bf16.msra.mxu0 %v1570
  %1609 = vmatprep.subr.bf16.mxu0 0
  %1610 = vmatpush1.bf16.msra.mxu0 %v1569
  %1611 = vmatprep.subr.bf16.mxu0 0
  %1612 = vmatpush1.bf16.msra.mxu0 %v1568
  %1613 = vmatprep.subr.bf16.mxu0 0
  %1614 = vmatpush1.bf16.msra.mxu0 %v1567
  %1615 = vmatprep.subr.bf16.mxu0 0
  %1616 = vmatpush2.bf16.msra.mxu0 %v1582
  %1617 = vmatprep.subr.bf16.mxu0 0
  %1618 = vmatpush2.bf16.msra.mxu0 %v1581
  %1619 = vmatprep.subr.bf16.mxu0 0
  %1620 = vmatpush2.bf16.msra.mxu0 %v1580
  %1621 = vmatprep.subr.bf16.mxu0 0
  %1622 = vmatpush2.bf16.msra.mxu0 %v1579
  %1623 = vmatprep.subr.bf16.mxu0 0
  %1624 = vmatpush2.bf16.msra.mxu0 %v1578
  %1625 = vmatprep.subr.bf16.mxu0 0
  %1626 = vmatpush2.bf16.msra.mxu0 %v1577
  %1627 = vmatprep.subr.bf16.mxu0 0
  %1628 = vmatpush2.bf16.msra.mxu0 %v1576
  %1629 = vmatprep.subr.bf16.mxu0 0
  %1630 = vmatpush2.bf16.msra.mxu0 %v1575
  %1631 = vmatprep.mubr.bf16.mxu0 %v1470
  %1632 = vmatmul.mubr.bf16.gmra.mxu0 %v1469
  %v1633 = vpop.f32.mrf.mxu0
  %v1634 = vadd.f32 0.0, %v1633
  %v1635 = vpop.f32.mrf.mxu0
  %v1636 = vpop.f32.mrf.mxu0
  %v1637 = vpop.f32.mrf.mxu0
  %1638 = vdwg.mxu0
  %v1639 = vadd.f32 %v1459, %v1634
  %1640 = vset.pattern.permute.xlu0 9
  %1641 = vperm.xlu0 %1640, %v18
  %v1642 = vpop.permute.xlu0 %1641
  %vm1643 = vcmp.eq.s32.totalorder %v20, %v1642
  %vm1644 = vcmp.eq.s32.totalorder %v21, %v1642
  %v1645 = vsel %vm1643, 1, 0
  %v1646 = vsel %vm1644, 1, 0
  %v1647 = vcvt.s32.f32 %v1645
  %v1648 = vcvt.s32.f32 %v1646
  %v1649 = vpack.c.bf16 %v1647, %v1647
  %v1650 = vpack.c.bf16 %v1648, %v1648
  %v1651 = vld [vmem:[%s1 + $0x480] sm:$0xf]
  %v1652 = vld [vmem:[%s1 + $0x484] sm:$0xf]
  %v1653 = vld [vmem:[%s1 + $0x488] sm:$0xf]
  %v1654 = vld [vmem:[%s1 + $0x48c] sm:$0xf]
  %v1655 = vld [vmem:[%s1 + $0x490] sm:$0xf]
  %v1656 = vld [vmem:[%s1 + $0x494] sm:$0xf]
  %v1657 = vld [vmem:[%s1 + $0x498] sm:$0xf]
  %v1658 = vld [vmem:[%s1 + $0x49c] sm:$0xf]
  %v1659 = vld [vmem:[%s1 + $0x4a0] sm:$0xf]
  %v1660 = vld [vmem:[%s1 + $0x4a4] sm:$0xf]
  %v1661 = vld [vmem:[%s1 + $0x4a8] sm:$0xf]
  %v1662 = vld [vmem:[%s1 + $0x4ac] sm:$0xf]
  %v1663 = vld [vmem:[%s1 + $0x4b0] sm:$0xf]
  %v1664 = vld [vmem:[%s1 + $0x4b4] sm:$0xf]
  %v1665 = vld [vmem:[%s1 + $0x4b8] sm:$0xf]
  %v1666 = vld [vmem:[%s1 + $0x4bc] sm:$0xf]
  %v1667 = vld [vmem:[%s1 + $0x4c0] sm:$0xf]
  %v1668 = vld [vmem:[%s1 + $0x4c4] sm:$0xf]
  %v1669 = vld [vmem:[%s1 + $0x4c8] sm:$0xf]
  %v1670 = vld [vmem:[%s1 + $0x4cc] sm:$0xf]
  %v1671 = vld [vmem:[%s1 + $0x4d0] sm:$0xf]
  %v1672 = vld [vmem:[%s1 + $0x4d4] sm:$0xf]
  %v1673 = vld [vmem:[%s1 + $0x4d8] sm:$0xf]
  %v1674 = vld [vmem:[%s1 + $0x4dc] sm:$0xf]
  %v1675 = vld [vmem:[%s1 + $0x4e0] sm:$0xf]
  %v1676 = vld [vmem:[%s1 + $0x4e4] sm:$0xf]
  %v1677 = vld [vmem:[%s1 + $0x4e8] sm:$0xf]
  %v1678 = vld [vmem:[%s1 + $0x4ec] sm:$0xf]
  %v1679 = vld [vmem:[%s1 + $0x4f0] sm:$0xf]
  %v1680 = vld [vmem:[%s1 + $0x4f4] sm:$0xf]
  %v1681 = vld [vmem:[%s1 + $0x4f8] sm:$0xf]
  %v1682 = vld [vmem:[%s1 + $0x4fc] sm:$0xf]
  %v1715 = vunpack.c.l.b16 %v1651
  %v1716 = vunpack.c.l.b16 %v1652
  %v1717 = vunpack.c.l.b16 %v1653
  %v1718 = vunpack.c.l.b16 %v1654
  %v1719 = vunpack.c.l.b16 %v1655
  %v1720 = vunpack.c.l.b16 %v1656
  %v1721 = vunpack.c.l.b16 %v1657
  %v1722 = vunpack.c.l.b16 %v1658
  %v1723 = vunpack.c.l.b16 %v1659
  %v1724 = vunpack.c.l.b16 %v1660
  %v1725 = vunpack.c.l.b16 %v1661
  %v1726 = vunpack.c.l.b16 %v1662
  %v1727 = vunpack.c.l.b16 %v1663
  %v1728 = vunpack.c.l.b16 %v1664
  %v1729 = vunpack.c.l.b16 %v1665
  %v1730 = vunpack.c.l.b16 %v1666
  %v1731 = vunpack.c.l.b16 %v1667
  %v1732 = vunpack.c.l.b16 %v1668
  %v1733 = vunpack.c.l.b16 %v1669
  %v1734 = vunpack.c.l.b16 %v1670
  %v1735 = vunpack.c.l.b16 %v1671
  %v1736 = vunpack.c.l.b16 %v1672
  %v1737 = vunpack.c.l.b16 %v1673
  %v1738 = vunpack.c.l.b16 %v1674
  %v1739 = vunpack.c.l.b16 %v1675
  %v1740 = vunpack.c.l.b16 %v1676
  %v1741 = vunpack.c.l.b16 %v1677
  %v1742 = vunpack.c.l.b16 %v1678
  %v1743 = vunpack.c.l.b16 %v1679
  %v1744 = vunpack.c.l.b16 %v1680
  %v1745 = vunpack.c.l.b16 %v1681
  %v1746 = vunpack.c.l.b16 %v1682
  %v1747 = vpack.c.b16 %v1716, %v1715
  %v1748 = vpack.c.b16 %v1718, %v1717
  %v1749 = vpack.c.b16 %v1720, %v1719
  %v1750 = vpack.c.b16 %v1722, %v1721
  %v1751 = vpack.c.b16 %v1724, %v1723
  %v1752 = vpack.c.b16 %v1726, %v1725
  %v1753 = vpack.c.b16 %v1728, %v1727
  %v1754 = vpack.c.b16 %v1730, %v1729
  %v1755 = vpack.c.b16 %v1732, %v1731
  %v1756 = vpack.c.b16 %v1734, %v1733
  %v1757 = vpack.c.b16 %v1736, %v1735
  %v1758 = vpack.c.b16 %v1738, %v1737
  %v1759 = vpack.c.b16 %v1740, %v1739
  %v1760 = vpack.c.b16 %v1742, %v1741
  %v1761 = vpack.c.b16 %v1744, %v1743
  %v1762 = vpack.c.b16 %v1746, %v1745
  %1779 = vmatprep.subr.bf16.mxu0 0
  %1780 = vmatpush1.bf16.msra.mxu0 %v1754
  %1781 = vmatprep.subr.bf16.mxu0 0
  %1782 = vmatpush1.bf16.msra.mxu0 %v1753
  %1783 = vmatprep.subr.bf16.mxu0 0
  %1784 = vmatpush1.bf16.msra.mxu0 %v1752
  %1785 = vmatprep.subr.bf16.mxu0 0
  %1786 = vmatpush1.bf16.msra.mxu0 %v1751
  %1787 = vmatprep.subr.bf16.mxu0 0
  %1788 = vmatpush1.bf16.msra.mxu0 %v1750
  %1789 = vmatprep.subr.bf16.mxu0 0
  %1790 = vmatpush1.bf16.msra.mxu0 %v1749
  %1791 = vmatprep.subr.bf16.mxu0 0
  %1792 = vmatpush1.bf16.msra.mxu0 %v1748
  %1793 = vmatprep.subr.bf16.mxu0 0
  %1794 = vmatpush1.bf16.msra.mxu0 %v1747
  %1795 = vmatprep.subr.bf16.mxu0 0
  %1796 = vmatpush2.bf16.msra.mxu0 %v1762
  %1797 = vmatprep.subr.bf16.mxu0 0
  %1798 = vmatpush2.bf16.msra.mxu0 %v1761
  %1799 = vmatprep.subr.bf16.mxu0 0
  %1800 = vmatpush2.bf16.msra.mxu0 %v1760
  %1801 = vmatprep.subr.bf16.mxu0 0
  %1802 = vmatpush2.bf16.msra.mxu0 %v1759
  %1803 = vmatprep.subr.bf16.mxu0 0
  %1804 = vmatpush2.bf16.msra.mxu0 %v1758
  %1805 = vmatprep.subr.bf16.mxu0 0
  %1806 = vmatpush2.bf16.msra.mxu0 %v1757
  %1807 = vmatprep.subr.bf16.mxu0 0
  %1808 = vmatpush2.bf16.msra.mxu0 %v1756
  %1809 = vmatprep.subr.bf16.mxu0 0
  %1810 = vmatpush2.bf16.msra.mxu0 %v1755
  %1811 = vmatprep.mubr.bf16.mxu0 %v1650
  %1812 = vmatmul.mubr.bf16.gmra.mxu0 %v1649
  %v1813 = vpop.f32.mrf.mxu0
  %v1814 = vadd.f32 0.0, %v1813
  %v1815 = vpop.f32.mrf.mxu0
  %v1816 = vpop.f32.mrf.mxu0
  %v1817 = vpop.f32.mrf.mxu0
  %1818 = vdwg.mxu0
  %v1819 = vadd.f32 %v1639, %v1814
  %1820 = vset.pattern.permute.xlu0 10
  %1821 = vperm.xlu0 %1820, %v18
  %v1822 = vpop.permute.xlu0 %1821
  %vm1823 = vcmp.eq.s32.totalorder %v20, %v1822
  %vm1824 = vcmp.eq.s32.totalorder %v21, %v1822
  %v1825 = vsel %vm1823, 1, 0
  %v1826 = vsel %vm1824, 1, 0
  %v1827 = vcvt.s32.f32 %v1825
  %v1828 = vcvt.s32.f32 %v1826
  %v1829 = vpack.c.bf16 %v1827, %v1827
  %v1830 = vpack.c.bf16 %v1828, %v1828
  %v1831 = vld [vmem:[%s1 + $0x500] sm:$0xf]
  %v1832 = vld [vmem:[%s1 + $0x504] sm:$0xf]
  %v1833 = vld [vmem:[%s1 + $0x508] sm:$0xf]
  %v1834 = vld [vmem:[%s1 + $0x50c] sm:$0xf]
  %v1835 = vld [vmem:[%s1 + $0x510] sm:$0xf]
  %v1836 = vld [vmem:[%s1 + $0x514] sm:$0xf]
  %v1837 = vld [vmem:[%s1 + $0x518] sm:$0xf]
  %v1838 = vld [vmem:[%s1 + $0x51c] sm:$0xf]
  %v1839 = vld [vmem:[%s1 + $0x520] sm:$0xf]
  %v1840 = vld [vmem:[%s1 + $0x524] sm:$0xf]
  %v1841 = vld [vmem:[%s1 + $0x528] sm:$0xf]
  %v1842 = vld [vmem:[%s1 + $0x52c] sm:$0xf]
  %v1843 = vld [vmem:[%s1 + $0x530] sm:$0xf]
  %v1844 = vld [vmem:[%s1 + $0x534] sm:$0xf]
  %v1845 = vld [vmem:[%s1 + $0x538] sm:$0xf]
  %v1846 = vld [vmem:[%s1 + $0x53c] sm:$0xf]
  %v1847 = vld [vmem:[%s1 + $0x540] sm:$0xf]
  %v1848 = vld [vmem:[%s1 + $0x544] sm:$0xf]
  %v1849 = vld [vmem:[%s1 + $0x548] sm:$0xf]
  %v1850 = vld [vmem:[%s1 + $0x54c] sm:$0xf]
  %v1851 = vld [vmem:[%s1 + $0x550] sm:$0xf]
  %v1852 = vld [vmem:[%s1 + $0x554] sm:$0xf]
  %v1853 = vld [vmem:[%s1 + $0x558] sm:$0xf]
  %v1854 = vld [vmem:[%s1 + $0x55c] sm:$0xf]
  %v1855 = vld [vmem:[%s1 + $0x560] sm:$0xf]
  %v1856 = vld [vmem:[%s1 + $0x564] sm:$0xf]
  %v1857 = vld [vmem:[%s1 + $0x568] sm:$0xf]
  %v1858 = vld [vmem:[%s1 + $0x56c] sm:$0xf]
  %v1859 = vld [vmem:[%s1 + $0x570] sm:$0xf]
  %v1860 = vld [vmem:[%s1 + $0x574] sm:$0xf]
  %v1861 = vld [vmem:[%s1 + $0x578] sm:$0xf]
  %v1862 = vld [vmem:[%s1 + $0x57c] sm:$0xf]
  %v1895 = vunpack.c.l.b16 %v1831
  %v1896 = vunpack.c.l.b16 %v1832
  %v1897 = vunpack.c.l.b16 %v1833
  %v1898 = vunpack.c.l.b16 %v1834
  %v1899 = vunpack.c.l.b16 %v1835
  %v1900 = vunpack.c.l.b16 %v1836
  %v1901 = vunpack.c.l.b16 %v1837
  %v1902 = vunpack.c.l.b16 %v1838
  %v1903 = vunpack.c.l.b16 %v1839
  %v1904 = vunpack.c.l.b16 %v1840
  %v1905 = vunpack.c.l.b16 %v1841
  %v1906 = vunpack.c.l.b16 %v1842
  %v1907 = vunpack.c.l.b16 %v1843
  %v1908 = vunpack.c.l.b16 %v1844
  %v1909 = vunpack.c.l.b16 %v1845
  %v1910 = vunpack.c.l.b16 %v1846
  %v1911 = vunpack.c.l.b16 %v1847
  %v1912 = vunpack.c.l.b16 %v1848
  %v1913 = vunpack.c.l.b16 %v1849
  %v1914 = vunpack.c.l.b16 %v1850
  %v1915 = vunpack.c.l.b16 %v1851
  %v1916 = vunpack.c.l.b16 %v1852
  %v1917 = vunpack.c.l.b16 %v1853
  %v1918 = vunpack.c.l.b16 %v1854
  %v1919 = vunpack.c.l.b16 %v1855
  %v1920 = vunpack.c.l.b16 %v1856
  %v1921 = vunpack.c.l.b16 %v1857
  %v1922 = vunpack.c.l.b16 %v1858
  %v1923 = vunpack.c.l.b16 %v1859
  %v1924 = vunpack.c.l.b16 %v1860
  %v1925 = vunpack.c.l.b16 %v1861
  %v1926 = vunpack.c.l.b16 %v1862
  %v1927 = vpack.c.b16 %v1896, %v1895
  %v1928 = vpack.c.b16 %v1898, %v1897
  %v1929 = vpack.c.b16 %v1900, %v1899
  %v1930 = vpack.c.b16 %v1902, %v1901
  %v1931 = vpack.c.b16 %v1904, %v1903
  %v1932 = vpack.c.b16 %v1906, %v1905
  %v1933 = vpack.c.b16 %v1908, %v1907
  %v1934 = vpack.c.b16 %v1910, %v1909
  %v1935 = vpack.c.b16 %v1912, %v1911
  %v1936 = vpack.c.b16 %v1914, %v1913
  %v1937 = vpack.c.b16 %v1916, %v1915
  %v1938 = vpack.c.b16 %v1918, %v1917
  %v1939 = vpack.c.b16 %v1920, %v1919
  %v1940 = vpack.c.b16 %v1922, %v1921
  %v1941 = vpack.c.b16 %v1924, %v1923
  %v1942 = vpack.c.b16 %v1926, %v1925
  %1959 = vmatprep.subr.bf16.mxu0 0
  %1960 = vmatpush1.bf16.msra.mxu0 %v1934
  %1961 = vmatprep.subr.bf16.mxu0 0
  %1962 = vmatpush1.bf16.msra.mxu0 %v1933
  %1963 = vmatprep.subr.bf16.mxu0 0
  %1964 = vmatpush1.bf16.msra.mxu0 %v1932
  %1965 = vmatprep.subr.bf16.mxu0 0
  %1966 = vmatpush1.bf16.msra.mxu0 %v1931
  %1967 = vmatprep.subr.bf16.mxu0 0
  %1968 = vmatpush1.bf16.msra.mxu0 %v1930
  %1969 = vmatprep.subr.bf16.mxu0 0
  %1970 = vmatpush1.bf16.msra.mxu0 %v1929
  %1971 = vmatprep.subr.bf16.mxu0 0
  %1972 = vmatpush1.bf16.msra.mxu0 %v1928
  %1973 = vmatprep.subr.bf16.mxu0 0
  %1974 = vmatpush1.bf16.msra.mxu0 %v1927
  %1975 = vmatprep.subr.bf16.mxu0 0
  %1976 = vmatpush2.bf16.msra.mxu0 %v1942
  %1977 = vmatprep.subr.bf16.mxu0 0
  %1978 = vmatpush2.bf16.msra.mxu0 %v1941
  %1979 = vmatprep.subr.bf16.mxu0 0
  %1980 = vmatpush2.bf16.msra.mxu0 %v1940
  %1981 = vmatprep.subr.bf16.mxu0 0
  %1982 = vmatpush2.bf16.msra.mxu0 %v1939
  %1983 = vmatprep.subr.bf16.mxu0 0
  %1984 = vmatpush2.bf16.msra.mxu0 %v1938
  %1985 = vmatprep.subr.bf16.mxu0 0
  %1986 = vmatpush2.bf16.msra.mxu0 %v1937
  %1987 = vmatprep.subr.bf16.mxu0 0
  %1988 = vmatpush2.bf16.msra.mxu0 %v1936
  %1989 = vmatprep.subr.bf16.mxu0 0
  %1990 = vmatpush2.bf16.msra.mxu0 %v1935
  %1991 = vmatprep.mubr.bf16.mxu0 %v1830
  %1992 = vmatmul.mubr.bf16.gmra.mxu0 %v1829
  %v1993 = vpop.f32.mrf.mxu0
  %v1994 = vadd.f32 0.0, %v1993
  %v1995 = vpop.f32.mrf.mxu0
  %v1996 = vpop.f32.mrf.mxu0
  %v1997 = vpop.f32.mrf.mxu0
  %1998 = vdwg.mxu0
  %v1999 = vadd.f32 %v1819, %v1994
  %2000 = vset.pattern.permute.xlu0 11
  %2001 = vperm.xlu0 %2000, %v18
  %v2002 = vpop.permute.xlu0 %2001
  %vm2003 = vcmp.eq.s32.totalorder %v20, %v2002
  %vm2004 = vcmp.eq.s32.totalorder %v21, %v2002
  %v2005 = vsel %vm2003, 1, 0
  %v2006 = vsel %vm2004, 1, 0
  %v2007 = vcvt.s32.f32 %v2005
  %v2008 = vcvt.s32.f32 %v2006
  %v2009 = vpack.c.bf16 %v2007, %v2007
  %v2010 = vpack.c.bf16 %v2008, %v2008
  %v2011 = vld [vmem:[%s1 + $0x580] sm:$0xf]
  %v2012 = vld [vmem:[%s1 + $0x584] sm:$0xf]
  %v2013 = vld [vmem:[%s1 + $0x588] sm:$0xf]
  %v2014 = vld [vmem:[%s1 + $0x58c] sm:$0xf]
  %v2015 = vld [vmem:[%s1 + $0x590] sm:$0xf]
  %v2016 = vld [vmem:[%s1 + $0x594] sm:$0xf]
  %v2017 = vld [vmem:[%s1 + $0x598] sm:$0xf]
  %v2018 = vld [vmem:[%s1 + $0x59c] sm:$0xf]
  %v2019 = vld [vmem:[%s1 + $0x5a0] sm:$0xf]
  %v2020 = vld [vmem:[%s1 + $0x5a4] sm:$0xf]
  %v2021 = vld [vmem:[%s1 + $0x5a8] sm:$0xf]
  %v2022 = vld [vmem:[%s1 + $0x5ac] sm:$0xf]
  %v2023 = vld [vmem:[%s1 + $0x5b0] sm:$0xf]
  %v2024 = vld [vmem:[%s1 + $0x5b4] sm:$0xf]
  %v2025 = vld [vmem:[%s1 + $0x5b8] sm:$0xf]
  %v2026 = vld [vmem:[%s1 + $0x5bc] sm:$0xf]
  %v2027 = vld [vmem:[%s1 + $0x5c0] sm:$0xf]
  %v2028 = vld [vmem:[%s1 + $0x5c4] sm:$0xf]
  %v2029 = vld [vmem:[%s1 + $0x5c8] sm:$0xf]
  %v2030 = vld [vmem:[%s1 + $0x5cc] sm:$0xf]
  %v2031 = vld [vmem:[%s1 + $0x5d0] sm:$0xf]
  %v2032 = vld [vmem:[%s1 + $0x5d4] sm:$0xf]
  %v2033 = vld [vmem:[%s1 + $0x5d8] sm:$0xf]
  %v2034 = vld [vmem:[%s1 + $0x5dc] sm:$0xf]
  %v2035 = vld [vmem:[%s1 + $0x5e0] sm:$0xf]
  %v2036 = vld [vmem:[%s1 + $0x5e4] sm:$0xf]
  %v2037 = vld [vmem:[%s1 + $0x5e8] sm:$0xf]
  %v2038 = vld [vmem:[%s1 + $0x5ec] sm:$0xf]
  %v2039 = vld [vmem:[%s1 + $0x5f0] sm:$0xf]
  %v2040 = vld [vmem:[%s1 + $0x5f4] sm:$0xf]
  %v2041 = vld [vmem:[%s1 + $0x5f8] sm:$0xf]
  %v2042 = vld [vmem:[%s1 + $0x5fc] sm:$0xf]
  %v2075 = vunpack.c.l.b16 %v2011
  %v2076 = vunpack.c.l.b16 %v2012
  %v2077 = vunpack.c.l.b16 %v2013
  %v2078 = vunpack.c.l.b16 %v2014
  %v2079 = vunpack.c.l.b16 %v2015
  %v2080 = vunpack.c.l.b16 %v2016
  %v2081 = vunpack.c.l.b16 %v2017
  %v2082 = vunpack.c.l.b16 %v2018
  %v2083 = vunpack.c.l.b16 %v2019
  %v2084 = vunpack.c.l.b16 %v2020
  %v2085 = vunpack.c.l.b16 %v2021
  %v2086 = vunpack.c.l.b16 %v2022
  %v2087 = vunpack.c.l.b16 %v2023
  %v2088 = vunpack.c.l.b16 %v2024
  %v2089 = vunpack.c.l.b16 %v2025
  %v2090 = vunpack.c.l.b16 %v2026
  %v2091 = vunpack.c.l.b16 %v2027
  %v2092 = vunpack.c.l.b16 %v2028
  %v2093 = vunpack.c.l.b16 %v2029
  %v2094 = vunpack.c.l.b16 %v2030
  %v2095 = vunpack.c.l.b16 %v2031
  %v2096 = vunpack.c.l.b16 %v2032
  %v2097 = vunpack.c.l.b16 %v2033
  %v2098 = vunpack.c.l.b16 %v2034
  %v2099 = vunpack.c.l.b16 %v2035
  %v2100 = vunpack.c.l.b16 %v2036
  %v2101 = vunpack.c.l.b16 %v2037
  %v2102 = vunpack.c.l.b16 %v2038
  %v2103 = vunpack.c.l.b16 %v2039
  %v2104 = vunpack.c.l.b16 %v2040
  %v2105 = vunpack.c.l.b16 %v2041
  %v2106 = vunpack.c.l.b16 %v2042
  %v2107 = vpack.c.b16 %v2076, %v2075
  %v2108 = vpack.c.b16 %v2078, %v2077
  %v2109 = vpack.c.b16 %v2080, %v2079
  %v2110 = vpack.c.b16 %v2082, %v2081
  %v2111 = vpack.c.b16 %v2084, %v2083
  %v2112 = vpack.c.b16 %v2086, %v2085
  %v2113 = vpack.c.b16 %v2088, %v2087
  %v2114 = vpack.c.b16 %v2090, %v2089
  %v2115 = vpack.c.b16 %v2092, %v2091
  %v2116 = vpack.c.b16 %v2094, %v2093
  %v2117 = vpack.c.b16 %v2096, %v2095
  %v2118 = vpack.c.b16 %v2098, %v2097
  %v2119 = vpack.c.b16 %v2100, %v2099
  %v2120 = vpack.c.b16 %v2102, %v2101
  %v2121 = vpack.c.b16 %v2104, %v2103
  %v2122 = vpack.c.b16 %v2106, %v2105
  %2139 = vmatprep.subr.bf16.mxu0 0
  %2140 = vmatpush1.bf16.msra.mxu0 %v2114
  %2141 = vmatprep.subr.bf16.mxu0 0
  %2142 = vmatpush1.bf16.msra.mxu0 %v2113
  %2143 = vmatprep.subr.bf16.mxu0 0
  %2144 = vmatpush1.bf16.msra.mxu0 %v2112
  %2145 = vmatprep.subr.bf16.mxu0 0
  %2146 = vmatpush1.bf16.msra.mxu0 %v2111
  %2147 = vmatprep.subr.bf16.mxu0 0
  %2148 = vmatpush1.bf16.msra.mxu0 %v2110
  %2149 = vmatprep.subr.bf16.mxu0 0
  %2150 = vmatpush1.bf16.msra.mxu0 %v2109
  %2151 = vmatprep.subr.bf16.mxu0 0
  %2152 = vmatpush1.bf16.msra.mxu0 %v2108
  %2153 = vmatprep.subr.bf16.mxu0 0
  %2154 = vmatpush1.bf16.msra.mxu0 %v2107
  %2155 = vmatprep.subr.bf16.mxu0 0
  %2156 = vmatpush2.bf16.msra.mxu0 %v2122
  %2157 = vmatprep.subr.bf16.mxu0 0
  %2158 = vmatpush2.bf16.msra.mxu0 %v2121
  %2159 = vmatprep.subr.bf16.mxu0 0
  %2160 = vmatpush2.bf16.msra.mxu0 %v2120
  %2161 = vmatprep.subr.bf16.mxu0 0
  %2162 = vmatpush2.bf16.msra.mxu0 %v2119
  %2163 = vmatprep.subr.bf16.mxu0 0
  %2164 = vmatpush2.bf16.msra.mxu0 %v2118
  %2165 = vmatprep.subr.bf16.mxu0 0
  %2166 = vmatpush2.bf16.msra.mxu0 %v2117
  %2167 = vmatprep.subr.bf16.mxu0 0
  %2168 = vmatpush2.bf16.msra.mxu0 %v2116
  %2169 = vmatprep.subr.bf16.mxu0 0
  %2170 = vmatpush2.bf16.msra.mxu0 %v2115
  %2171 = vmatprep.mubr.bf16.mxu0 %v2010
  %2172 = vmatmul.mubr.bf16.gmra.mxu0 %v2009
  %v2173 = vpop.f32.mrf.mxu0
  %v2174 = vadd.f32 0.0, %v2173
  %v2175 = vpop.f32.mrf.mxu0
  %v2176 = vpop.f32.mrf.mxu0
  %v2177 = vpop.f32.mrf.mxu0
  %2178 = vdwg.mxu0
  %v2179 = vadd.f32 %v1999, %v2174
  %2180 = vset.pattern.permute.xlu0 12
  %2181 = vperm.xlu0 %2180, %v18
  %v2182 = vpop.permute.xlu0 %2181
  %vm2183 = vcmp.eq.s32.totalorder %v20, %v2182
  %vm2184 = vcmp.eq.s32.totalorder %v21, %v2182
  %v2185 = vsel %vm2183, 1, 0
  %v2186 = vsel %vm2184, 1, 0
  %v2187 = vcvt.s32.f32 %v2185
  %v2188 = vcvt.s32.f32 %v2186
  %v2189 = vpack.c.bf16 %v2187, %v2187
  %v2190 = vpack.c.bf16 %v2188, %v2188
  %v2191 = vld [vmem:[%s1 + $0x600] sm:$0xf]
  %v2192 = vld [vmem:[%s1 + $0x604] sm:$0xf]
  %v2193 = vld [vmem:[%s1 + $0x608] sm:$0xf]
  %v2194 = vld [vmem:[%s1 + $0x60c] sm:$0xf]
  %v2195 = vld [vmem:[%s1 + $0x610] sm:$0xf]
  %v2196 = vld [vmem:[%s1 + $0x614] sm:$0xf]
  %v2197 = vld [vmem:[%s1 + $0x618] sm:$0xf]
  %v2198 = vld [vmem:[%s1 + $0x61c] sm:$0xf]
  %v2199 = vld [vmem:[%s1 + $0x620] sm:$0xf]
  %v2200 = vld [vmem:[%s1 + $0x624] sm:$0xf]
  %v2201 = vld [vmem:[%s1 + $0x628] sm:$0xf]
  %v2202 = vld [vmem:[%s1 + $0x62c] sm:$0xf]
  %v2203 = vld [vmem:[%s1 + $0x630] sm:$0xf]
  %v2204 = vld [vmem:[%s1 + $0x634] sm:$0xf]
  %v2205 = vld [vmem:[%s1 + $0x638] sm:$0xf]
  %v2206 = vld [vmem:[%s1 + $0x63c] sm:$0xf]
  %v2207 = vld [vmem:[%s1 + $0x640] sm:$0xf]
  %v2208 = vld [vmem:[%s1 + $0x644] sm:$0xf]
  %v2209 = vld [vmem:[%s1 + $0x648] sm:$0xf]
  %v2210 = vld [vmem:[%s1 + $0x64c] sm:$0xf]
  %v2211 = vld [vmem:[%s1 + $0x650] sm:$0xf]
  %v2212 = vld [vmem:[%s1 + $0x654] sm:$0xf]
  %v2213 = vld [vmem:[%s1 + $0x658] sm:$0xf]
  %v2214 = vld [vmem:[%s1 + $0x65c] sm:$0xf]
  %v2215 = vld [vmem:[%s1 + $0x660] sm:$0xf]
  %v2216 = vld [vmem:[%s1 + $0x664] sm:$0xf]
  %v2217 = vld [vmem:[%s1 + $0x668] sm:$0xf]
  %v2218 = vld [vmem:[%s1 + $0x66c] sm:$0xf]
  %v2219 = vld [vmem:[%s1 + $0x670] sm:$0xf]
  %v2220 = vld [vmem:[%s1 + $0x674] sm:$0xf]
  %v2221 = vld [vmem:[%s1 + $0x678] sm:$0xf]
  %v2222 = vld [vmem:[%s1 + $0x67c] sm:$0xf]
  %v2255 = vunpack.c.l.b16 %v2191
  %v2256 = vunpack.c.l.b16 %v2192
  %v2257 = vunpack.c.l.b16 %v2193
  %v2258 = vunpack.c.l.b16 %v2194
  %v2259 = vunpack.c.l.b16 %v2195
  %v2260 = vunpack.c.l.b16 %v2196
  %v2261 = vunpack.c.l.b16 %v2197
  %v2262 = vunpack.c.l.b16 %v2198
  %v2263 = vunpack.c.l.b16 %v2199
  %v2264 = vunpack.c.l.b16 %v2200
  %v2265 = vunpack.c.l.b16 %v2201
  %v2266 = vunpack.c.l.b16 %v2202
  %v2267 = vunpack.c.l.b16 %v2203
  %v2268 = vunpack.c.l.b16 %v2204
  %v2269 = vunpack.c.l.b16 %v2205
  %v2270 = vunpack.c.l.b16 %v2206
  %v2271 = vunpack.c.l.b16 %v2207
  %v2272 = vunpack.c.l.b16 %v2208
  %v2273 = vunpack.c.l.b16 %v2209
  %v2274 = vunpack.c.l.b16 %v2210
  %v2275 = vunpack.c.l.b16 %v2211
  %v2276 = vunpack.c.l.b16 %v2212
  %v2277 = vunpack.c.l.b16 %v2213
  %v2278 = vunpack.c.l.b16 %v2214
  %v2279 = vunpack.c.l.b16 %v2215
  %v2280 = vunpack.c.l.b16 %v2216
  %v2281 = vunpack.c.l.b16 %v2217
  %v2282 = vunpack.c.l.b16 %v2218
  %v2283 = vunpack.c.l.b16 %v2219
  %v2284 = vunpack.c.l.b16 %v2220
  %v2285 = vunpack.c.l.b16 %v2221
  %v2286 = vunpack.c.l.b16 %v2222
  %v2287 = vpack.c.b16 %v2256, %v2255
  %v2288 = vpack.c.b16 %v2258, %v2257
  %v2289 = vpack.c.b16 %v2260, %v2259
  %v2290 = vpack.c.b16 %v2262, %v2261
  %v2291 = vpack.c.b16 %v2264, %v2263
  %v2292 = vpack.c.b16 %v2266, %v2265
  %v2293 = vpack.c.b16 %v2268, %v2267
  %v2294 = vpack.c.b16 %v2270, %v2269
  %v2295 = vpack.c.b16 %v2272, %v2271
  %v2296 = vpack.c.b16 %v2274, %v2273
  %v2297 = vpack.c.b16 %v2276, %v2275
  %v2298 = vpack.c.b16 %v2278, %v2277
  %v2299 = vpack.c.b16 %v2280, %v2279
  %v2300 = vpack.c.b16 %v2282, %v2281
  %v2301 = vpack.c.b16 %v2284, %v2283
  %v2302 = vpack.c.b16 %v2286, %v2285
  %2319 = vmatprep.subr.bf16.mxu0 0
  %2320 = vmatpush1.bf16.msra.mxu0 %v2294
  %2321 = vmatprep.subr.bf16.mxu0 0
  %2322 = vmatpush1.bf16.msra.mxu0 %v2293
  %2323 = vmatprep.subr.bf16.mxu0 0
  %2324 = vmatpush1.bf16.msra.mxu0 %v2292
  %2325 = vmatprep.subr.bf16.mxu0 0
  %2326 = vmatpush1.bf16.msra.mxu0 %v2291
  %2327 = vmatprep.subr.bf16.mxu0 0
  %2328 = vmatpush1.bf16.msra.mxu0 %v2290
  %2329 = vmatprep.subr.bf16.mxu0 0
  %2330 = vmatpush1.bf16.msra.mxu0 %v2289
  %2331 = vmatprep.subr.bf16.mxu0 0
  %2332 = vmatpush1.bf16.msra.mxu0 %v2288
  %2333 = vmatprep.subr.bf16.mxu0 0
  %2334 = vmatpush1.bf16.msra.mxu0 %v2287
  %2335 = vmatprep.subr.bf16.mxu0 0
  %2336 = vmatpush2.bf16.msra.mxu0 %v2302
  %2337 = vmatprep.subr.bf16.mxu0 0
  %2338 = vmatpush2.bf16.msra.mxu0 %v2301
  %2339 = vmatprep.subr.bf16.mxu0 0
  %2340 = vmatpush2.bf16.msra.mxu0 %v2300
  %2341 = vmatprep.subr.bf16.mxu0 0
  %2342 = vmatpush2.bf16.msra.mxu0 %v2299
  %2343 = vmatprep.subr.bf16.mxu0 0
  %2344 = vmatpush2.bf16.msra.mxu0 %v2298
  %2345 = vmatprep.subr.bf16.mxu0 0
  %2346 = vmatpush2.bf16.msra.mxu0 %v2297
  %2347 = vmatprep.subr.bf16.mxu0 0
  %2348 = vmatpush2.bf16.msra.mxu0 %v2296
  %2349 = vmatprep.subr.bf16.mxu0 0
  %2350 = vmatpush2.bf16.msra.mxu0 %v2295
  %2351 = vmatprep.mubr.bf16.mxu0 %v2190
  %2352 = vmatmul.mubr.bf16.gmra.mxu0 %v2189
  %v2353 = vpop.f32.mrf.mxu0
  %v2354 = vadd.f32 0.0, %v2353
  %v2355 = vpop.f32.mrf.mxu0
  %v2356 = vpop.f32.mrf.mxu0
  %v2357 = vpop.f32.mrf.mxu0
  %2358 = vdwg.mxu0
  %v2359 = vadd.f32 %v2179, %v2354
  %2360 = vset.pattern.permute.xlu0 13
  %2361 = vperm.xlu0 %2360, %v18
  %v2362 = vpop.permute.xlu0 %2361
  %vm2363 = vcmp.eq.s32.totalorder %v20, %v2362
  %vm2364 = vcmp.eq.s32.totalorder %v21, %v2362
  %v2365 = vsel %vm2363, 1, 0
  %v2366 = vsel %vm2364, 1, 0
  %v2367 = vcvt.s32.f32 %v2365
  %v2368 = vcvt.s32.f32 %v2366
  %v2369 = vpack.c.bf16 %v2367, %v2367
  %v2370 = vpack.c.bf16 %v2368, %v2368
  %v2371 = vld [vmem:[%s1 + $0x680] sm:$0xf]
  %v2372 = vld [vmem:[%s1 + $0x684] sm:$0xf]
  %v2373 = vld [vmem:[%s1 + $0x688] sm:$0xf]
  %v2374 = vld [vmem:[%s1 + $0x68c] sm:$0xf]
  %v2375 = vld [vmem:[%s1 + $0x690] sm:$0xf]
  %v2376 = vld [vmem:[%s1 + $0x694] sm:$0xf]
  %v2377 = vld [vmem:[%s1 + $0x698] sm:$0xf]
  %v2378 = vld [vmem:[%s1 + $0x69c] sm:$0xf]
  %v2379 = vld [vmem:[%s1 + $0x6a0] sm:$0xf]
  %v2380 = vld [vmem:[%s1 + $0x6a4] sm:$0xf]
  %v2381 = vld [vmem:[%s1 + $0x6a8] sm:$0xf]
  %v2382 = vld [vmem:[%s1 + $0x6ac] sm:$0xf]
  %v2383 = vld [vmem:[%s1 + $0x6b0] sm:$0xf]
  %v2384 = vld [vmem:[%s1 + $0x6b4] sm:$0xf]
  %v2385 = vld [vmem:[%s1 + $0x6b8] sm:$0xf]
  %v2386 = vld [vmem:[%s1 + $0x6bc] sm:$0xf]
  %v2387 = vld [vmem:[%s1 + $0x6c0] sm:$0xf]
  %v2388 = vld [vmem:[%s1 + $0x6c4] sm:$0xf]
  %v2389 = vld [vmem:[%s1 + $0x6c8] sm:$0xf]
  %v2390 = vld [vmem:[%s1 + $0x6cc] sm:$0xf]
  %v2391 = vld [vmem:[%s1 + $0x6d0] sm:$0xf]
  %v2392 = vld [vmem:[%s1 + $0x6d4] sm:$0xf]
  %v2393 = vld [vmem:[%s1 + $0x6d8] sm:$0xf]
  %v2394 = vld [vmem:[%s1 + $0x6dc] sm:$0xf]
  %v2395 = vld [vmem:[%s1 + $0x6e0] sm:$0xf]
  %v2396 = vld [vmem:[%s1 + $0x6e4] sm:$0xf]
  %v2397 = vld [vmem:[%s1 + $0x6e8] sm:$0xf]
  %v2398 = vld [vmem:[%s1 + $0x6ec] sm:$0xf]
  %v2399 = vld [vmem:[%s1 + $0x6f0] sm:$0xf]
  %v2400 = vld [vmem:[%s1 + $0x6f4] sm:$0xf]
  %v2401 = vld [vmem:[%s1 + $0x6f8] sm:$0xf]
  %v2402 = vld [vmem:[%s1 + $0x6fc] sm:$0xf]
  %v2435 = vunpack.c.l.b16 %v2371
  %v2436 = vunpack.c.l.b16 %v2372
  %v2437 = vunpack.c.l.b16 %v2373
  %v2438 = vunpack.c.l.b16 %v2374
  %v2439 = vunpack.c.l.b16 %v2375
  %v2440 = vunpack.c.l.b16 %v2376
  %v2441 = vunpack.c.l.b16 %v2377
  %v2442 = vunpack.c.l.b16 %v2378
  %v2443 = vunpack.c.l.b16 %v2379
  %v2444 = vunpack.c.l.b16 %v2380
  %v2445 = vunpack.c.l.b16 %v2381
  %v2446 = vunpack.c.l.b16 %v2382
  %v2447 = vunpack.c.l.b16 %v2383
  %v2448 = vunpack.c.l.b16 %v2384
  %v2449 = vunpack.c.l.b16 %v2385
  %v2450 = vunpack.c.l.b16 %v2386
  %v2451 = vunpack.c.l.b16 %v2387
  %v2452 = vunpack.c.l.b16 %v2388
  %v2453 = vunpack.c.l.b16 %v2389
  %v2454 = vunpack.c.l.b16 %v2390
  %v2455 = vunpack.c.l.b16 %v2391
  %v2456 = vunpack.c.l.b16 %v2392
  %v2457 = vunpack.c.l.b16 %v2393
  %v2458 = vunpack.c.l.b16 %v2394
  %v2459 = vunpack.c.l.b16 %v2395
  %v2460 = vunpack.c.l.b16 %v2396
  %v2461 = vunpack.c.l.b16 %v2397
  %v2462 = vunpack.c.l.b16 %v2398
  %v2463 = vunpack.c.l.b16 %v2399
  %v2464 = vunpack.c.l.b16 %v2400
  %v2465 = vunpack.c.l.b16 %v2401
  %v2466 = vunpack.c.l.b16 %v2402
  %v2467 = vpack.c.b16 %v2436, %v2435
  %v2468 = vpack.c.b16 %v2438, %v2437
  %v2469 = vpack.c.b16 %v2440, %v2439
  %v2470 = vpack.c.b16 %v2442, %v2441
  %v2471 = vpack.c.b16 %v2444, %v2443
  %v2472 = vpack.c.b16 %v2446, %v2445
  %v2473 = vpack.c.b16 %v2448, %v2447
  %v2474 = vpack.c.b16 %v2450, %v2449
  %v2475 = vpack.c.b16 %v2452, %v2451
  %v2476 = vpack.c.b16 %v2454, %v2453
  %v2477 = vpack.c.b16 %v2456, %v2455
  %v2478 = vpack.c.b16 %v2458, %v2457
  %v2479 = vpack.c.b16 %v2460, %v2459
  %v2480 = vpack.c.b16 %v2462, %v2461
  %v2481 = vpack.c.b16 %v2464, %v2463
  %v2482 = vpack.c.b16 %v2466, %v2465
  %2499 = vmatprep.subr.bf16.mxu0 0
  %2500 = vmatpush1.bf16.msra.mxu0 %v2474
  %2501 = vmatprep.subr.bf16.mxu0 0
  %2502 = vmatpush1.bf16.msra.mxu0 %v2473
  %2503 = vmatprep.subr.bf16.mxu0 0
  %2504 = vmatpush1.bf16.msra.mxu0 %v2472
  %2505 = vmatprep.subr.bf16.mxu0 0
  %2506 = vmatpush1.bf16.msra.mxu0 %v2471
  %2507 = vmatprep.subr.bf16.mxu0 0
  %2508 = vmatpush1.bf16.msra.mxu0 %v2470
  %2509 = vmatprep.subr.bf16.mxu0 0
  %2510 = vmatpush1.bf16.msra.mxu0 %v2469
  %2511 = vmatprep.subr.bf16.mxu0 0
  %2512 = vmatpush1.bf16.msra.mxu0 %v2468
  %2513 = vmatprep.subr.bf16.mxu0 0
  %2514 = vmatpush1.bf16.msra.mxu0 %v2467
  %2515 = vmatprep.subr.bf16.mxu0 0
  %2516 = vmatpush2.bf16.msra.mxu0 %v2482
  %2517 = vmatprep.subr.bf16.mxu0 0
  %2518 = vmatpush2.bf16.msra.mxu0 %v2481
  %2519 = vmatprep.subr.bf16.mxu0 0
  %2520 = vmatpush2.bf16.msra.mxu0 %v2480
  %2521 = vmatprep.subr.bf16.mxu0 0
  %2522 = vmatpush2.bf16.msra.mxu0 %v2479
  %2523 = vmatprep.subr.bf16.mxu0 0
  %2524 = vmatpush2.bf16.msra.mxu0 %v2478
  %2525 = vmatprep.subr.bf16.mxu0 0
  %2526 = vmatpush2.bf16.msra.mxu0 %v2477
  %2527 = vmatprep.subr.bf16.mxu0 0
  %2528 = vmatpush2.bf16.msra.mxu0 %v2476
  %2529 = vmatprep.subr.bf16.mxu0 0
  %2530 = vmatpush2.bf16.msra.mxu0 %v2475
  %2531 = vmatprep.mubr.bf16.mxu0 %v2370
  %2532 = vmatmul.mubr.bf16.gmra.mxu0 %v2369
  %v2533 = vpop.f32.mrf.mxu0
  %v2534 = vadd.f32 0.0, %v2533
  %v2535 = vpop.f32.mrf.mxu0
  %v2536 = vpop.f32.mrf.mxu0
  %v2537 = vpop.f32.mrf.mxu0
  %2538 = vdwg.mxu0
  %v2539 = vadd.f32 %v2359, %v2534
  %2540 = vset.pattern.permute.xlu0 14
  %2541 = vperm.xlu0 %2540, %v18
  %v2542 = vpop.permute.xlu0 %2541
  %vm2543 = vcmp.eq.s32.totalorder %v20, %v2542
  %vm2544 = vcmp.eq.s32.totalorder %v21, %v2542
  %v2545 = vsel %vm2543, 1, 0
  %v2546 = vsel %vm2544, 1, 0
  %v2547 = vcvt.s32.f32 %v2545
  %v2548 = vcvt.s32.f32 %v2546
  %v2549 = vpack.c.bf16 %v2547, %v2547
  %v2550 = vpack.c.bf16 %v2548, %v2548
  %v2551 = vld [vmem:[%s1 + $0x700] sm:$0xf]
  %v2552 = vld [vmem:[%s1 + $0x704] sm:$0xf]
  %v2553 = vld [vmem:[%s1 + $0x708] sm:$0xf]
  %v2554 = vld [vmem:[%s1 + $0x70c] sm:$0xf]
  %v2555 = vld [vmem:[%s1 + $0x710] sm:$0xf]
  %v2556 = vld [vmem:[%s1 + $0x714] sm:$0xf]
  %v2557 = vld [vmem:[%s1 + $0x718] sm:$0xf]
  %v2558 = vld [vmem:[%s1 + $0x71c] sm:$0xf]
  %v2559 = vld [vmem:[%s1 + $0x720] sm:$0xf]
  %v2560 = vld [vmem:[%s1 + $0x724] sm:$0xf]
  %v2561 = vld [vmem:[%s1 + $0x728] sm:$0xf]
  %v2562 = vld [vmem:[%s1 + $0x72c] sm:$0xf]
  %v2563 = vld [vmem:[%s1 + $0x730] sm:$0xf]
  %v2564 = vld [vmem:[%s1 + $0x734] sm:$0xf]
  %v2565 = vld [vmem:[%s1 + $0x738] sm:$0xf]
  %v2566 = vld [vmem:[%s1 + $0x73c] sm:$0xf]
  %v2567 = vld [vmem:[%s1 + $0x740] sm:$0xf]
  %v2568 = vld [vmem:[%s1 + $0x744] sm:$0xf]
  %v2569 = vld [vmem:[%s1 + $0x748] sm:$0xf]
  %v2570 = vld [vmem:[%s1 + $0x74c] sm:$0xf]
  %v2571 = vld [vmem:[%s1 + $0x750] sm:$0xf]
  %v2572 = vld [vmem:[%s1 + $0x754] sm:$0xf]
  %v2573 = vld [vmem:[%s1 + $0x758] sm:$0xf]
  %v2574 = vld [vmem:[%s1 + $0x75c] sm:$0xf]
  %v2575 = vld [vmem:[%s1 + $0x760] sm:$0xf]
  %v2576 = vld [vmem:[%s1 + $0x764] sm:$0xf]
  %v2577 = vld [vmem:[%s1 + $0x768] sm:$0xf]
  %v2578 = vld [vmem:[%s1 + $0x76c] sm:$0xf]
  %v2579 = vld [vmem:[%s1 + $0x770] sm:$0xf]
  %v2580 = vld [vmem:[%s1 + $0x774] sm:$0xf]
  %v2581 = vld [vmem:[%s1 + $0x778] sm:$0xf]
  %v2582 = vld [vmem:[%s1 + $0x77c] sm:$0xf]
  %v2615 = vunpack.c.l.b16 %v2551
  %v2616 = vunpack.c.l.b16 %v2552
  %v2617 = vunpack.c.l.b16 %v2553
  %v2618 = vunpack.c.l.b16 %v2554
  %v2619 = vunpack.c.l.b16 %v2555
  %v2620 = vunpack.c.l.b16 %v2556
  %v2621 = vunpack.c.l.b16 %v2557
  %v2622 = vunpack.c.l.b16 %v2558
  %v2623 = vunpack.c.l.b16 %v2559
  %v2624 = vunpack.c.l.b16 %v2560
  %v2625 = vunpack.c.l.b16 %v2561
  %v2626 = vunpack.c.l.b16 %v2562
  %v2627 = vunpack.c.l.b16 %v2563
  %v2628 = vunpack.c.l.b16 %v2564
  %v2629 = vunpack.c.l.b16 %v2565
  %v2630 = vunpack.c.l.b16 %v2566
  %v2631 = vunpack.c.l.b16 %v2567
  %v2632 = vunpack.c.l.b16 %v2568
  %v2633 = vunpack.c.l.b16 %v2569
  %v2634 = vunpack.c.l.b16 %v2570
  %v2635 = vunpack.c.l.b16 %v2571
  %v2636 = vunpack.c.l.b16 %v2572
  %v2637 = vunpack.c.l.b16 %v2573
  %v2638 = vunpack.c.l.b16 %v2574
  %v2639 = vunpack.c.l.b16 %v2575
  %v2640 = vunpack.c.l.b16 %v2576
  %v2641 = vunpack.c.l.b16 %v2577
  %v2642 = vunpack.c.l.b16 %v2578
  %v2643 = vunpack.c.l.b16 %v2579
  %v2644 = vunpack.c.l.b16 %v2580
  %v2645 = vunpack.c.l.b16 %v2581
  %v2646 = vunpack.c.l.b16 %v2582
  %v2647 = vpack.c.b16 %v2616, %v2615
  %v2648 = vpack.c.b16 %v2618, %v2617
  %v2649 = vpack.c.b16 %v2620, %v2619
  %v2650 = vpack.c.b16 %v2622, %v2621
  %v2651 = vpack.c.b16 %v2624, %v2623
  %v2652 = vpack.c.b16 %v2626, %v2625
  %v2653 = vpack.c.b16 %v2628, %v2627
  %v2654 = vpack.c.b16 %v2630, %v2629
  %v2655 = vpack.c.b16 %v2632, %v2631
  %v2656 = vpack.c.b16 %v2634, %v2633
  %v2657 = vpack.c.b16 %v2636, %v2635
  %v2658 = vpack.c.b16 %v2638, %v2637
  %v2659 = vpack.c.b16 %v2640, %v2639
  %v2660 = vpack.c.b16 %v2642, %v2641
  %v2661 = vpack.c.b16 %v2644, %v2643
  %v2662 = vpack.c.b16 %v2646, %v2645
  %2679 = vmatprep.subr.bf16.mxu0 0
  %2680 = vmatpush1.bf16.msra.mxu0 %v2654
  %2681 = vmatprep.subr.bf16.mxu0 0
  %2682 = vmatpush1.bf16.msra.mxu0 %v2653
  %2683 = vmatprep.subr.bf16.mxu0 0
  %2684 = vmatpush1.bf16.msra.mxu0 %v2652
  %2685 = vmatprep.subr.bf16.mxu0 0
  %2686 = vmatpush1.bf16.msra.mxu0 %v2651
  %2687 = vmatprep.subr.bf16.mxu0 0
  %2688 = vmatpush1.bf16.msra.mxu0 %v2650
  %2689 = vmatprep.subr.bf16.mxu0 0
  %2690 = vmatpush1.bf16.msra.mxu0 %v2649
  %2691 = vmatprep.subr.bf16.mxu0 0
  %2692 = vmatpush1.bf16.msra.mxu0 %v2648
  %2693 = vmatprep.subr.bf16.mxu0 0
  %2694 = vmatpush1.bf16.msra.mxu0 %v2647
  %2695 = vmatprep.subr.bf16.mxu0 0
  %2696 = vmatpush2.bf16.msra.mxu0 %v2662
  %2697 = vmatprep.subr.bf16.mxu0 0
  %2698 = vmatpush2.bf16.msra.mxu0 %v2661
  %2699 = vmatprep.subr.bf16.mxu0 0
  %2700 = vmatpush2.bf16.msra.mxu0 %v2660
  %2701 = vmatprep.subr.bf16.mxu0 0
  %2702 = vmatpush2.bf16.msra.mxu0 %v2659
  %2703 = vmatprep.subr.bf16.mxu0 0
  %2704 = vmatpush2.bf16.msra.mxu0 %v2658
  %2705 = vmatprep.subr.bf16.mxu0 0
  %2706 = vmatpush2.bf16.msra.mxu0 %v2657
  %2707 = vmatprep.subr.bf16.mxu0 0
  %2708 = vmatpush2.bf16.msra.mxu0 %v2656
  %2709 = vmatprep.subr.bf16.mxu0 0
  %2710 = vmatpush2.bf16.msra.mxu0 %v2655
  %2711 = vmatprep.mubr.bf16.mxu0 %v2550
  %2712 = vmatmul.mubr.bf16.gmra.mxu0 %v2549
  %v2713 = vpop.f32.mrf.mxu0
  %v2714 = vadd.f32 0.0, %v2713
  %v2715 = vpop.f32.mrf.mxu0
  %v2716 = vpop.f32.mrf.mxu0
  %v2717 = vpop.f32.mrf.mxu0
  %2718 = vdwg.mxu0
  %v2719 = vadd.f32 %v2539, %v2714
  %2720 = vset.pattern.permute.xlu0 15
  %2721 = vperm.xlu0 %2720, %v18
  %v2722 = vpop.permute.xlu0 %2721
  %vm2723 = vcmp.eq.s32.totalorder %v20, %v2722
  %vm2724 = vcmp.eq.s32.totalorder %v21, %v2722
  %v2725 = vsel %vm2723, 1, 0
  %v2726 = vsel %vm2724, 1, 0
  %v2727 = vcvt.s32.f32 %v2725
  %v2728 = vcvt.s32.f32 %v2726
  %v2729 = vpack.c.bf16 %v2727, %v2727
  %v2730 = vpack.c.bf16 %v2728, %v2728
  %v2731 = vld [vmem:[%s1 + $0x780] sm:$0xf]
  %v2732 = vld [vmem:[%s1 + $0x784] sm:$0xf]
  %v2733 = vld [vmem:[%s1 + $0x788] sm:$0xf]
  %v2734 = vld [vmem:[%s1 + $0x78c] sm:$0xf]
  %v2735 = vld [vmem:[%s1 + $0x790] sm:$0xf]
  %v2736 = vld [vmem:[%s1 + $0x794] sm:$0xf]
  %v2737 = vld [vmem:[%s1 + $0x798] sm:$0xf]
  %v2738 = vld [vmem:[%s1 + $0x79c] sm:$0xf]
  %v2739 = vld [vmem:[%s1 + $0x7a0] sm:$0xf]
  %v2740 = vld [vmem:[%s1 + $0x7a4] sm:$0xf]
  %v2741 = vld [vmem:[%s1 + $0x7a8] sm:$0xf]
  %v2742 = vld [vmem:[%s1 + $0x7ac] sm:$0xf]
  %v2743 = vld [vmem:[%s1 + $0x7b0] sm:$0xf]
  %v2744 = vld [vmem:[%s1 + $0x7b4] sm:$0xf]
  %v2745 = vld [vmem:[%s1 + $0x7b8] sm:$0xf]
  %v2746 = vld [vmem:[%s1 + $0x7bc] sm:$0xf]
  %v2747 = vld [vmem:[%s1 + $0x7c0] sm:$0xf]
  %v2748 = vld [vmem:[%s1 + $0x7c4] sm:$0xf]
  %v2749 = vld [vmem:[%s1 + $0x7c8] sm:$0xf]
  %v2750 = vld [vmem:[%s1 + $0x7cc] sm:$0xf]
  %v2751 = vld [vmem:[%s1 + $0x7d0] sm:$0xf]
  %v2752 = vld [vmem:[%s1 + $0x7d4] sm:$0xf]
  %v2753 = vld [vmem:[%s1 + $0x7d8] sm:$0xf]
  %v2754 = vld [vmem:[%s1 + $0x7dc] sm:$0xf]
  %v2755 = vld [vmem:[%s1 + $0x7e0] sm:$0xf]
  %v2756 = vld [vmem:[%s1 + $0x7e4] sm:$0xf]
  %v2757 = vld [vmem:[%s1 + $0x7e8] sm:$0xf]
  %v2758 = vld [vmem:[%s1 + $0x7ec] sm:$0xf]
  %v2759 = vld [vmem:[%s1 + $0x7f0] sm:$0xf]
  %v2760 = vld [vmem:[%s1 + $0x7f4] sm:$0xf]
  %v2761 = vld [vmem:[%s1 + $0x7f8] sm:$0xf]
  %v2762 = vld [vmem:[%s1 + $0x7fc] sm:$0xf]
  %v2795 = vunpack.c.l.b16 %v2731
  %v2796 = vunpack.c.l.b16 %v2732
  %v2797 = vunpack.c.l.b16 %v2733
  %v2798 = vunpack.c.l.b16 %v2734
  %v2799 = vunpack.c.l.b16 %v2735
  %v2800 = vunpack.c.l.b16 %v2736
  %v2801 = vunpack.c.l.b16 %v2737
  %v2802 = vunpack.c.l.b16 %v2738
  %v2803 = vunpack.c.l.b16 %v2739
  %v2804 = vunpack.c.l.b16 %v2740
  %v2805 = vunpack.c.l.b16 %v2741
  %v2806 = vunpack.c.l.b16 %v2742
  %v2807 = vunpack.c.l.b16 %v2743
  %v2808 = vunpack.c.l.b16 %v2744
  %v2809 = vunpack.c.l.b16 %v2745
  %v2810 = vunpack.c.l.b16 %v2746
  %v2811 = vunpack.c.l.b16 %v2747
  %v2812 = vunpack.c.l.b16 %v2748
  %v2813 = vunpack.c.l.b16 %v2749
  %v2814 = vunpack.c.l.b16 %v2750
  %v2815 = vunpack.c.l.b16 %v2751
  %v2816 = vunpack.c.l.b16 %v2752
  %v2817 = vunpack.c.l.b16 %v2753
  %v2818 = vunpack.c.l.b16 %v2754
  %v2819 = vunpack.c.l.b16 %v2755
  %v2820 = vunpack.c.l.b16 %v2756
  %v2821 = vunpack.c.l.b16 %v2757
  %v2822 = vunpack.c.l.b16 %v2758
  %v2823 = vunpack.c.l.b16 %v2759
  %v2824 = vunpack.c.l.b16 %v2760
  %v2825 = vunpack.c.l.b16 %v2761
  %v2826 = vunpack.c.l.b16 %v2762
  %v2827 = vpack.c.b16 %v2796, %v2795
  %v2828 = vpack.c.b16 %v2798, %v2797
  %v2829 = vpack.c.b16 %v2800, %v2799
  %v2830 = vpack.c.b16 %v2802, %v2801
  %v2831 = vpack.c.b16 %v2804, %v2803
  %v2832 = vpack.c.b16 %v2806, %v2805
  %v2833 = vpack.c.b16 %v2808, %v2807
  %v2834 = vpack.c.b16 %v2810, %v2809
  %v2835 = vpack.c.b16 %v2812, %v2811
  %v2836 = vpack.c.b16 %v2814, %v2813
  %v2837 = vpack.c.b16 %v2816, %v2815
  %v2838 = vpack.c.b16 %v2818, %v2817
  %v2839 = vpack.c.b16 %v2820, %v2819
  %v2840 = vpack.c.b16 %v2822, %v2821
  %v2841 = vpack.c.b16 %v2824, %v2823
  %v2842 = vpack.c.b16 %v2826, %v2825
  %2859 = vmatprep.subr.bf16.mxu0 0
  %2860 = vmatpush1.bf16.msra.mxu0 %v2834
  %2861 = vmatprep.subr.bf16.mxu0 0
  %2862 = vmatpush1.bf16.msra.mxu0 %v2833
  %2863 = vmatprep.subr.bf16.mxu0 0
  %2864 = vmatpush1.bf16.msra.mxu0 %v2832
  %2865 = vmatprep.subr.bf16.mxu0 0
  %2866 = vmatpush1.bf16.msra.mxu0 %v2831
  %2867 = vmatprep.subr.bf16.mxu0 0
  %2868 = vmatpush1.bf16.msra.mxu0 %v2830
  %2869 = vmatprep.subr.bf16.mxu0 0
  %2870 = vmatpush1.bf16.msra.mxu0 %v2829
  %2871 = vmatprep.subr.bf16.mxu0 0
  %2872 = vmatpush1.bf16.msra.mxu0 %v2828
  %2873 = vmatprep.subr.bf16.mxu0 0
  %2874 = vmatpush1.bf16.msra.mxu0 %v2827
  %2875 = vmatprep.subr.bf16.mxu0 0
  %2876 = vmatpush2.bf16.msra.mxu0 %v2842
  %2877 = vmatprep.subr.bf16.mxu0 0
  %2878 = vmatpush2.bf16.msra.mxu0 %v2841
  %2879 = vmatprep.subr.bf16.mxu0 0
  %2880 = vmatpush2.bf16.msra.mxu0 %v2840
  %2881 = vmatprep.subr.bf16.mxu0 0
  %2882 = vmatpush2.bf16.msra.mxu0 %v2839
  %2883 = vmatprep.subr.bf16.mxu0 0
  %2884 = vmatpush2.bf16.msra.mxu0 %v2838
  %2885 = vmatprep.subr.bf16.mxu0 0
  %2886 = vmatpush2.bf16.msra.mxu0 %v2837
  %2887 = vmatprep.subr.bf16.mxu0 0
  %2888 = vmatpush2.bf16.msra.mxu0 %v2836
  %2889 = vmatprep.subr.bf16.mxu0 0
  %2890 = vmatpush2.bf16.msra.mxu0 %v2835
  %2891 = vmatprep.mubr.bf16.mxu0 %v2730
  %2892 = vmatmul.mubr.bf16.gmra.mxu0 %v2729
  %v2893 = vpop.f32.mrf.mxu0
  %v2894 = vadd.f32 0.0, %v2893
  %v2895 = vpop.f32.mrf.mxu0
  %v2896 = vpop.f32.mrf.mxu0
  %v2897 = vpop.f32.mrf.mxu0
  %2898 = vdwg.mxu0
  %v2899 = vadd.f32 %v2719, %v2894
  %v2900 = vld [vmem:[%s2] sm:$0xf]
  %v2901 = vld [vmem:[%s2 + $0x4] sm:$0xf]
  %v2902 = vld [vmem:[%s2 + $0x8] sm:$0xf]
  %v2903 = vld [vmem:[%s2 + $0xc] sm:$0xf]
  %v2904 = vld [vmem:[%s2 + $0x10] sm:$0xf]
  %v2905 = vld [vmem:[%s2 + $0x14] sm:$0xf]
  %v2906 = vld [vmem:[%s2 + $0x18] sm:$0xf]
  %v2907 = vld [vmem:[%s2 + $0x1c] sm:$0xf]
  %v2908 = vld [vmem:[%s2 + $0x20] sm:$0xf]
  %v2909 = vld [vmem:[%s2 + $0x24] sm:$0xf]
  %v2910 = vld [vmem:[%s2 + $0x28] sm:$0xf]
  %v2911 = vld [vmem:[%s2 + $0x2c] sm:$0xf]
  %v2912 = vld [vmem:[%s2 + $0x30] sm:$0xf]
  %v2913 = vld [vmem:[%s2 + $0x34] sm:$0xf]
  %v2914 = vld [vmem:[%s2 + $0x38] sm:$0xf]
  %v2915 = vld [vmem:[%s2 + $0x3c] sm:$0xf]
  %v2916 = vld [vmem:[%s2 + $0x40] sm:$0xf]
  %v2917 = vld [vmem:[%s2 + $0x44] sm:$0xf]
  %v2918 = vld [vmem:[%s2 + $0x48] sm:$0xf]
  %v2919 = vld [vmem:[%s2 + $0x4c] sm:$0xf]
  %v2920 = vld [vmem:[%s2 + $0x50] sm:$0xf]
  %v2921 = vld [vmem:[%s2 + $0x54] sm:$0xf]
  %v2922 = vld [vmem:[%s2 + $0x58] sm:$0xf]
  %v2923 = vld [vmem:[%s2 + $0x5c] sm:$0xf]
  %v2924 = vld [vmem:[%s2 + $0x60] sm:$0xf]
  %v2925 = vld [vmem:[%s2 + $0x64] sm:$0xf]
  %v2926 = vld [vmem:[%s2 + $0x68] sm:$0xf]
  %v2927 = vld [vmem:[%s2 + $0x6c] sm:$0xf]
  %v2928 = vld [vmem:[%s2 + $0x70] sm:$0xf]
  %v2929 = vld [vmem:[%s2 + $0x74] sm:$0xf]
  %v2930 = vld [vmem:[%s2 + $0x78] sm:$0xf]
  %v2931 = vld [vmem:[%s2 + $0x7c] sm:$0xf]
  %v2932 = vld [vmem:[%s2 + $0x80] sm:$0xf]
  %v2933 = vld [vmem:[%s2 + $0x84] sm:$0xf]
  %v2934 = vld [vmem:[%s2 + $0x88] sm:$0xf]
  %v2935 = vld [vmem:[%s2 + $0x8c] sm:$0xf]
  %v2936 = vld [vmem:[%s2 + $0x90] sm:$0xf]
  %v2937 = vld [vmem:[%s2 + $0x94] sm:$0xf]
  %v2938 = vld [vmem:[%s2 + $0x98] sm:$0xf]
  %v2939 = vld [vmem:[%s2 + $0x9c] sm:$0xf]
  %v2940 = vld [vmem:[%s2 + $0xa0] sm:$0xf]
  %v2941 = vld [vmem:[%s2 + $0xa4] sm:$0xf]
  %v2942 = vld [vmem:[%s2 + $0xa8] sm:$0xf]
  %v2943 = vld [vmem:[%s2 + $0xac] sm:$0xf]
  %v2944 = vld [vmem:[%s2 + $0xb0] sm:$0x1]
  %v2945 = vld [vmem:[%s2 + $0xb0] sm:$0x2]
  %v2946 = vld [vmem:[%s2 + $0xb0] sm:$0x4]
  %v2947 = vunpack.c.l.bf16 %v2944
  %v2948 = vlaneseq
  %v2949 = vshrl.u32 %v2948, 7
  %v2950 = vsub.s32 0, %v2949
  %v2951 = vrot.slane %v2947, %v2950
  %v2952 = vadd.f32 %v2899, %v2951
  %v2953 = vmax.f32 %v2952, 0.0
  %v2954 = vpack.c.bf16 %v2953, %v2953
  %v2955 = vlaneseq
  %v2956 = vshrl.u32 %v2955, 7
  %v2957 = vsub.s32 1, %v2956
  %v2958 = vrot.slane %v2947, %v2957
  %v2967 = vunpack.c.l.b16 %v2900
  %v2968 = vunpack.c.l.b16 %v2901
  %v2969 = vunpack.c.l.b16 %v2902
  %v2970 = vunpack.c.l.b16 %v2903
  %v2971 = vunpack.c.l.b16 %v2904
  %v2972 = vunpack.c.l.b16 %v2905
  %v2973 = vunpack.c.l.b16 %v2906
  %v2974 = vunpack.c.l.b16 %v2907
  %v2975 = vpack.c.b16 %v2968, %v2967
  %v2976 = vpack.c.b16 %v2970, %v2969
  %v2977 = vpack.c.b16 %v2972, %v2971
  %v2978 = vpack.c.b16 %v2974, %v2973
  %vm2983 = vcmask 523264
  %v2985 = vsel %vm2983, %v2954, 0
  %2987 = vmatprep.subr.bf16.mxu0 0
  %2988 = vmatpush1.bf16.msra.mxu0 0
  %2989 = vmatprep.subr.bf16.mxu0 0
  %2990 = vmatpush1.bf16.msra.mxu0 0
  %2991 = vmatprep.subr.bf16.mxu0 0
  %2992 = vmatpush1.bf16.msra.mxu0 0
  %2993 = vmatprep.subr.bf16.mxu0 0
  %2994 = vmatpush1.bf16.msra.mxu0 0
  %2995 = vmatprep.subr.bf16.mxu0 0
  %2996 = vmatpush1.bf16.msra.mxu0 %v2978
  %2997 = vmatprep.subr.bf16.mxu0 0
  %2998 = vmatpush1.bf16.msra.mxu0 %v2977
  %2999 = vmatprep.subr.bf16.mxu0 0
  %3000 = vmatpush1.bf16.msra.mxu0 %v2976
  %3001 = vmatprep.subr.bf16.mxu0 0
  %3002 = vmatpush1.bf16.msra.mxu0 %v2975
  %3003 = vmatprep.subr.bf16.mxu0 0
  %3004 = vmatpush2.bf16.msra.mxu0 0
  %3005 = vmatprep.subr.bf16.mxu0 0
  %3006 = vmatpush2.bf16.msra.mxu0 0
  %3007 = vmatprep.subr.bf16.mxu0 0
  %3008 = vmatpush2.bf16.msra.mxu0 0
  %3009 = vmatprep.subr.bf16.mxu0 0
  %3010 = vmatpush2.bf16.msra.mxu0 0
  %3011 = vmatprep.subr.bf16.mxu0 0
  %3012 = vmatpush2.bf16.msra.mxu0 0
  %3013 = vmatprep.subr.bf16.mxu0 0
  %3014 = vmatpush2.bf16.msra.mxu0 0
  %3015 = vmatprep.subr.bf16.mxu0 0
  %3016 = vmatpush2.bf16.msra.mxu0 0
  %3017 = vmatprep.subr.bf16.mxu0 0
  %3018 = vmatpush2.bf16.msra.mxu0 0
  %3019 = vmatprep.mubr.bf16.mxu0 0
  %3020 = vmatmul.mubr.bf16.gmra.mxu0 %v2985
  %v3021 = vpop.f32.mrf.mxu0
  %v3022 = vadd.f32 %v2958, %v3021
  %v3023 = vpop.f32.mrf.mxu0
  %v3024 = vpop.f32.mrf.mxu0
  %v3025 = vpop.f32.mrf.mxu0
  %3026 = vdwg.mxu0
  %v3027 = vld [vmem:[%s3] sm:$0xff]
  %v3028 = vadd.f32 %v3022, %v3027
  %v3029 = vpack.c.bf16 %v3028, %v3028
  %v3030 = vunpack.c.l.bf16 %v2945
  %v3031 = vlaneseq
  %v3032 = vshrl.u32 %v3031, 7
  %v3033 = vsub.s32 2, %v3032
  %v3034 = vrot.slane %v3030, %v3033
  %v3051 = vunpack.c.l.b16 %v2908
  %v3052 = vunpack.c.l.b16 %v2909
  %v3053 = vunpack.c.l.b16 %v2910
  %v3054 = vunpack.c.l.b16 %v2911
  %v3055 = vunpack.c.l.b16 %v2912
  %v3056 = vunpack.c.l.b16 %v2913
  %v3057 = vunpack.c.l.b16 %v2914
  %v3058 = vunpack.c.l.b16 %v2915
  %v3059 = vunpack.c.l.b16 %v2916
  %v3060 = vunpack.c.l.b16 %v2917
  %v3061 = vunpack.c.l.b16 %v2918
  %v3062 = vunpack.c.l.b16 %v2919
  %v3063 = vunpack.c.l.b16 %v2920
  %v3064 = vunpack.c.l.b16 %v2921
  %v3065 = vunpack.c.l.b16 %v2922
  %v3066 = vunpack.c.l.b16 %v2923
  %v3067 = vpack.c.b16 %v3052, %v3051
  %v3068 = vpack.c.b16 %v3054, %v3053
  %v3069 = vpack.c.b16 %v3056, %v3055
  %v3070 = vpack.c.b16 %v3058, %v3057
  %v3071 = vpack.c.b16 %v3060, %v3059
  %v3072 = vpack.c.b16 %v3062, %v3061
  %v3073 = vpack.c.b16 %v3064, %v3063
  %v3074 = vpack.c.b16 %v3066, %v3065
  %3083 = vmatprep.subr.bf16.mxu0 0
  %3084 = vmatpush1.bf16.msra.mxu0 %v3074
  %3085 = vmatprep.subr.bf16.mxu0 0
  %3086 = vmatpush1.bf16.msra.mxu0 %v3073
  %3087 = vmatprep.subr.bf16.mxu0 0
  %3088 = vmatpush1.bf16.msra.mxu0 %v3072
  %3089 = vmatprep.subr.bf16.mxu0 0
  %3090 = vmatpush1.bf16.msra.mxu0 %v3071
  %3091 = vmatprep.subr.bf16.mxu0 0
  %3092 = vmatpush1.bf16.msra.mxu0 %v3070
  %3093 = vmatprep.subr.bf16.mxu0 0
  %3094 = vmatpush1.bf16.msra.mxu0 %v3069
  %3095 = vmatprep.subr.bf16.mxu0 0
  %3096 = vmatpush1.bf16.msra.mxu0 %v3068
  %3097 = vmatprep.subr.bf16.mxu0 0
  %3098 = vmatpush1.bf16.msra.mxu0 %v3067
  %3099 = vmatprep.subr.bf16.mxu0 0
  %3100 = vmatpush2.bf16.msra.mxu0 0
  %3101 = vmatprep.subr.bf16.mxu0 0
  %3102 = vmatpush2.bf16.msra.mxu0 0
  %3103 = vmatprep.subr.bf16.mxu0 0
  %3104 = vmatpush2.bf16.msra.mxu0 0
  %3105 = vmatprep.subr.bf16.mxu0 0
  %3106 = vmatpush2.bf16.msra.mxu0 0
  %3107 = vmatprep.subr.bf16.mxu0 0
  %3108 = vmatpush2.bf16.msra.mxu0 0
  %3109 = vmatprep.subr.bf16.mxu0 0
  %3110 = vmatpush2.bf16.msra.mxu0 0
  %3111 = vmatprep.subr.bf16.mxu0 0
  %3112 = vmatpush2.bf16.msra.mxu0 0
  %3113 = vmatprep.subr.bf16.mxu0 0
  %3114 = vmatpush2.bf16.msra.mxu0 0
  %3115 = vmatprep.mubr.bf16.mxu0 0
  %3116 = vmatmul.mubr.bf16.gmra.mxu0 %v3029
  %v3117 = vpop.f32.mrf.mxu0
  %v3118 = vadd.f32 %v3034, %v3117
  %v3119 = vpop.f32.mrf.mxu0
  %v3120 = vpop.f32.mrf.mxu0
  %v3121 = vpop.f32.mrf.mxu0
  %3122 = vdwg.mxu0
  %v3123 = vxor.u32 %v3118, 2147483648
  %v3124 = vmul.f32 %v3123, 1.442695
  %v3125 = vpow.pop %v3124
  %v3126 = vadd.f32 %v3125, 1.0
  %v3127 = vrcp.pop %v3126
  %v3128 = vmul.f32 1.0, %v3127
  %v3129 = vtanh.pop %v3118
  %3131 = vrot.lane.b32.xlu0 %v3027, 96
  %v3132 = vpop.permute.xlu0 %3131
  %v3134 = vmul.f32 %v3128, %v3132
  %3136 = vrot.lane.b32.xlu0 %v3129, 64
  %v3137 = vpop.permute.xlu0 %3136
  %v3139 = vmul.f32 %v3128, %v3137
  %3141 = vrot.lane.b32.xlu0 %v3139, 32
  %v3142 = vpop.permute.xlu0 %3141
  %v3144 = vadd.f32 %v3134, %v3142
  %v3145 = vtanh.pop %v3144
  %3147 = vrot.lane.b32.xlu0 %v3145, 64
  %v3148 = vpop.permute.xlu0 %3147
  %v3150 = vmul.f32 %v3128, %v3148
  %v3151 = vpack.c.bf16 %v3150, %v3150
  %v3152 = vlaneseq
  %v3153 = vshrl.u32 %v3152, 7
  %v3154 = vsub.s32 3, %v3153
  %v3155 = vrot.slane %v3030, %v3154
  %3157 = vrot.lane.b32.xlu0 %v3151, 32
  %v3158 = vpop.permute.xlu0 %3157
  %v3163 = vunpack.c.l.b16 %v2924
  %v3164 = vunpack.c.l.b16 %v2925
  %v3165 = vunpack.c.l.b16 %v2926
  %v3166 = vunpack.c.l.b16 %v2927
  %v3167 = vpack.c.b16 %v3164, %v3163
  %v3168 = vpack.c.b16 %v3166, %v3165
  %vm3171 = vcmask 261120
  %v3173 = vsel %vm3171, %v3158, 0
  %3175 = vmatprep.subr.bf16.mxu0 0
  %3176 = vmatpush1.bf16.msra.mxu0 0
  %3177 = vmatprep.subr.bf16.mxu0 0
  %3178 = vmatpush1.bf16.msra.mxu0 0
  %3179 = vmatprep.subr.bf16.mxu0 0
  %3180 = vmatpush1.bf16.msra.mxu0 0
  %3181 = vmatprep.subr.bf16.mxu0 0
  %3182 = vmatpush1.bf16.msra.mxu0 0
  %3183 = vmatprep.subr.bf16.mxu0 0
  %3184 = vmatpush1.bf16.msra.mxu0 0
  %3185 = vmatprep.subr.bf16.mxu0 0
  %3186 = vmatpush1.bf16.msra.mxu0 0
  %3187 = vmatprep.subr.bf16.mxu0 0
  %3188 = vmatpush1.bf16.msra.mxu0 %v3168
  %3189 = vmatprep.subr.bf16.mxu0 0
  %3190 = vmatpush1.bf16.msra.mxu0 %v3167
  %3191 = vmatprep.subr.bf16.mxu0 0
  %3192 = vmatpush2.bf16.msra.mxu0 0
  %3193 = vmatprep.subr.bf16.mxu0 0
  %3194 = vmatpush2.bf16.msra.mxu0 0
  %3195 = vmatprep.subr.bf16.mxu0 0
  %3196 = vmatpush2.bf16.msra.mxu0 0
  %3197 = vmatprep.subr.bf16.mxu0 0
  %3198 = vmatpush2.bf16.msra.mxu0 0
  %3199 = vmatprep.subr.bf16.mxu0 0
  %3200 = vmatpush2.bf16.msra.mxu0 0
  %3201 = vmatprep.subr.bf16.mxu0 0
  %3202 = vmatpush2.bf16.msra.mxu0 0
  %3203 = vmatprep.subr.bf16.mxu0 0
  %3204 = vmatpush2.bf16.msra.mxu0 0
  %3205 = vmatprep.subr.bf16.mxu0 0
  %3206 = vmatpush2.bf16.msra.mxu0 0
  %3207 = vmatprep.mubr.bf16.mxu0 0
  %3208 = vmatmul.mubr.bf16.gmra.mxu0 %v3173
  %v3209 = vpop.f32.mrf.mxu0
  %v3210 = vadd.f32 %v3155, %v3209
  %v3211 = vpop.f32.mrf.mxu0
  %v3212 = vpop.f32.mrf.mxu0
  %v3213 = vpop.f32.mrf.mxu0
  %3214 = vdwg.mxu0
  %v3215 = vmax.f32 %v3210, 0.0
  %v3216 = vpack.c.bf16 %v3215, %v3215
  %v3217 = vunpack.c.l.bf16 %v2946
  %v3218 = vlaneseq
  %v3219 = vshrl.u32 %v3218, 7
  %v3220 = vsub.s32 4, %v3219
  %v3221 = vrot.slane %v3217, %v3220
  %v3238 = vunpack.c.l.b16 %v2928
  %v3239 = vunpack.c.l.b16 %v2929
  %v3240 = vunpack.c.l.b16 %v2930
  %v3241 = vunpack.c.l.b16 %v2931
  %v3242 = vunpack.c.l.b16 %v2932
  %v3243 = vunpack.c.l.b16 %v2933
  %v3244 = vunpack.c.l.b16 %v2934
  %v3245 = vunpack.c.l.b16 %v2935
  %v3246 = vunpack.c.l.b16 %v2936
  %v3247 = vunpack.c.l.b16 %v2937
  %v3248 = vunpack.c.l.b16 %v2938
  %v3249 = vunpack.c.l.b16 %v2939
  %v3250 = vunpack.c.l.b16 %v2940
  %v3251 = vunpack.c.l.b16 %v2941
  %v3252 = vunpack.c.l.b16 %v2942
  %v3253 = vunpack.c.l.b16 %v2943
  %v3254 = vpack.c.b16 %v3239, %v3238
  %v3255 = vpack.c.b16 %v3241, %v3240
  %v3256 = vpack.c.b16 %v3243, %v3242
  %v3257 = vpack.c.b16 %v3245, %v3244
  %v3258 = vpack.c.b16 %v3247, %v3246
  %v3259 = vpack.c.b16 %v3249, %v3248
  %v3260 = vpack.c.b16 %v3251, %v3250
  %v3261 = vpack.c.b16 %v3253, %v3252
  %3270 = vmatprep.subr.bf16.mxu0 0
  %3271 = vmatpush1.bf16.msra.mxu0 %v3261
  %3272 = vmatprep.subr.bf16.mxu0 0
  %3273 = vmatpush1.bf16.msra.mxu0 %v3260
  %3274 = vmatprep.subr.bf16.mxu0 0
  %3275 = vmatpush1.bf16.msra.mxu0 %v3259
  %3276 = vmatprep.subr.bf16.mxu0 0
  %3277 = vmatpush1.bf16.msra.mxu0 %v3258
  %3278 = vmatprep.subr.bf16.mxu0 0
  %3279 = vmatpush1.bf16.msra.mxu0 %v3257
  %3280 = vmatprep.subr.bf16.mxu0 0
  %3281 = vmatpush1.bf16.msra.mxu0 %v3256
  %3282 = vmatprep.subr.bf16.mxu0 0
  %3283 = vmatpush1.bf16.msra.mxu0 %v3255
  %3284 = vmatprep.subr.bf16.mxu0 0
  %3285 = vmatpush1.bf16.msra.mxu0 %v3254
  %3286 = vmatprep.subr.bf16.mxu0 0
  %3287 = vmatpush2.bf16.msra.mxu0 0
  %3288 = vmatprep.subr.bf16.mxu0 0
  %3289 = vmatpush2.bf16.msra.mxu0 0
  %3290 = vmatprep.subr.bf16.mxu0 0
  %3291 = vmatpush2.bf16.msra.mxu0 0
  %3292 = vmatprep.subr.bf16.mxu0 0
  %3293 = vmatpush2.bf16.msra.mxu0 0
  %3294 = vmatprep.subr.bf16.mxu0 0
  %3295 = vmatpush2.bf16.msra.mxu0 0
  %3296 = vmatprep.subr.bf16.mxu0 0
  %3297 = vmatpush2.bf16.msra.mxu0 0
  %3298 = vmatprep.subr.bf16.mxu0 0
  %3299 = vmatpush2.bf16.msra.mxu0 0
  %3300 = vmatprep.subr.bf16.mxu0 0
  %3301 = vmatpush2.bf16.msra.mxu0 0
  %3302 = vmatprep.mubr.bf16.mxu0 0
  %3303 = vmatmul.mubr.bf16.gmra.mxu0 %v3216
  %v3304 = vpop.f32.mrf.mxu0
  %v3305 = vadd.f32 %v3221, %v3304
  %v3306 = vpop.f32.mrf.mxu0
  %v3307 = vpop.f32.mrf.mxu0
  %v3308 = vpop.f32.mrf.mxu0
  %3309 = vdwg.mxu0
  %3310 = vst [vmem:[%s4] sm:$0xff] %v3305
  %3312 = vrot.lane.b32.xlu0 %v3150, 96
  %v3313 = vpop.permute.xlu0 %3312
  %vm3315 = vcmask 785920
  %3316 = vst.msk [vmem:[%s4] sm:$0xff] %vm3315, %v3313
  %3318 = vrot.lane.b32.xlu0 %v3144, 64
  %v3319 = vpop.permute.xlu0 %3318
  %vm3321 = vcmask 1048320
  %3322 = vst.msk [vmem:[%s4] sm:$0xff] %vm3321, %v3319
  // Predicated region
  $region18: #{ptb_recurrent_a2c_forward.1} parent=0 // pred_check
    _
  $region19: #{ptb_recurrent_a2c_forward.1} parent=0 // pred_check_branch
    %3324 = sbr.rel (0) target = $region21
  $region20: #{ptb_recurrent_a2c_forward.1} parent=0 // pred_region
    _
  $region21: #{ptb_recurrent_a2c_forward.1} parent=0 // pred_fallthru
    _
  // Predicated region
  $region22: #{ptb_recurrent_a2c_forward.1} parent=0 // pred_check
    _
  $region23: #{ptb_recurrent_a2c_forward.1} parent=0 // pred_check_branch
    %3326 = sbr.rel (0) target = $region25
  $region24: #{ptb_recurrent_a2c_forward.1} parent=0 // pred_region
    _
  $region25: #{ptb_recurrent_a2c_forward.1} parent=0 // pred_fallthru
    _

</llo_original>
